<compile_context>
chip_gen: v7x
topology: tpu7x:2x2x1
jax: 0.10.0
libtpu: 0.0.40
codegen_flags: <defaults>
</compile_context>

<pallas_src>
import functools

import jax
import jax.numpy as jnp
import numpy as np
from jax import lax
from jax.experimental import pallas as pl
from jax.experimental.pallas import tpu as pltpu


def _is_pow2(v):
    return v > 0 and (v & (v - 1)) == 0


def _div_const(a, d):
    # vector-int division by a trace-time constant; shift when possible
    if _is_pow2(d):
        return a >> (int(d).bit_length() - 1)
    return a // d


def _mod_const(a, d):
    if _is_pow2(d):
        return a & (d - 1)
    return a % d


def _down_kernel(N, H, W, Cin, Cout, eps, compute_dtype,
                 x_ref, w1_ref, g1_ref, be1_ref, w2_ref, g2_ref, be2_ref,
                 o_ref,
                 cols1_ref, cols2_ref):
    """Conv3x3+BN+ReLU -> Conv3x3+BN+ReLU -> MaxPool2x2 for the whole batch.

    Layout: channel-first flat (C, M), M = N*H*W in the lane dimension
    (m = n*H*W + y*W + x).

      x_ref:     (Cin, M)       f32            flattened input
      w1_ref:    (Cout, 9*Cin)  compute_dtype  conv1 weights, im2col tap order
      w2_ref:    (Cout, 9*Cout) compute_dtype  conv2 weights, im2col tap order
      g*/be*:    (Cout, 1)      f32            BatchNorm gamma / beta
      o_ref:     (Cout, M//4)   f32            pooled output (lane-dense store)
      cols1_ref: (9*Cin, M)     f32            conv1 im2col scratch
      cols2_ref: (9*Cout, M)    compute_dtype  conv2 im2col scratch
    """
    HW = H * W
    M = N * HW
    inv_m = 1.0 / float(M)

    # Spatial coordinates of the flat lane index m (computed once, shared by
    # the eight shifted taps of both convolutions).
    m_idx = lax.broadcasted_iota(jnp.int32, (1, M), 1)
    x_idx = _mod_const(m_idx, W)
    y_idx = _mod_const(_div_const(m_idx, W), H)

    def shifted(a, off):
        # t[:, m] = a[:, m + off]   (wrap-around; callers mask wrapped lanes)
        if off == 0:
            return a
        return pltpu.roll(a, shift=(-off) % M, axis=1)

    def fill_im2col(a, cols_ref, C):
        # cols_ref[t*C:(t+1)*C, :] = a shifted by tap t = (oy+1)*3 + (ox+1),
        # zeroed where the 3x3 / pad=1 window runs off the image border.
        t = 0
        for oy in (-1, 0, 1):
            for ox in (-1, 0, 1):
                if oy == 0 and ox == 0:
                    piece = a
                else:
                    piece = shifted(a, oy * W + ox)
                    valid = ((x_idx >= -ox) & (x_idx < W - ox) &
                             (y_idx >= -oy) & (y_idx < H - oy))
                    piece = jnp.where(valid, piece, jnp.zeros_like(piece))
                cols_ref[t * C:(t + 1) * C, :] = piece
                t += 1

    def bn_relu(y, g_ref, be_ref):
        # Training-mode BatchNorm2d: per-channel stats over (N,H,W) == the lane
        # axis, biased variance, f32.  Single pass; variance clamped at 0 to
        # guard E[x^2]-E[x]^2 against cancellation.
        s = jnp.sum(y, axis=1, keepdims=True)
        sq = jnp.sum(y * y, axis=1, keepdims=True)
        mean = s * inv_m
        var = jnp.maximum(sq * inv_m - mean * mean, 0.0)
        scale = lax.rsqrt(var + eps) * g_ref[...]
        return jnp.maximum((y - mean) * scale + be_ref[...], 0.0)

    # ---- conv1 -> BN1 -> ReLU  (conv bias dropped: a per-channel constant
    # added before training-mode BN is exactly cancelled by the mean). --------
    fill_im2col(x_ref[...], cols1_ref, Cin)
    h = jnp.dot(w1_ref[...], cols1_ref[...].astype(compute_dtype),
                preferred_element_type=jnp.float32)             # (Cout, M) f32
    h = bn_relu(h, g1_ref, be1_ref)

    # ---- conv2 -> BN2 -> ReLU ------------------------------------------------
    fill_im2col(h.astype(compute_dtype), cols2_ref, Cout)        # cast once
    h = jnp.dot(w2_ref[...], cols2_ref[...],
                preferred_element_type=jnp.float32)              # (Cout, M) f32
    h = bn_relu(h, g2_ref, be2_ref)

    # ---- 2x2 / stride-2 max pool ----------------------------------------------
    # Pairwise maxes via lane rolls: lanes with even x & even y then hold the
    # full 2x2 maximum (H, W even, so neither roll wraps at a selected lane).
    h = jnp.maximum(h, shifted(h, 1))        # (x, x+1)
    h = jnp.maximum(h, shifted(h, W))        # (y, y+1)

    # Compact those lanes with an exact 0/1 f32 selection matmul:
    #   (Cout, M) @ (M, M/4) -> (Cout, M/4); output store stays lane-dense.
    Ho, Wo = H // 2, W // 2
    Mo = M // 4
    j_idx = lax.broadcasted_iota(jnp.int32, (1, Mo), 1)
    n_o = _div_const(j_idx, Ho * Wo)
    yo = _div_const(_mod_const(j_idx, Ho * Wo), Wo)
    xo = _mod_const(j_idx, Wo)
    src = n_o * HW + (2 * yo) * W + (2 * xo)                     # (1, Mo)
    sel = (lax.broadcasted_iota(jnp.int32, (M, 1), 0) == src).astype(jnp.float32)
    o_ref[...] = jnp.dot(h, sel,
                         preferred_element_type=jnp.float32).astype(o_ref.dtype)


def down_forward(x_nchw, p, *, compute_dtype=jnp.bfloat16, eps=1e-5):
    """Down forward. x_nchw: (N, Cin, H, W) f32; p: dict of PyTorch-layout params."""
    N, Cin, H, W = x_nchw.shape
    Cout = p["w1"].shape[0]
    assert H % 2 == 0 and W % 2 == 0
    M = N * H * W
    Mo = M // 4

    # Channel-first, lane-dense input slab: (Cin, N*H*W).
    x = jnp.transpose(x_nchw, (1, 0, 2, 3)).reshape(Cin, M).astype(jnp.float32)

    def wmat(w):  # (O, I, 3, 3) -> (O, 9*I); rows ordered [tap-major, channel]
        o, i = w.shape[0], w.shape[1]
        return jnp.transpose(w, (0, 2, 3, 1)).reshape(o, 9 * i).astype(compute_dtype)

    w1 = wmat(p["w1"])
    w2 = wmat(p["w2"])
    g1 = p["g1"].reshape(Cout, 1).astype(jnp.float32)
    g2 = p["g2"].reshape(Cout, 1).astype(jnp.float32)
    be1 = p["be1"].reshape(Cout, 1).astype(jnp.float32)
    be2 = p["be2"].reshape(Cout, 1).astype(jnp.float32)
    # Conv biases p["b1"], p["b2"] are intentionally unused: a per-channel
    # constant added before training-mode BatchNorm is an exact no-op.

    vmem = pl.BlockSpec(memory_space=pltpu.MemorySpace.VMEM)
    kernel = functools.partial(_down_kernel, N, H, W, Cin, Cout, eps, compute_dtype)

    # TODO(synk): for production-sized feature maps add a 'parallel' grid over
    # batch / H row-blocks (per-block partial BN sums + finalize) and an explicit
    # vmem_limit_bytes so both v7x TensorCores are used within the 64 MiB VMEM
    # budget; at these tiny sizes a single ungridded call is fastest.
    out = pl.pallas_call(
        kernel,
        out_shape=jax.ShapeDtypeStruct((Cout, Mo), jnp.float32),
        in_specs=[vmem] * 7,
        out_specs=vmem,
        scratch_shapes=[
            pltpu.VMEM((9 * Cin, M), jnp.float32),       # conv1 im2col
            pltpu.VMEM((9 * Cout, M), compute_dtype),    # conv2 im2col
        ],
    )(x, w1, g1, be1, w2, g2, be2)

    # (Cout, N*(H/2)*(W/2)) -> (N, Cout, H/2, W/2)
    return jnp.transpose(out.reshape(Cout, N, H // 2, W // 2), (1, 0, 2, 3))


# ----------------------------- pure-JAX reference -----------------------------
def down_reference(x_nchw, p, eps=1e-5):
    x = jnp.transpose(x_nchw, (0, 2, 3, 1)).astype(jnp.float32)

    def conv_bn_relu(inp, w_oihw, b, gamma, beta):
        w = jnp.transpose(w_oihw, (2, 3, 1, 0))
        y = lax.conv_general_dilated(
            inp, w, window_strides=(1, 1), padding=[(1, 1), (1, 1)],
            dimension_numbers=("NHWC", "HWIO", "NHWC"))
        y = y + b.reshape(1, 1, 1, -1)
        mean = jnp.mean(y, axis=(0, 1, 2), keepdims=True)
        var = jnp.mean((y - mean) ** 2, axis=(0, 1, 2), keepdims=True)
        y = (y - mean) / jnp.sqrt(var + eps) * gamma.reshape(1, 1, 1, -1) \
            + beta.reshape(1, 1, 1, -1)
        return jnp.maximum(y, 0.0)

    h = conv_bn_relu(x, p["w1"], p["b1"], p["g1"], p["be1"])
    h = conv_bn_relu(h, p["w2"], p["b2"], p["g2"], p["be2"])
    h = lax.reduce_window(h, -jnp.inf, lax.max,
                          (1, 2, 2, 1), (1, 2, 2, 1), "VALID")
    return jnp.transpose(h, (0, 3, 1, 2))


if __name__ == "__main__":
    N, Cin, H, W, Cout = 2, 4, 16, 16, 32

    key = jax.random.PRNGKey(0)
    ks = jax.random.split(key, 9)
    s1 = 1.0 / np.sqrt(Cin * 9)
    s2 = 1.0 / np.sqrt(Cout * 9)

    params = dict(
        w1=(s1 * jax.random.normal(ks[0], (Cout, Cin, 3, 3))).astype(jnp.float32),
        b1=(s1 * jax.random.normal(ks[1], (Cout,))).astype(jnp.float32),
        g1=(1.0 + 0.1 * jax.random.normal(ks[2], (Cout,))).astype(jnp.float32),
        be1=(0.1 * jax.random.normal(ks[3], (Cout,))).astype(jnp.float32),
        w2=(s2 * jax.random.normal(ks[4], (Cout, Cout, 3, 3))).astype(jnp.float32),
        b2=(s2 * jax.random.normal(ks[5], (Cout,))).astype(jnp.float32),
        g2=(1.0 + 0.1 * jax.random.normal(ks[6], (Cout,))).astype(jnp.float32),
        be2=(0.1 * jax.random.normal(ks[7], (Cout,))).astype(jnp.float32),
    )
    x = jax.random.normal(ks[8], (N, Cin, H, W), jnp.float32)

    ref = jax.block_until_ready(down_reference(x, params))

    # Strict check of the f32-MXU path.
    out_f32 = jax.block_until_ready(
        down_forward(x, params, compute_dtype=jnp.float32))
    if not np.allclose(np.asarray(out_f32), np.asarray(ref), atol=1e-3, rtol=1e-3):
        raise AssertionError("f32 Pallas Down output does not match JAX reference")

    # bf16 MXU operands (BN / pooling kept in f32): looser tolerance.
    out_bf16 = jax.block_until_ready(
        down_forward(x, params, compute_dtype=jnp.bfloat16))
    if not np.allclose(np.asarray(out_bf16), np.asarray(ref), atol=5e-2, rtol=5e-2):
        raise AssertionError("bf16 Pallas Down output does not match JAX reference")

    print("KERNEL_OK")
</pallas_src>

<mosaic_0001>
module attributes {stable_mosaic.version = 11 : i64} {
  func.func @_down_kernel(%arg0: memref<4x512xf32, #tpu.memory_space<vmem>>, %arg1: memref<32x36xf32, #tpu.memory_space<vmem>>, %arg2: memref<32x1xf32, #tpu.memory_space<vmem>>, %arg3: memref<32x1xf32, #tpu.memory_space<vmem>>, %arg4: memref<32x288xf32, #tpu.memory_space<vmem>>, %arg5: memref<32x1xf32, #tpu.memory_space<vmem>>, %arg6: memref<32x1xf32, #tpu.memory_space<vmem>>, %arg7: memref<32x128xf32, #tpu.memory_space<vmem>>, %arg8: memref<36x512xf32, #tpu.memory_space<vmem>>, %arg9: memref<288x512xf32, #tpu.memory_space<vmem>>) attributes {dimension_semantics = [], scalar_prefetch = 0 : i64, scratch_operands = 2 : i64, tpu.core_type = #tpu.core_type<tc>} {
    %0 = tpu.iota {dimensions = array<i32: 1>} : vector<1x512xi32>
    %c15_i32 = arith.constant 15 : i32
    %1 = vector.broadcast %c15_i32 : i32 to vector<1x512xi32>
    %2 = arith.andi %0, %1 : vector<1x512xi32>
    %c4_i32 = arith.constant 4 : i32
    %3 = vector.broadcast %c4_i32 : i32 to vector<1x512xi32>
    %4 = arith.shrsi %0, %3 : vector<1x512xi32>
    %c15_i32_0 = arith.constant 15 : i32
    %5 = vector.broadcast %c15_i32_0 : i32 to vector<1x512xi32>
    %6 = arith.andi %4, %5 : vector<1x512xi32>
    %c0 = arith.constant 0 : index
    %c0_1 = arith.constant 0 : index
    %7 = vector.load %arg0[%c0, %c0_1] : memref<4x512xf32, #tpu.memory_space<vmem>>, vector<4x512xf32>
    %c17_i32 = arith.constant 17 : i32
    %8 = tpu.dynamic_rotate %7 by %c17_i32 dim 1 : vector<4x512xf32>, i32 -> vector<4x512xf32>
    %c1_i32 = arith.constant 1 : i32
    %9 = vector.broadcast %c1_i32 : i32 to vector<1x512xi32>
    %10 = arith.cmpi sge, %2, %9 : vector<1x512xi32>
    %c17_i32_2 = arith.constant 17 : i32
    %11 = vector.broadcast %c17_i32_2 : i32 to vector<1x512xi32>
    %12 = arith.cmpi slt, %2, %11 : vector<1x512xi32>
    %13 = arith.andi %10, %12 : vector<1x512xi1>
    %c1_i32_3 = arith.constant 1 : i32
    %14 = vector.broadcast %c1_i32_3 : i32 to vector<1x512xi32>
    %15 = arith.cmpi sge, %6, %14 : vector<1x512xi32>
    %16 = arith.andi %13, %15 : vector<1x512xi1>
    %c17_i32_4 = arith.constant 17 : i32
    %17 = vector.broadcast %c17_i32_4 : i32 to vector<1x512xi32>
    %18 = arith.cmpi slt, %6, %17 : vector<1x512xi32>
    %19 = arith.andi %16, %18 : vector<1x512xi1>
    %cst = arith.constant 0.000000e+00 : f32
    %20 = vector.broadcast %cst : f32 to vector<4x512xf32>
    %21 = vector.shape_cast %19 : vector<1x512xi1> to vector<1x512xi1>
    %22 = vector.broadcast %21 : vector<1x512xi1> to vector<4x512xi1>
    %23 = arith.select %22, %8, %20 : vector<4x512xi1>, vector<4x512xf32>
    %c0_5 = arith.constant 0 : index
    %c0_6 = arith.constant 0 : index
    %24 = vector.load %arg8[%c0_5, %c0_6] : memref<36x512xf32, #tpu.memory_space<vmem>>, vector<4x512xf32>
    tpu.vector_store %arg8[%c0_5, %c0_6], %23 {strides = array<i32>} : memref<36x512xf32, #tpu.memory_space<vmem>>, vector<4x512xf32>,
    %c16_i32 = arith.constant 16 : i32
    %25 = tpu.dynamic_rotate %7 by %c16_i32 dim 1 : vector<4x512xf32>, i32 -> vector<4x512xf32>
    %c0_i32 = arith.constant 0 : i32
    %26 = vector.broadcast %c0_i32 : i32 to vector<1x512xi32>
    %27 = arith.cmpi sge, %2, %26 : vector<1x512xi32>
    %c16_i32_7 = arith.constant 16 : i32
    %28 = vector.broadcast %c16_i32_7 : i32 to vector<1x512xi32>
    %29 = arith.cmpi slt, %2, %28 : vector<1x512xi32>
    %30 = arith.andi %27, %29 : vector<1x512xi1>
    %c1_i32_8 = arith.constant 1 : i32
    %31 = vector.broadcast %c1_i32_8 : i32 to vector<1x512xi32>
    %32 = arith.cmpi sge, %6, %31 : vector<1x512xi32>
    %33 = arith.andi %30, %32 : vector<1x512xi1>
    %c17_i32_9 = arith.constant 17 : i32
    %34 = vector.broadcast %c17_i32_9 : i32 to vector<1x512xi32>
    %35 = arith.cmpi slt, %6, %34 : vector<1x512xi32>
    %36 = arith.andi %33, %35 : vector<1x512xi1>
    %cst_10 = arith.constant 0.000000e+00 : f32
    %37 = vector.broadcast %cst_10 : f32 to vector<4x512xf32>
    %38 = vector.shape_cast %36 : vector<1x512xi1> to vector<1x512xi1>
    %39 = vector.broadcast %38 : vector<1x512xi1> to vector<4x512xi1>
    %40 = arith.select %39, %25, %37 : vector<4x512xi1>, vector<4x512xf32>
    %c4 = arith.constant 4 : index
    %c0_11 = arith.constant 0 : index
    %41 = vector.load %arg8[%c4, %c0_11] : memref<36x512xf32, #tpu.memory_space<vmem>>, vector<4x512xf32>
    tpu.vector_store %arg8[%c4, %c0_11], %40 {strides = array<i32>} : memref<36x512xf32, #tpu.memory_space<vmem>>, vector<4x512xf32>,
    %c15_i32_12 = arith.constant 15 : i32
    %42 = tpu.dynamic_rotate %7 by %c15_i32_12 dim 1 : vector<4x512xf32>, i32 -> vector<4x512xf32>
    %c-1_i32 = arith.constant -1 : i32
    %43 = vector.broadcast %c-1_i32 : i32 to vector<1x512xi32>
    %44 = arith.cmpi sge, %2, %43 : vector<1x512xi32>
    %c15_i32_13 = arith.constant 15 : i32
    %45 = vector.broadcast %c15_i32_13 : i32 to vector<1x512xi32>
    %46 = arith.cmpi slt, %2, %45 : vector<1x512xi32>
    %47 = arith.andi %44, %46 : vector<1x512xi1>
    %c1_i32_14 = arith.constant 1 : i32
    %48 = vector.broadcast %c1_i32_14 : i32 to vector<1x512xi32>
    %49 = arith.cmpi sge, %6, %48 : vector<1x512xi32>
    %50 = arith.andi %47, %49 : vector<1x512xi1>
    %c17_i32_15 = arith.constant 17 : i32
    %51 = vector.broadcast %c17_i32_15 : i32 to vector<1x512xi32>
    %52 = arith.cmpi slt, %6, %51 : vector<1x512xi32>
    %53 = arith.andi %50, %52 : vector<1x512xi1>
    %cst_16 = arith.constant 0.000000e+00 : f32
    %54 = vector.broadcast %cst_16 : f32 to vector<4x512xf32>
    %55 = vector.shape_cast %53 : vector<1x512xi1> to vector<1x512xi1>
    %56 = vector.broadcast %55 : vector<1x512xi1> to vector<4x512xi1>
    %57 = arith.select %56, %42, %54 : vector<4x512xi1>, vector<4x512xf32>
    %c8 = arith.constant 8 : index
    %c0_17 = arith.constant 0 : index
    %58 = vector.load %arg8[%c8, %c0_17] : memref<36x512xf32, #tpu.memory_space<vmem>>, vector<4x512xf32>
    tpu.vector_store %arg8[%c8, %c0_17], %57 {strides = array<i32>} : memref<36x512xf32, #tpu.memory_space<vmem>>, vector<4x512xf32>,
    %c1_i32_18 = arith.constant 1 : i32
    %59 = tpu.dynamic_rotate %7 by %c1_i32_18 dim 1 : vector<4x512xf32>, i32 -> vector<4x512xf32>
    %c1_i32_19 = arith.constant 1 : i32
    %60 = vector.broadcast %c1_i32_19 : i32 to vector<1x512xi32>
    %61 = arith.cmpi sge, %2, %60 : vector<1x512xi32>
    %c17_i32_20 = arith.constant 17 : i32
    %62 = vector.broadcast %c17_i32_20 : i32 to vector<1x512xi32>
    %63 = arith.cmpi slt, %2, %62 : vector<1x512xi32>
    %64 = arith.andi %61, %63 : vector<1x512xi1>
    %c0_i32_21 = arith.constant 0 : i32
    %65 = vector.broadcast %c0_i32_21 : i32 to vector<1x512xi32>
    %66 = arith.cmpi sge, %6, %65 : vector<1x512xi32>
    %67 = arith.andi %64, %66 : vector<1x512xi1>
    %c16_i32_22 = arith.constant 16 : i32
    %68 = vector.broadcast %c16_i32_22 : i32 to vector<1x512xi32>
    %69 = arith.cmpi slt, %6, %68 : vector<1x512xi32>
    %70 = arith.andi %67, %69 : vector<1x512xi1>
    %cst_23 = arith.constant 0.000000e+00 : f32
    %71 = vector.broadcast %cst_23 : f32 to vector<4x512xf32>
    %72 = vector.shape_cast %70 : vector<1x512xi1> to vector<1x512xi1>
    %73 = vector.broadcast %72 : vector<1x512xi1> to vector<4x512xi1>
    %74 = arith.select %73, %59, %71 : vector<4x512xi1>, vector<4x512xf32>
    %c12 = arith.constant 12 : index
    %c0_24 = arith.constant 0 : index
    %75 = vector.load %arg8[%c12, %c0_24] : memref<36x512xf32, #tpu.memory_space<vmem>>, vector<4x512xf32>
    tpu.vector_store %arg8[%c12, %c0_24], %74 {strides = array<i32>} : memref<36x512xf32, #tpu.memory_space<vmem>>, vector<4x512xf32>,
    %c16 = arith.constant 16 : index
    %c0_25 = arith.constant 0 : index
    %76 = vector.load %arg8[%c16, %c0_25] : memref<36x512xf32, #tpu.memory_space<vmem>>, vector<4x512xf32>
    tpu.vector_store %arg8[%c16, %c0_25], %7 {strides = array<i32>} : memref<36x512xf32, #tpu.memory_space<vmem>>, vector<4x512xf32>,
    %c511_i32 = arith.constant 511 : i32
    %77 = tpu.dynamic_rotate %7 by %c511_i32 dim 1 : vector<4x512xf32>, i32 -> vector<4x512xf32>
    %c-1_i32_26 = arith.constant -1 : i32
    %78 = vector.broadcast %c-1_i32_26 : i32 to vector<1x512xi32>
    %79 = arith.cmpi sge, %2, %78 : vector<1x512xi32>
    %c15_i32_27 = arith.constant 15 : i32
    %80 = vector.broadcast %c15_i32_27 : i32 to vector<1x512xi32>
    %81 = arith.cmpi slt, %2, %80 : vector<1x512xi32>
    %82 = arith.andi %79, %81 : vector<1x512xi1>
    %c0_i32_28 = arith.constant 0 : i32
    %83 = vector.broadcast %c0_i32_28 : i32 to vector<1x512xi32>
    %84 = arith.cmpi sge, %6, %83 : vector<1x512xi32>
    %85 = arith.andi %82, %84 : vector<1x512xi1>
    %c16_i32_29 = arith.constant 16 : i32
    %86 = vector.broadcast %c16_i32_29 : i32 to vector<1x512xi32>
    %87 = arith.cmpi slt, %6, %86 : vector<1x512xi32>
    %88 = arith.andi %85, %87 : vector<1x512xi1>
    %cst_30 = arith.constant 0.000000e+00 : f32
    %89 = vector.broadcast %cst_30 : f32 to vector<4x512xf32>
    %90 = vector.shape_cast %88 : vector<1x512xi1> to vector<1x512xi1>
    %91 = vector.broadcast %90 : vector<1x512xi1> to vector<4x512xi1>
    %92 = arith.select %91, %77, %89 : vector<4x512xi1>, vector<4x512xf32>
    %c20 = arith.constant 20 : index
    %c0_31 = arith.constant 0 : index
    %93 = vector.load %arg8[%c20, %c0_31] : memref<36x512xf32, #tpu.memory_space<vmem>>, vector<4x512xf32>
    tpu.vector_store %arg8[%c20, %c0_31], %92 {strides = array<i32>} : memref<36x512xf32, #tpu.memory_space<vmem>>, vector<4x512xf32>,
    %c497_i32 = arith.constant 497 : i32
    %94 = tpu.dynamic_rotate %7 by %c497_i32 dim 1 : vector<4x512xf32>, i32 -> vector<4x512xf32>
    %c1_i32_32 = arith.constant 1 : i32
    %95 = vector.broadcast %c1_i32_32 : i32 to vector<1x512xi32>
    %96 = arith.cmpi sge, %2, %95 : vector<1x512xi32>
    %c17_i32_33 = arith.constant 17 : i32
    %97 = vector.broadcast %c17_i32_33 : i32 to vector<1x512xi32>
    %98 = arith.cmpi slt, %2, %97 : vector<1x512xi32>
    %99 = arith.andi %96, %98 : vector<1x512xi1>
    %c-1_i32_34 = arith.constant -1 : i32
    %100 = vector.broadcast %c-1_i32_34 : i32 to vector<1x512xi32>
    %101 = arith.cmpi sge, %6, %100 : vector<1x512xi32>
    %102 = arith.andi %99, %101 : vector<1x512xi1>
    %c15_i32_35 = arith.constant 15 : i32
    %103 = vector.broadcast %c15_i32_35 : i32 to vector<1x512xi32>
    %104 = arith.cmpi slt, %6, %103 : vector<1x512xi32>
    %105 = arith.andi %102, %104 : vector<1x512xi1>
    %cst_36 = arith.constant 0.000000e+00 : f32
    %106 = vector.broadcast %cst_36 : f32 to vector<4x512xf32>
    %107 = vector.shape_cast %105 : vector<1x512xi1> to vector<1x512xi1>
    %108 = vector.broadcast %107 : vector<1x512xi1> to vector<4x512xi1>
    %109 = arith.select %108, %94, %106 : vector<4x512xi1>, vector<4x512xf32>
    %c24 = arith.constant 24 : index
    %c0_37 = arith.constant 0 : index
    %110 = vector.load %arg8[%c24, %c0_37] : memref<36x512xf32, #tpu.memory_space<vmem>>, vector<4x512xf32>
    tpu.vector_store %arg8[%c24, %c0_37], %109 {strides = array<i32>} : memref<36x512xf32, #tpu.memory_space<vmem>>, vector<4x512xf32>,
    %c496_i32 = arith.constant 496 : i32
    %111 = tpu.dynamic_rotate %7 by %c496_i32 dim 1 : vector<4x512xf32>, i32 -> vector<4x512xf32>
    %c0_i32_38 = arith.constant 0 : i32
    %112 = vector.broadcast %c0_i32_38 : i32 to vector<1x512xi32>
    %113 = arith.cmpi sge, %2, %112 : vector<1x512xi32>
    %c16_i32_39 = arith.constant 16 : i32
    %114 = vector.broadcast %c16_i32_39 : i32 to vector<1x512xi32>
    %115 = arith.cmpi slt, %2, %114 : vector<1x512xi32>
    %116 = arith.andi %113, %115 : vector<1x512xi1>
    %c-1_i32_40 = arith.constant -1 : i32
    %117 = vector.broadcast %c-1_i32_40 : i32 to vector<1x512xi32>
    %118 = arith.cmpi sge, %6, %117 : vector<1x512xi32>
    %119 = arith.andi %116, %118 : vector<1x512xi1>
    %c15_i32_41 = arith.constant 15 : i32
    %120 = vector.broadcast %c15_i32_41 : i32 to vector<1x512xi32>
    %121 = arith.cmpi slt, %6, %120 : vector<1x512xi32>
    %122 = arith.andi %119, %121 : vector<1x512xi1>
    %cst_42 = arith.constant 0.000000e+00 : f32
    %123 = vector.broadcast %cst_42 : f32 to vector<4x512xf32>
    %124 = vector.shape_cast %122 : vector<1x512xi1> to vector<1x512xi1>
    %125 = vector.broadcast %124 : vector<1x512xi1> to vector<4x512xi1>
    %126 = arith.select %125, %111, %123 : vector<4x512xi1>, vector<4x512xf32>
    %c28 = arith.constant 28 : index
    %c0_43 = arith.constant 0 : index
    %127 = vector.load %arg8[%c28, %c0_43] : memref<36x512xf32, #tpu.memory_space<vmem>>, vector<4x512xf32>
    tpu.vector_store %arg8[%c28, %c0_43], %126 {strides = array<i32>} : memref<36x512xf32, #tpu.memory_space<vmem>>, vector<4x512xf32>,
    %c495_i32 = arith.constant 495 : i32
    %128 = tpu.dynamic_rotate %7 by %c495_i32 dim 1 : vector<4x512xf32>, i32 -> vector<4x512xf32>
    %c-1_i32_44 = arith.constant -1 : i32
    %129 = vector.broadcast %c-1_i32_44 : i32 to vector<1x512xi32>
    %130 = arith.cmpi sge, %2, %129 : vector<1x512xi32>
    %c15_i32_45 = arith.constant 15 : i32
    %131 = vector.broadcast %c15_i32_45 : i32 to vector<1x512xi32>
    %132 = arith.cmpi slt, %2, %131 : vector<1x512xi32>
    %133 = arith.andi %130, %132 : vector<1x512xi1>
    %c-1_i32_46 = arith.constant -1 : i32
    %134 = vector.broadcast %c-1_i32_46 : i32 to vector<1x512xi32>
    %135 = arith.cmpi sge, %6, %134 : vector<1x512xi32>
    %136 = arith.andi %133, %135 : vector<1x512xi1>
    %c15_i32_47 = arith.constant 15 : i32
    %137 = vector.broadcast %c15_i32_47 : i32 to vector<1x512xi32>
    %138 = arith.cmpi slt, %6, %137 : vector<1x512xi32>
    %139 = arith.andi %136, %138 : vector<1x512xi1>
    %cst_48 = arith.constant 0.000000e+00 : f32
    %140 = vector.broadcast %cst_48 : f32 to vector<4x512xf32>
    %141 = vector.shape_cast %139 : vector<1x512xi1> to vector<1x512xi1>
    %142 = vector.broadcast %141 : vector<1x512xi1> to vector<4x512xi1>
    %143 = arith.select %142, %128, %140 : vector<4x512xi1>, vector<4x512xf32>
    %c32 = arith.constant 32 : index
    %c0_49 = arith.constant 0 : index
    %144 = vector.load %arg8[%c32, %c0_49] : memref<36x512xf32, #tpu.memory_space<vmem>>, vector<4x512xf32>
    tpu.vector_store %arg8[%c32, %c0_49], %143 {strides = array<i32>} : memref<36x512xf32, #tpu.memory_space<vmem>>, vector<4x512xf32>,
    %c0_50 = arith.constant 0 : index
    %c0_51 = arith.constant 0 : index
    %145 = vector.load %arg1[%c0_50, %c0_51] : memref<32x36xf32, #tpu.memory_space<vmem>>, vector<32x36xf32>
    %c0_52 = arith.constant 0 : index
    %c0_53 = arith.constant 0 : index
    %146 = vector.load %arg8[%c0_52, %c0_53] : memref<36x512xf32, #tpu.memory_space<vmem>>, vector<36x512xf32>
    %cst_54 = arith.constant dense<0.000000e+00> : vector<32x512xf32>
    %147 = tpu.matmul %145, %146, %cst_54 {dimension_numbers = #tpu.dot_dimension_numbers<[1], [0], [0], [1], [0, 0, 1, 1], [], []>} : vector<32x36xf32>, vector<36x512xf32>, vector<32x512xf32> -> vector<32x512xf32>
    %cst_55 = arith.constant dense<0.000000e+00> : vector<32xf32>
    %148 = vector.multi_reduction <add>, %147, %cst_55 [1] : vector<32x512xf32> to vector<32xf32>
    %149 = vector.shape_cast %148 : vector<32xf32> to vector<32x1xf32>
    %150 = arith.mulf %147, %147 : vector<32x512xf32>
    %cst_56 = arith.constant dense<0.000000e+00> : vector<32xf32>
    %151 = vector.multi_reduction <add>, %150, %cst_56 [1] : vector<32x512xf32> to vector<32xf32>
    %152 = vector.shape_cast %151 : vector<32xf32> to vector<32x1xf32>
    %cst_57 = arith.constant 0.001953125 : f32
    %153 = vector.broadcast %cst_57 : f32 to vector<32x1xf32>
    %154 = arith.mulf %149, %153 : vector<32x1xf32>
    %cst_58 = arith.constant 0.001953125 : f32
    %155 = vector.broadcast %cst_58 : f32 to vector<32x1xf32>
    %156 = arith.mulf %152, %155 : vector<32x1xf32>
    %157 = arith.mulf %154, %154 : vector<32x1xf32>
    %158 = arith.subf %156, %157 : vector<32x1xf32>
    %cst_59 = arith.constant 0.000000e+00 : f32
    %159 = vector.broadcast %cst_59 : f32 to vector<32x1xf32>
    %160 = arith.maximumf %158, %159 : vector<32x1xf32>
    %cst_60 = arith.constant 9.99999974E-6 : f32
    %161 = vector.broadcast %cst_60 : f32 to vector<32x1xf32>
    %162 = arith.addf %160, %161 : vector<32x1xf32>
    %163 = math.rsqrt %162 : vector<32x1xf32>
    %c0_61 = arith.constant 0 : index
    %c0_62 = arith.constant 0 : index
    %164 = vector.load %arg2[%c0_61, %c0_62] : memref<32x1xf32, #tpu.memory_space<vmem>>, vector<32x1xf32>
    %165 = arith.mulf %163, %164 : vector<32x1xf32>
    %166 = vector.broadcast %154 : vector<32x1xf32> to vector<32x512xf32>
    %167 = arith.subf %147, %166 : vector<32x512xf32>
    %168 = vector.broadcast %165 : vector<32x1xf32> to vector<32x512xf32>
    %169 = arith.mulf %167, %168 : vector<32x512xf32>
    %c0_63 = arith.constant 0 : index
    %c0_64 = arith.constant 0 : index
    %170 = vector.load %arg3[%c0_63, %c0_64] : memref<32x1xf32, #tpu.memory_space<vmem>>, vector<32x1xf32>
    %171 = vector.broadcast %170 : vector<32x1xf32> to vector<32x512xf32>
    %172 = arith.addf %169, %171 : vector<32x512xf32>
    %cst_65 = arith.constant 0.000000e+00 : f32
    %173 = vector.broadcast %cst_65 : f32 to vector<32x512xf32>
    %174 = arith.maximumf %172, %173 : vector<32x512xf32>
    %c17_i32_66 = arith.constant 17 : i32
    %175 = tpu.dynamic_rotate %174 by %c17_i32_66 dim 1 : vector<32x512xf32>, i32 -> vector<32x512xf32>
    %c1_i32_67 = arith.constant 1 : i32
    %176 = vector.broadcast %c1_i32_67 : i32 to vector<1x512xi32>
    %177 = arith.cmpi sge, %2, %176 : vector<1x512xi32>
    %c17_i32_68 = arith.constant 17 : i32
    %178 = vector.broadcast %c17_i32_68 : i32 to vector<1x512xi32>
    %179 = arith.cmpi slt, %2, %178 : vector<1x512xi32>
    %180 = arith.andi %177, %179 : vector<1x512xi1>
    %c1_i32_69 = arith.constant 1 : i32
    %181 = vector.broadcast %c1_i32_69 : i32 to vector<1x512xi32>
    %182 = arith.cmpi sge, %6, %181 : vector<1x512xi32>
    %183 = arith.andi %180, %182 : vector<1x512xi1>
    %c17_i32_70 = arith.constant 17 : i32
    %184 = vector.broadcast %c17_i32_70 : i32 to vector<1x512xi32>
    %185 = arith.cmpi slt, %6, %184 : vector<1x512xi32>
    %186 = arith.andi %183, %185 : vector<1x512xi1>
    %cst_71 = arith.constant 0.000000e+00 : f32
    %187 = vector.broadcast %cst_71 : f32 to vector<32x512xf32>
    %188 = vector.shape_cast %186 : vector<1x512xi1> to vector<1x512xi1>
    %189 = vector.broadcast %188 : vector<1x512xi1> to vector<32x512xi1>
    %190 = arith.select %189, %175, %187 : vector<32x512xi1>, vector<32x512xf32>
    %c0_72 = arith.constant 0 : index
    %c0_73 = arith.constant 0 : index
    %191 = vector.load %arg9[%c0_72, %c0_73] : memref<288x512xf32, #tpu.memory_space<vmem>>, vector<32x512xf32>
    tpu.vector_store %arg9[%c0_72, %c0_73], %190 {strides = array<i32>} : memref<288x512xf32, #tpu.memory_space<vmem>>, vector<32x512xf32>,
    %c16_i32_74 = arith.constant 16 : i32
    %192 = tpu.dynamic_rotate %174 by %c16_i32_74 dim 1 : vector<32x512xf32>, i32 -> vector<32x512xf32>
    %c0_i32_75 = arith.constant 0 : i32
    %193 = vector.broadcast %c0_i32_75 : i32 to vector<1x512xi32>
    %194 = arith.cmpi sge, %2, %193 : vector<1x512xi32>
    %c16_i32_76 = arith.constant 16 : i32
    %195 = vector.broadcast %c16_i32_76 : i32 to vector<1x512xi32>
    %196 = arith.cmpi slt, %2, %195 : vector<1x512xi32>
    %197 = arith.andi %194, %196 : vector<1x512xi1>
    %c1_i32_77 = arith.constant 1 : i32
    %198 = vector.broadcast %c1_i32_77 : i32 to vector<1x512xi32>
    %199 = arith.cmpi sge, %6, %198 : vector<1x512xi32>
    %200 = arith.andi %197, %199 : vector<1x512xi1>
    %c17_i32_78 = arith.constant 17 : i32
    %201 = vector.broadcast %c17_i32_78 : i32 to vector<1x512xi32>
    %202 = arith.cmpi slt, %6, %201 : vector<1x512xi32>
    %203 = arith.andi %200, %202 : vector<1x512xi1>
    %cst_79 = arith.constant 0.000000e+00 : f32
    %204 = vector.broadcast %cst_79 : f32 to vector<32x512xf32>
    %205 = vector.shape_cast %203 : vector<1x512xi1> to vector<1x512xi1>
    %206 = vector.broadcast %205 : vector<1x512xi1> to vector<32x512xi1>
    %207 = arith.select %206, %192, %204 : vector<32x512xi1>, vector<32x512xf32>
    %c32_80 = arith.constant 32 : index
    %c0_81 = arith.constant 0 : index
    %208 = vector.load %arg9[%c32_80, %c0_81] : memref<288x512xf32, #tpu.memory_space<vmem>>, vector<32x512xf32>
    tpu.vector_store %arg9[%c32_80, %c0_81], %207 {strides = array<i32>} : memref<288x512xf32, #tpu.memory_space<vmem>>, vector<32x512xf32>,
    %c15_i32_82 = arith.constant 15 : i32
    %209 = tpu.dynamic_rotate %174 by %c15_i32_82 dim 1 : vector<32x512xf32>, i32 -> vector<32x512xf32>
    %c-1_i32_83 = arith.constant -1 : i32
    %210 = vector.broadcast %c-1_i32_83 : i32 to vector<1x512xi32>
    %211 = arith.cmpi sge, %2, %210 : vector<1x512xi32>
    %c15_i32_84 = arith.constant 15 : i32
    %212 = vector.broadcast %c15_i32_84 : i32 to vector<1x512xi32>
    %213 = arith.cmpi slt, %2, %212 : vector<1x512xi32>
    %214 = arith.andi %211, %213 : vector<1x512xi1>
    %c1_i32_85 = arith.constant 1 : i32
    %215 = vector.broadcast %c1_i32_85 : i32 to vector<1x512xi32>
    %216 = arith.cmpi sge, %6, %215 : vector<1x512xi32>
    %217 = arith.andi %214, %216 : vector<1x512xi1>
    %c17_i32_86 = arith.constant 17 : i32
    %218 = vector.broadcast %c17_i32_86 : i32 to vector<1x512xi32>
    %219 = arith.cmpi slt, %6, %218 : vector<1x512xi32>
    %220 = arith.andi %217, %219 : vector<1x512xi1>
    %cst_87 = arith.constant 0.000000e+00 : f32
    %221 = vector.broadcast %cst_87 : f32 to vector<32x512xf32>
    %222 = vector.shape_cast %220 : vector<1x512xi1> to vector<1x512xi1>
    %223 = vector.broadcast %222 : vector<1x512xi1> to vector<32x512xi1>
    %224 = arith.select %223, %209, %221 : vector<32x512xi1>, vector<32x512xf32>
    %c64 = arith.constant 64 : index
    %c0_88 = arith.constant 0 : index
    %225 = vector.load %arg9[%c64, %c0_88] : memref<288x512xf32, #tpu.memory_space<vmem>>, vector<32x512xf32>
    tpu.vector_store %arg9[%c64, %c0_88], %224 {strides = array<i32>} : memref<288x512xf32, #tpu.memory_space<vmem>>, vector<32x512xf32>,
    %c1_i32_89 = arith.constant 1 : i32
    %226 = tpu.dynamic_rotate %174 by %c1_i32_89 dim 1 : vector<32x512xf32>, i32 -> vector<32x512xf32>
    %c1_i32_90 = arith.constant 1 : i32
    %227 = vector.broadcast %c1_i32_90 : i32 to vector<1x512xi32>
    %228 = arith.cmpi sge, %2, %227 : vector<1x512xi32>
    %c17_i32_91 = arith.constant 17 : i32
    %229 = vector.broadcast %c17_i32_91 : i32 to vector<1x512xi32>
    %230 = arith.cmpi slt, %2, %229 : vector<1x512xi32>
    %231 = arith.andi %228, %230 : vector<1x512xi1>
    %c0_i32_92 = arith.constant 0 : i32
    %232 = vector.broadcast %c0_i32_92 : i32 to vector<1x512xi32>
    %233 = arith.cmpi sge, %6, %232 : vector<1x512xi32>
    %234 = arith.andi %231, %233 : vector<1x512xi1>
    %c16_i32_93 = arith.constant 16 : i32
    %235 = vector.broadcast %c16_i32_93 : i32 to vector<1x512xi32>
    %236 = arith.cmpi slt, %6, %235 : vector<1x512xi32>
    %237 = arith.andi %234, %236 : vector<1x512xi1>
    %cst_94 = arith.constant 0.000000e+00 : f32
    %238 = vector.broadcast %cst_94 : f32 to vector<32x512xf32>
    %239 = vector.shape_cast %237 : vector<1x512xi1> to vector<1x512xi1>
    %240 = vector.broadcast %239 : vector<1x512xi1> to vector<32x512xi1>
    %241 = arith.select %240, %226, %238 : vector<32x512xi1>, vector<32x512xf32>
    %c96 = arith.constant 96 : index
    %c0_95 = arith.constant 0 : index
    %242 = vector.load %arg9[%c96, %c0_95] : memref<288x512xf32, #tpu.memory_space<vmem>>, vector<32x512xf32>
    tpu.vector_store %arg9[%c96, %c0_95], %241 {strides = array<i32>} : memref<288x512xf32, #tpu.memory_space<vmem>>, vector<32x512xf32>,
    %c128 = arith.constant 128 : index
    %c0_96 = arith.constant 0 : index
    %243 = vector.load %arg9[%c128, %c0_96] : memref<288x512xf32, #tpu.memory_space<vmem>>, vector<32x512xf32>
    tpu.vector_store %arg9[%c128, %c0_96], %174 {strides = array<i32>} : memref<288x512xf32, #tpu.memory_space<vmem>>, vector<32x512xf32>,
    %c511_i32_97 = arith.constant 511 : i32
    %244 = tpu.dynamic_rotate %174 by %c511_i32_97 dim 1 : vector<32x512xf32>, i32 -> vector<32x512xf32>
    %c-1_i32_98 = arith.constant -1 : i32
    %245 = vector.broadcast %c-1_i32_98 : i32 to vector<1x512xi32>
    %246 = arith.cmpi sge, %2, %245 : vector<1x512xi32>
    %c15_i32_99 = arith.constant 15 : i32
    %247 = vector.broadcast %c15_i32_99 : i32 to vector<1x512xi32>
    %248 = arith.cmpi slt, %2, %247 : vector<1x512xi32>
    %249 = arith.andi %246, %248 : vector<1x512xi1>
    %c0_i32_100 = arith.constant 0 : i32
    %250 = vector.broadcast %c0_i32_100 : i32 to vector<1x512xi32>
    %251 = arith.cmpi sge, %6, %250 : vector<1x512xi32>
    %252 = arith.andi %249, %251 : vector<1x512xi1>
    %c16_i32_101 = arith.constant 16 : i32
    %253 = vector.broadcast %c16_i32_101 : i32 to vector<1x512xi32>
    %254 = arith.cmpi slt, %6, %253 : vector<1x512xi32>
    %255 = arith.andi %252, %254 : vector<1x512xi1>
    %cst_102 = arith.constant 0.000000e+00 : f32
    %256 = vector.broadcast %cst_102 : f32 to vector<32x512xf32>
    %257 = vector.shape_cast %255 : vector<1x512xi1> to vector<1x512xi1>
    %258 = vector.broadcast %257 : vector<1x512xi1> to vector<32x512xi1>
    %259 = arith.select %258, %244, %256 : vector<32x512xi1>, vector<32x512xf32>
    %c160 = arith.constant 160 : index
    %c0_103 = arith.constant 0 : index
    %260 = vector.load %arg9[%c160, %c0_103] : memref<288x512xf32, #tpu.memory_space<vmem>>, vector<32x512xf32>
    tpu.vector_store %arg9[%c160, %c0_103], %259 {strides = array<i32>} : memref<288x512xf32, #tpu.memory_space<vmem>>, vector<32x512xf32>,
    %c497_i32_104 = arith.constant 497 : i32
    %261 = tpu.dynamic_rotate %174 by %c497_i32_104 dim 1 : vector<32x512xf32>, i32 -> vector<32x512xf32>
    %c1_i32_105 = arith.constant 1 : i32
    %262 = vector.broadcast %c1_i32_105 : i32 to vector<1x512xi32>
    %263 = arith.cmpi sge, %2, %262 : vector<1x512xi32>
    %c17_i32_106 = arith.constant 17 : i32
    %264 = vector.broadcast %c17_i32_106 : i32 to vector<1x512xi32>
    %265 = arith.cmpi slt, %2, %264 : vector<1x512xi32>
    %266 = arith.andi %263, %265 : vector<1x512xi1>
    %c-1_i32_107 = arith.constant -1 : i32
    %267 = vector.broadcast %c-1_i32_107 : i32 to vector<1x512xi32>
    %268 = arith.cmpi sge, %6, %267 : vector<1x512xi32>
    %269 = arith.andi %266, %268 : vector<1x512xi1>
    %c15_i32_108 = arith.constant 15 : i32
    %270 = vector.broadcast %c15_i32_108 : i32 to vector<1x512xi32>
    %271 = arith.cmpi slt, %6, %270 : vector<1x512xi32>
    %272 = arith.andi %269, %271 : vector<1x512xi1>
    %cst_109 = arith.constant 0.000000e+00 : f32
    %273 = vector.broadcast %cst_109 : f32 to vector<32x512xf32>
    %274 = vector.shape_cast %272 : vector<1x512xi1> to vector<1x512xi1>
    %275 = vector.broadcast %274 : vector<1x512xi1> to vector<32x512xi1>
    %276 = arith.select %275, %261, %273 : vector<32x512xi1>, vector<32x512xf32>
    %c192 = arith.constant 192 : index
    %c0_110 = arith.constant 0 : index
    %277 = vector.load %arg9[%c192, %c0_110] : memref<288x512xf32, #tpu.memory_space<vmem>>, vector<32x512xf32>
    tpu.vector_store %arg9[%c192, %c0_110], %276 {strides = array<i32>} : memref<288x512xf32, #tpu.memory_space<vmem>>, vector<32x512xf32>,
    %c496_i32_111 = arith.constant 496 : i32
    %278 = tpu.dynamic_rotate %174 by %c496_i32_111 dim 1 : vector<32x512xf32>, i32 -> vector<32x512xf32>
    %c0_i32_112 = arith.constant 0 : i32
    %279 = vector.broadcast %c0_i32_112 : i32 to vector<1x512xi32>
    %280 = arith.cmpi sge, %2, %279 : vector<1x512xi32>
    %c16_i32_113 = arith.constant 16 : i32
    %281 = vector.broadcast %c16_i32_113 : i32 to vector<1x512xi32>
    %282 = arith.cmpi slt, %2, %281 : vector<1x512xi32>
    %283 = arith.andi %280, %282 : vector<1x512xi1>
    %c-1_i32_114 = arith.constant -1 : i32
    %284 = vector.broadcast %c-1_i32_114 : i32 to vector<1x512xi32>
    %285 = arith.cmpi sge, %6, %284 : vector<1x512xi32>
    %286 = arith.andi %283, %285 : vector<1x512xi1>
    %c15_i32_115 = arith.constant 15 : i32
    %287 = vector.broadcast %c15_i32_115 : i32 to vector<1x512xi32>
    %288 = arith.cmpi slt, %6, %287 : vector<1x512xi32>
    %289 = arith.andi %286, %288 : vector<1x512xi1>
    %cst_116 = arith.constant 0.000000e+00 : f32
    %290 = vector.broadcast %cst_116 : f32 to vector<32x512xf32>
    %291 = vector.shape_cast %289 : vector<1x512xi1> to vector<1x512xi1>
    %292 = vector.broadcast %291 : vector<1x512xi1> to vector<32x512xi1>
    %293 = arith.select %292, %278, %290 : vector<32x512xi1>, vector<32x512xf32>
    %c224 = arith.constant 224 : index
    %c0_117 = arith.constant 0 : index
    %294 = vector.load %arg9[%c224, %c0_117] : memref<288x512xf32, #tpu.memory_space<vmem>>, vector<32x512xf32>
    tpu.vector_store %arg9[%c224, %c0_117], %293 {strides = array<i32>} : memref<288x512xf32, #tpu.memory_space<vmem>>, vector<32x512xf32>,
    %c495_i32_118 = arith.constant 495 : i32
    %295 = tpu.dynamic_rotate %174 by %c495_i32_118 dim 1 : vector<32x512xf32>, i32 -> vector<32x512xf32>
    %c-1_i32_119 = arith.constant -1 : i32
    %296 = vector.broadcast %c-1_i32_119 : i32 to vector<1x512xi32>
    %297 = arith.cmpi sge, %2, %296 : vector<1x512xi32>
    %c15_i32_120 = arith.constant 15 : i32
    %298 = vector.broadcast %c15_i32_120 : i32 to vector<1x512xi32>
    %299 = arith.cmpi slt, %2, %298 : vector<1x512xi32>
    %300 = arith.andi %297, %299 : vector<1x512xi1>
    %c-1_i32_121 = arith.constant -1 : i32
    %301 = vector.broadcast %c-1_i32_121 : i32 to vector<1x512xi32>
    %302 = arith.cmpi sge, %6, %301 : vector<1x512xi32>
    %303 = arith.andi %300, %302 : vector<1x512xi1>
    %c15_i32_122 = arith.constant 15 : i32
    %304 = vector.broadcast %c15_i32_122 : i32 to vector<1x512xi32>
    %305 = arith.cmpi slt, %6, %304 : vector<1x512xi32>
    %306 = arith.andi %303, %305 : vector<1x512xi1>
    %cst_123 = arith.constant 0.000000e+00 : f32
    %307 = vector.broadcast %cst_123 : f32 to vector<32x512xf32>
    %308 = vector.shape_cast %306 : vector<1x512xi1> to vector<1x512xi1>
    %309 = vector.broadcast %308 : vector<1x512xi1> to vector<32x512xi1>
    %310 = arith.select %309, %295, %307 : vector<32x512xi1>, vector<32x512xf32>
    %c256 = arith.constant 256 : index
    %c0_124 = arith.constant 0 : index
    %311 = vector.load %arg9[%c256, %c0_124] : memref<288x512xf32, #tpu.memory_space<vmem>>, vector<32x512xf32>
    tpu.vector_store %arg9[%c256, %c0_124], %310 {strides = array<i32>} : memref<288x512xf32, #tpu.memory_space<vmem>>, vector<32x512xf32>,
    %c0_125 = arith.constant 0 : index
    %c0_126 = arith.constant 0 : index
    %312 = vector.load %arg4[%c0_125, %c0_126] : memref<32x288xf32, #tpu.memory_space<vmem>>, vector<32x288xf32>
    %c0_127 = arith.constant 0 : index
    %c0_128 = arith.constant 0 : index
    %313 = vector.load %arg9[%c0_127, %c0_128] : memref<288x512xf32, #tpu.memory_space<vmem>>, vector<288x512xf32>
    %cst_129 = arith.constant dense<0.000000e+00> : vector<32x512xf32>
    %314 = tpu.matmul %312, %313, %cst_129 {dimension_numbers = #tpu.dot_dimension_numbers<[1], [0], [0], [1], [0, 0, 1, 1], [], []>} : vector<32x288xf32>, vector<288x512xf32>, vector<32x512xf32> -> vector<32x512xf32>
    %cst_130 = arith.constant dense<0.000000e+00> : vector<32xf32>
    %315 = vector.multi_reduction <add>, %314, %cst_130 [1] : vector<32x512xf32> to vector<32xf32>
    %316 = vector.shape_cast %315 : vector<32xf32> to vector<32x1xf32>
    %317 = arith.mulf %314, %314 : vector<32x512xf32>
    %cst_131 = arith.constant dense<0.000000e+00> : vector<32xf32>
    %318 = vector.multi_reduction <add>, %317, %cst_131 [1] : vector<32x512xf32> to vector<32xf32>
    %319 = vector.shape_cast %318 : vector<32xf32> to vector<32x1xf32>
    %cst_132 = arith.constant 0.001953125 : f32
    %320 = vector.broadcast %cst_132 : f32 to vector<32x1xf32>
    %321 = arith.mulf %316, %320 : vector<32x1xf32>
    %cst_133 = arith.constant 0.001953125 : f32
    %322 = vector.broadcast %cst_133 : f32 to vector<32x1xf32>
    %323 = arith.mulf %319, %322 : vector<32x1xf32>
    %324 = arith.mulf %321, %321 : vector<32x1xf32>
    %325 = arith.subf %323, %324 : vector<32x1xf32>
    %cst_134 = arith.constant 0.000000e+00 : f32
    %326 = vector.broadcast %cst_134 : f32 to vector<32x1xf32>
    %327 = arith.maximumf %325, %326 : vector<32x1xf32>
    %cst_135 = arith.constant 9.99999974E-6 : f32
    %328 = vector.broadcast %cst_135 : f32 to vector<32x1xf32>
    %329 = arith.addf %327, %328 : vector<32x1xf32>
    %330 = math.rsqrt %329 : vector<32x1xf32>
    %c0_136 = arith.constant 0 : index
    %c0_137 = arith.constant 0 : index
    %331 = vector.load %arg5[%c0_136, %c0_137] : memref<32x1xf32, #tpu.memory_space<vmem>>, vector<32x1xf32>
    %332 = arith.mulf %330, %331 : vector<32x1xf32>
    %333 = vector.broadcast %321 : vector<32x1xf32> to vector<32x512xf32>
    %334 = arith.subf %314, %333 : vector<32x512xf32>
    %335 = vector.broadcast %332 : vector<32x1xf32> to vector<32x512xf32>
    %336 = arith.mulf %334, %335 : vector<32x512xf32>
    %c0_138 = arith.constant 0 : index
    %c0_139 = arith.constant 0 : index
    %337 = vector.load %arg6[%c0_138, %c0_139] : memref<32x1xf32, #tpu.memory_space<vmem>>, vector<32x1xf32>
    %338 = vector.broadcast %337 : vector<32x1xf32> to vector<32x512xf32>
    %339 = arith.addf %336, %338 : vector<32x512xf32>
    %cst_140 = arith.constant 0.000000e+00 : f32
    %340 = vector.broadcast %cst_140 : f32 to vector<32x512xf32>
    %341 = arith.maximumf %339, %340 : vector<32x512xf32>
    %c511_i32_141 = arith.constant 511 : i32
    %342 = tpu.dynamic_rotate %341 by %c511_i32_141 dim 1 : vector<32x512xf32>, i32 -> vector<32x512xf32>
    %343 = arith.maximumf %341, %342 : vector<32x512xf32>
    %c496_i32_142 = arith.constant 496 : i32
    %344 = tpu.dynamic_rotate %343 by %c496_i32_142 dim 1 : vector<32x512xf32>, i32 -> vector<32x512xf32>
    %345 = arith.maximumf %343, %344 : vector<32x512xf32>
    %346 = tpu.iota {dimensions = array<i32: 1>} : vector<1x128xi32>
    %c6_i32 = arith.constant 6 : i32
    %347 = vector.broadcast %c6_i32 : i32 to vector<1x128xi32>
    %348 = arith.shrsi %346, %347 : vector<1x128xi32>
    %c63_i32 = arith.constant 63 : i32
    %349 = vector.broadcast %c63_i32 : i32 to vector<1x128xi32>
    %350 = arith.andi %346, %349 : vector<1x128xi32>
    %c3_i32 = arith.constant 3 : i32
    %351 = vector.broadcast %c3_i32 : i32 to vector<1x128xi32>
    %352 = arith.shrsi %350, %351 : vector<1x128xi32>
    %c7_i32 = arith.constant 7 : i32
    %353 = vector.broadcast %c7_i32 : i32 to vector<1x128xi32>
    %354 = arith.andi %346, %353 : vector<1x128xi32>
    %c256_i32 = arith.constant 256 : i32
    %355 = vector.broadcast %c256_i32 : i32 to vector<1x128xi32>
    %356 = arith.muli %348, %355 : vector<1x128xi32>
    %c2_i32 = arith.constant 2 : i32
    %357 = vector.broadcast %c2_i32 : i32 to vector<1x128xi32>
    %358 = arith.muli %357, %352 : vector<1x128xi32>
    %c16_i32_143 = arith.constant 16 : i32
    %359 = vector.broadcast %c16_i32_143 : i32 to vector<1x128xi32>
    %360 = arith.muli %358, %359 : vector<1x128xi32>
    %361 = arith.addi %356, %360 : vector<1x128xi32>
    %c2_i32_144 = arith.constant 2 : i32
    %362 = vector.broadcast %c2_i32_144 : i32 to vector<1x128xi32>
    %363 = arith.muli %362, %354 : vector<1x128xi32>
    %364 = arith.addi %361, %363 : vector<1x128xi32>
    %365 = tpu.iota {dimensions = array<i32: 0>} : vector<512x1xi32>
    %366 = vector.broadcast %365 : vector<512x1xi32> to vector<512x128xi32>
    %367 = vector.broadcast %364 : vector<1x128xi32> to vector<512x128xi32>
    %368 = arith.cmpi eq, %366, %367 : vector<512x128xi32>
    %369 = arith.extui %368 : vector<512x128xi1> to vector<512x128xi32>
    %370 = arith.sitofp %369 : vector<512x128xi32> to vector<512x128xf32>
    %cst_145 = arith.constant dense<0.000000e+00> : vector<32x128xf32>
    %371 = tpu.matmul %345, %370, %cst_145 {dimension_numbers = #tpu.dot_dimension_numbers<[1], [0], [0], [1], [0, 0, 1, 1], [], []>} : vector<32x512xf32>, vector<512x128xf32>, vector<32x128xf32> -> vector<32x128xf32>
    %c0_146 = arith.constant 0 : index
    %c0_147 = arith.constant 0 : index
    %372 = vector.load %arg7[%c0_146, %c0_147] : memref<32x128xf32, #tpu.memory_space<vmem>>, vector<32x128xf32>
    tpu.vector_store %arg7[%c0_146, %c0_147], %371 {strides = array<i32>} : memref<32x128xf32, #tpu.memory_space<vmem>>, vector<32x128xf32>,
    return
  }
}

</mosaic_0001>

<llo_original>
// kernel: tpu_custom_call.1
$region0: #{tpu_custom_call.1}
  #allocation0 [shape = 'u32[]', space=smem, size = 0x4, offset = 0x4, fixed_abs, tag = 'smem constant byte address 0x4 - core index']
  #allocation1 [shape = 'u32[144,128]{1,0:T(1,128)}', space=vmem, size = 0x12000, scoped, tag = 'internal scratch']
  #allocation2 [shape = 'f32[36,512]{1,0:T(8,128)}', space=vmem, size = 0x14000, scoped, tag = 'scratch operand']
  #allocation3 [shape = 'f32[288,512]{1,0:T(8,128)}', space=vmem, size = 0x90000, scoped, tag = 'scratch operand']
  %s0 = inlined_call_operand.vmem [shape: f32[4,512], index: 0, kind: input, shape index: {}]
  %s1 = inlined_call_operand.vmem [shape: f32[32,36], index: 1, kind: input, shape index: {}]
  %s2 = inlined_call_operand.vmem [shape: f32[32,1], index: 2, kind: input, shape index: {}]
  %s3 = inlined_call_operand.vmem [shape: f32[32,1], index: 3, kind: input, shape index: {}]
  %s4 = inlined_call_operand.vmem [shape: f32[32,288], index: 4, kind: input, shape index: {}]
  %s5 = inlined_call_operand.vmem [shape: f32[32,1], index: 5, kind: input, shape index: {}]
  %s6 = inlined_call_operand.vmem [shape: f32[32,1], index: 6, kind: input, shape index: {}]
  %s7 = inlined_call_operand.hbm [shape: f32[32,128], index: 7, kind: output, shape index: {}]
  %s8 = sld [smem:[#allocation0]]
  $region38: #{tpu_custom_call.1} parent=0
    _
  %s10 = ssub.s32 1, %s8
  %s11 = scalar_select 0, %s10, %s8
  $region1: #{tpu_custom_call.1} parent=0
    #allocation4 [shape = 'u8[16384]{0}', space=vmem, size = 0x4000, scoped, tag = 'output window, operand 0, single buffered']
    #allocation5 [shape = 's32[1]{0}', space=sflag, size = 0x4, scoped, tag = 'scoped memory for tpu_custom_call.1']
    %12 = vsyncpa [#allocation5], 0
    // Predicated region
    $region2: #{tpu_custom_call.1} parent=1 // pred_check
      _
    $region3: #{tpu_custom_call.1} parent=1 // pred_check_branch
      %14 = sbr.rel (0) target = $region5
    $region4: #{tpu_custom_call.1} parent=1 // pred_region
      _
    $region5: #{tpu_custom_call.1} parent=1 // pred_fallthru
      _
    // Predicated region
    $region6: #{tpu_custom_call.1} parent=1 // pred_check
      _
    $region7: #{tpu_custom_call.1} parent=1 // pred_check_branch
      %16 = sbr.rel (0) target = $region9
    $region8: #{tpu_custom_call.1} parent=1 // pred_region
      _
    $region9: #{tpu_custom_call.1} parent=1 // pred_fallthru
      _
    // Predicated region
    $region10: #{tpu_custom_call.1} parent=1 // pred_check
      _
    $region11: #{tpu_custom_call.1} parent=1 // pred_check_branch
      %18 = sbr.rel (0) target = $region13
    $region12: #{tpu_custom_call.1} parent=1 // pred_region
      _
    $region13: #{tpu_custom_call.1} parent=1 // pred_fallthru
      _
    // Predicated region
    $region14: #{tpu_custom_call.1} parent=1 // pred_check
      _
    $region15: #{tpu_custom_call.1} parent=1 // pred_check_branch
      %20 = sbr.rel (0) target = $region17
    $region16: #{tpu_custom_call.1} parent=1 // pred_region
      _
    $region17: #{tpu_custom_call.1} parent=1 // pred_fallthru
      _
    // Predicated region
    $region18: #{tpu_custom_call.1} parent=1 // pred_check
      _
    $region19: #{tpu_custom_call.1} parent=1 // pred_check_branch
      %22 = sbr.rel (0) target = $region21
    $region20: #{tpu_custom_call.1} parent=1 // pred_region
      _
    $region21: #{tpu_custom_call.1} parent=1 // pred_fallthru
      _
    // Predicated region
    $region22: #{tpu_custom_call.1} parent=1 // pred_check
      _
    $region23: #{tpu_custom_call.1} parent=1 // pred_check_branch
      %24 = sbr.rel (0) target = $region25
    $region24: #{tpu_custom_call.1} parent=1 // pred_region
      _
    $region25: #{tpu_custom_call.1} parent=1 // pred_fallthru
      _
    // Predicated region
    $region26: #{tpu_custom_call.1} parent=1 // pred_check
      _
    $region27: #{tpu_custom_call.1} parent=1 // pred_check_branch
      %26 = sbr.rel (0) target = $region29
    $region28: #{tpu_custom_call.1} parent=1 // pred_region
      _
    $region29: #{tpu_custom_call.1} parent=1 // pred_fallthru
      _
    %v27 = vlaneseq
    %v28 = vand.u32 %v27, 127
    %v29 = vadd.s32 %v28, 128
    %v30 = vadd.s32 %v28, 256
    %v31 = vadd.s32 %v28, 384
    %v32 = vand.u32 %v28, 15
    %v33 = vand.u32 %v29, 15
    %v34 = vand.u32 %v30, 15
    %v35 = vand.u32 %v31, 15
    %v36 = vshra.s32 %v28, 4
    %v37 = vshra.s32 %v29, 4
    %v38 = vshra.s32 %v30, 4
    %v39 = vshra.s32 %v31, 4
    %v40 = vand.u32 %v36, 15
    %v41 = vand.u32 %v37, 15
    %v42 = vand.u32 %v38, 15
    %v43 = vand.u32 %v39, 15
    %v44 = vld [vmem:[%s0] sm:$0xff]
    %v45 = vld [vmem:[%s0 + $0x8] sm:$0xff]
    %v48 = vcombine.high %v44, %v44
    %v49 = vcombine.high %v45, %v45
    %52 = vrot.lane.b32.xlu0 %v44, 17
    %v53 = vpop.permute.xlu0 %52
    %54 = vrot.lane.b32.xlu0 %v48, 17
    %v55 = vpop.permute.xlu0 %54
    %56 = vrot.lane.b32.xlu0 %v45, 17
    %v57 = vpop.permute.xlu0 %56
    %58 = vrot.lane.b32.xlu0 %v49, 17
    %v59 = vpop.permute.xlu0 %58
    %vm60 = vcmp.lt.s32.totalorder %v28, 17
    %v61 = vsel %vm60, %v57, %v59
    %v62 = vsel %vm60, %v55, %v57
    %v63 = vsel %vm60, %v53, %v55
    %v64 = vsel %vm60, %v59, %v53
    %vm65 = vcmp.ge.s32.totalorder %v32, 1
    %vm66 = vcmp.ge.s32.totalorder %v33, 1
    %vm67 = vcmp.ge.s32.totalorder %v34, 1
    %vm68 = vcmp.ge.s32.totalorder %v35, 1
    %vm69 = vcmp.lt.s32.totalorder %v32, 17
    %vm70 = vcmp.lt.s32.totalorder %v33, 17
    %vm71 = vcmp.lt.s32.totalorder %v34, 17
    %vm72 = vcmp.lt.s32.totalorder %v35, 17
    %vm73 = vmand %vm65, %vm69
    %vm74 = vmand %vm66, %vm70
    %vm75 = vmand %vm67, %vm71
    %vm76 = vmand %vm68, %vm72
    %vm77 = vcmp.ge.s32.totalorder %v40, 1
    %vm78 = vcmp.ge.s32.totalorder %v41, 1
    %vm79 = vcmp.ge.s32.totalorder %v42, 1
    %vm80 = vcmp.ge.s32.totalorder %v43, 1
    %vm81 = vmand %vm73, %vm77
    %vm82 = vmand %vm74, %vm78
    %vm83 = vmand %vm75, %vm79
    %vm84 = vmand %vm76, %vm80
    %vm85 = vcmp.lt.s32.totalorder %v40, 17
    %vm86 = vcmp.lt.s32.totalorder %v41, 17
    %vm87 = vcmp.lt.s32.totalorder %v42, 17
    %vm88 = vcmp.lt.s32.totalorder %v43, 17
    %vm89 = vmand %vm81, %vm85
    %vm90 = vmand %vm82, %vm86
    %vm91 = vmand %vm83, %vm87
    %vm92 = vmand %vm84, %vm88
    %v93 = vsel %vm89, 1, 0
    %v94 = vsel %vm90, 1, 0
    %v95 = vsel %vm91, 1, 0
    %v96 = vsel %vm92, 1, 0
    %vm97 = vcmp.eq.s32.totalorder %v93, 1
    %vm98 = vcmp.eq.s32.totalorder %v94, 1
    %vm99 = vcmp.eq.s32.totalorder %v95, 1
    %vm100 = vcmp.eq.s32.totalorder %v96, 1
    %v101 = vsel %vm97, %v64, 0.0
    %v102 = vsel %vm98, %v63, 0.0
    %v103 = vsel %vm99, %v62, 0.0
    %v104 = vsel %vm100, %v61, 0.0
    %105 = vst [vmem:[#allocation2] sm:$0xf] %v101
    %106 = vst [vmem:[#allocation2 + $0x8] sm:$0xf] %v102
    %107 = vst [vmem:[#allocation2 + $0x10] sm:$0xf] %v103
    %108 = vst [vmem:[#allocation2 + $0x18] sm:$0xf] %v104
    %109 = vrot.lane.b32.xlu0 %v44, 16
    %v110 = vpop.permute.xlu0 %109
    %111 = vrot.lane.b32.xlu0 %v48, 16
    %v112 = vpop.permute.xlu0 %111
    %113 = vrot.lane.b32.xlu0 %v45, 16
    %v114 = vpop.permute.xlu0 %113
    %115 = vrot.lane.b32.xlu0 %v49, 16
    %v116 = vpop.permute.xlu0 %115
    %vm117 = vcmp.lt.s32.totalorder %v28, 16
    %v118 = vsel %vm117, %v114, %v116
    %v119 = vsel %vm117, %v112, %v114
    %v120 = vsel %vm117, %v110, %v112
    %v121 = vsel %vm117, %v116, %v110
    %vm122 = vcmp.ge.s32.totalorder %v32, 0
    %vm123 = vcmp.ge.s32.totalorder %v33, 0
    %vm124 = vcmp.ge.s32.totalorder %v34, 0
    %vm125 = vcmp.ge.s32.totalorder %v35, 0
    %vm126 = vcmp.lt.s32.totalorder %v32, 16
    %vm127 = vcmp.lt.s32.totalorder %v33, 16
    %vm128 = vcmp.lt.s32.totalorder %v34, 16
    %vm129 = vcmp.lt.s32.totalorder %v35, 16
    %vm130 = vmand %vm122, %vm126
    %vm131 = vmand %vm123, %vm127
    %vm132 = vmand %vm124, %vm128
    %vm133 = vmand %vm125, %vm129
    %vm134 = vmand %vm130, %vm77
    %vm135 = vmand %vm131, %vm78
    %vm136 = vmand %vm132, %vm79
    %vm137 = vmand %vm133, %vm80
    %vm138 = vmand %vm134, %vm85
    %vm139 = vmand %vm135, %vm86
    %vm140 = vmand %vm136, %vm87
    %vm141 = vmand %vm137, %vm88
    %v142 = vsel %vm138, 1, 0
    %v143 = vsel %vm139, 1, 0
    %v144 = vsel %vm140, 1, 0
    %v145 = vsel %vm141, 1, 0
    %vm146 = vcmp.eq.s32.totalorder %v142, 1
    %vm147 = vcmp.eq.s32.totalorder %v143, 1
    %vm148 = vcmp.eq.s32.totalorder %v144, 1
    %vm149 = vcmp.eq.s32.totalorder %v145, 1
    %v150 = vsel %vm146, %v121, 0.0
    %v151 = vsel %vm147, %v120, 0.0
    %v152 = vsel %vm148, %v119, 0.0
    %v153 = vsel %vm149, %v118, 0.0
    %v158 = vrot.slane %v150, 4
    %v159 = vrot.slane %v151, 4
    %v160 = vrot.slane %v152, 4
    %v161 = vrot.slane %v153, 4
    %166 = vst [vmem:[#allocation2] sm:$0xf0] %v158
    %167 = vst [vmem:[#allocation2 + $0x8] sm:$0xf0] %v159
    %168 = vst [vmem:[#allocation2 + $0x10] sm:$0xf0] %v160
    %169 = vst [vmem:[#allocation2 + $0x18] sm:$0xf0] %v161
    %170 = vrot.lane.b32.xlu0 %v44, 15
    %v171 = vpop.permute.xlu0 %170
    %172 = vrot.lane.b32.xlu0 %v48, 15
    %v173 = vpop.permute.xlu0 %172
    %174 = vrot.lane.b32.xlu0 %v45, 15
    %v175 = vpop.permute.xlu0 %174
    %176 = vrot.lane.b32.xlu0 %v49, 15
    %v177 = vpop.permute.xlu0 %176
    %vm178 = vcmp.lt.s32.totalorder %v28, 15
    %v179 = vsel %vm178, %v175, %v177
    %v180 = vsel %vm178, %v173, %v175
    %v181 = vsel %vm178, %v171, %v173
    %v182 = vsel %vm178, %v177, %v171
    %vm183 = vcmp.ge.s32.totalorder %v32, 4294967295
    %vm184 = vcmp.ge.s32.totalorder %v33, 4294967295
    %vm185 = vcmp.ge.s32.totalorder %v34, 4294967295
    %vm186 = vcmp.ge.s32.totalorder %v35, 4294967295
    %vm187 = vcmp.lt.s32.totalorder %v32, 15
    %vm188 = vcmp.lt.s32.totalorder %v33, 15
    %vm189 = vcmp.lt.s32.totalorder %v34, 15
    %vm190 = vcmp.lt.s32.totalorder %v35, 15
    %vm191 = vmand %vm183, %vm187
    %vm192 = vmand %vm184, %vm188
    %vm193 = vmand %vm185, %vm189
    %vm194 = vmand %vm186, %vm190
    %vm195 = vmand %vm191, %vm77
    %vm196 = vmand %vm192, %vm78
    %vm197 = vmand %vm193, %vm79
    %vm198 = vmand %vm194, %vm80
    %vm199 = vmand %vm195, %vm85
    %vm200 = vmand %vm196, %vm86
    %vm201 = vmand %vm197, %vm87
    %vm202 = vmand %vm198, %vm88
    %v203 = vsel %vm199, 1, 0
    %v204 = vsel %vm200, 1, 0
    %v205 = vsel %vm201, 1, 0
    %v206 = vsel %vm202, 1, 0
    %vm207 = vcmp.eq.s32.totalorder %v203, 1
    %vm208 = vcmp.eq.s32.totalorder %v204, 1
    %vm209 = vcmp.eq.s32.totalorder %v205, 1
    %vm210 = vcmp.eq.s32.totalorder %v206, 1
    %v211 = vsel %vm207, %v182, 0.0
    %v212 = vsel %vm208, %v181, 0.0
    %v213 = vsel %vm209, %v180, 0.0
    %v214 = vsel %vm210, %v179, 0.0
    %215 = vst [vmem:[#allocation2 + $0x20] sm:$0xf] %v211
    %216 = vst [vmem:[#allocation2 + $0x28] sm:$0xf] %v212
    %217 = vst [vmem:[#allocation2 + $0x30] sm:$0xf] %v213
    %218 = vst [vmem:[#allocation2 + $0x38] sm:$0xf] %v214
    %219 = vrot.lane.b32.xlu0 %v44, 1
    %v220 = vpop.permute.xlu0 %219
    %221 = vrot.lane.b32.xlu0 %v48, 1
    %v222 = vpop.permute.xlu0 %221
    %223 = vrot.lane.b32.xlu0 %v45, 1
    %v224 = vpop.permute.xlu0 %223
    %225 = vrot.lane.b32.xlu0 %v49, 1
    %v226 = vpop.permute.xlu0 %225
    %vm227 = vcmp.lt.s32.totalorder %v28, 1
    %v228 = vsel %vm227, %v224, %v226
    %v229 = vsel %vm227, %v222, %v224
    %v230 = vsel %vm227, %v220, %v222
    %v231 = vsel %vm227, %v226, %v220
    %vm232 = vcmp.ge.s32.totalorder %v40, 0
    %vm233 = vcmp.ge.s32.totalorder %v41, 0
    %vm234 = vcmp.ge.s32.totalorder %v42, 0
    %vm235 = vcmp.ge.s32.totalorder %v43, 0
    %vm236 = vmand %vm73, %vm232
    %vm237 = vmand %vm74, %vm233
    %vm238 = vmand %vm75, %vm234
    %vm239 = vmand %vm76, %vm235
    %vm240 = vcmp.lt.s32.totalorder %v40, 16
    %vm241 = vcmp.lt.s32.totalorder %v41, 16
    %vm242 = vcmp.lt.s32.totalorder %v42, 16
    %vm243 = vcmp.lt.s32.totalorder %v43, 16
    %vm244 = vmand %vm236, %vm240
    %vm245 = vmand %vm237, %vm241
    %vm246 = vmand %vm238, %vm242
    %vm247 = vmand %vm239, %vm243
    %v248 = vsel %vm244, 1, 0
    %v249 = vsel %vm245, 1, 0
    %v250 = vsel %vm246, 1, 0
    %v251 = vsel %vm247, 1, 0
    %vm252 = vcmp.eq.s32.totalorder %v248, 1
    %vm253 = vcmp.eq.s32.totalorder %v249, 1
    %vm254 = vcmp.eq.s32.totalorder %v250, 1
    %vm255 = vcmp.eq.s32.totalorder %v251, 1
    %v256 = vsel %vm252, %v231, 0.0
    %v257 = vsel %vm253, %v230, 0.0
    %v258 = vsel %vm254, %v229, 0.0
    %v259 = vsel %vm255, %v228, 0.0
    %v264 = vrot.slane %v256, 4
    %v265 = vrot.slane %v257, 4
    %v266 = vrot.slane %v258, 4
    %v267 = vrot.slane %v259, 4
    %272 = vst [vmem:[#allocation2 + $0x20] sm:$0xf0] %v264
    %273 = vst [vmem:[#allocation2 + $0x28] sm:$0xf0] %v265
    %274 = vst [vmem:[#allocation2 + $0x30] sm:$0xf0] %v266
    %275 = vst [vmem:[#allocation2 + $0x38] sm:$0xf0] %v267
    %276 = vst [vmem:[#allocation2 + $0x40] sm:$0xf] %v44
    %277 = vst [vmem:[#allocation2 + $0x48] sm:$0xf] %v48
    %278 = vst [vmem:[#allocation2 + $0x50] sm:$0xf] %v45
    %279 = vst [vmem:[#allocation2 + $0x58] sm:$0xf] %v49
    %280 = vrot.lane.b32.xlu0 %v44, 127
    %v281 = vpop.permute.xlu0 %280
    %282 = vrot.lane.b32.xlu0 %v48, 127
    %v283 = vpop.permute.xlu0 %282
    %284 = vrot.lane.b32.xlu0 %v45, 127
    %v285 = vpop.permute.xlu0 %284
    %286 = vrot.lane.b32.xlu0 %v49, 127
    %v287 = vpop.permute.xlu0 %286
    %vm288 = vcmp.lt.s32.totalorder %v28, 127
    %v289 = vsel %vm288, %v285, %v287
    %v290 = vsel %vm288, %v283, %v285
    %v291 = vsel %vm288, %v281, %v283
    %v292 = vsel %vm288, %v287, %v281
    %vm293 = vmand %vm191, %vm232
    %vm294 = vmand %vm192, %vm233
    %vm295 = vmand %vm193, %vm234
    %vm296 = vmand %vm194, %vm235
    %vm297 = vmand %vm293, %vm240
    %vm298 = vmand %vm294, %vm241
    %vm299 = vmand %vm295, %vm242
    %vm300 = vmand %vm296, %vm243
    %v301 = vsel %vm297, 1, 0
    %v302 = vsel %vm298, 1, 0
    %v303 = vsel %vm299, 1, 0
    %v304 = vsel %vm300, 1, 0
    %vm305 = vcmp.eq.s32.totalorder %v301, 1
    %vm306 = vcmp.eq.s32.totalorder %v302, 1
    %vm307 = vcmp.eq.s32.totalorder %v303, 1
    %vm308 = vcmp.eq.s32.totalorder %v304, 1
    %v309 = vsel %vm305, %v291, 0.0
    %v310 = vsel %vm306, %v290, 0.0
    %v311 = vsel %vm307, %v289, 0.0
    %v312 = vsel %vm308, %v292, 0.0
    %v317 = vrot.slane %v309, 4
    %v318 = vrot.slane %v310, 4
    %v319 = vrot.slane %v311, 4
    %v320 = vrot.slane %v312, 4
    %325 = vst [vmem:[#allocation2 + $0x40] sm:$0xf0] %v317
    %326 = vst [vmem:[#allocation2 + $0x48] sm:$0xf0] %v318
    %327 = vst [vmem:[#allocation2 + $0x50] sm:$0xf0] %v319
    %328 = vst [vmem:[#allocation2 + $0x58] sm:$0xf0] %v320
    %329 = vrot.lane.b32.xlu0 %v44, 113
    %v330 = vpop.permute.xlu0 %329
    %331 = vrot.lane.b32.xlu0 %v48, 113
    %v332 = vpop.permute.xlu0 %331
    %333 = vrot.lane.b32.xlu0 %v45, 113
    %v334 = vpop.permute.xlu0 %333
    %335 = vrot.lane.b32.xlu0 %v49, 113
    %v336 = vpop.permute.xlu0 %335
    %vm337 = vcmp.lt.s32.totalorder %v28, 113
    %v338 = vsel %vm337, %v334, %v336
    %v339 = vsel %vm337, %v332, %v334
    %v340 = vsel %vm337, %v330, %v332
    %v341 = vsel %vm337, %v336, %v330
    %vm342 = vcmp.ge.s32.totalorder %v40, 4294967295
    %vm343 = vcmp.ge.s32.totalorder %v41, 4294967295
    %vm344 = vcmp.ge.s32.totalorder %v42, 4294967295
    %vm345 = vcmp.ge.s32.totalorder %v43, 4294967295
    %vm346 = vmand %vm73, %vm342
    %vm347 = vmand %vm74, %vm343
    %vm348 = vmand %vm75, %vm344
    %vm349 = vmand %vm76, %vm345
    %vm350 = vcmp.lt.s32.totalorder %v40, 15
    %vm351 = vcmp.lt.s32.totalorder %v41, 15
    %vm352 = vcmp.lt.s32.totalorder %v42, 15
    %vm353 = vcmp.lt.s32.totalorder %v43, 15
    %vm354 = vmand %vm346, %vm350
    %vm355 = vmand %vm347, %vm351
    %vm356 = vmand %vm348, %vm352
    %vm357 = vmand %vm349, %vm353
    %v358 = vsel %vm354, 1, 0
    %v359 = vsel %vm355, 1, 0
    %v360 = vsel %vm356, 1, 0
    %v361 = vsel %vm357, 1, 0
    %vm362 = vcmp.eq.s32.totalorder %v358, 1
    %vm363 = vcmp.eq.s32.totalorder %v359, 1
    %vm364 = vcmp.eq.s32.totalorder %v360, 1
    %vm365 = vcmp.eq.s32.totalorder %v361, 1
    %v366 = vsel %vm362, %v340, 0.0
    %v367 = vsel %vm363, %v339, 0.0
    %v368 = vsel %vm364, %v338, 0.0
    %v369 = vsel %vm365, %v341, 0.0
    %370 = vst [vmem:[#allocation2 + $0x60] sm:$0xf] %v366
    %371 = vst [vmem:[#allocation2 + $0x68] sm:$0xf] %v367
    %372 = vst [vmem:[#allocation2 + $0x70] sm:$0xf] %v368
    %373 = vst [vmem:[#allocation2 + $0x78] sm:$0xf] %v369
    %374 = vrot.lane.b32.xlu0 %v44, 112
    %v375 = vpop.permute.xlu0 %374
    %376 = vrot.lane.b32.xlu0 %v48, 112
    %v377 = vpop.permute.xlu0 %376
    %378 = vrot.lane.b32.xlu0 %v45, 112
    %v379 = vpop.permute.xlu0 %378
    %380 = vrot.lane.b32.xlu0 %v49, 112
    %v381 = vpop.permute.xlu0 %380
    %vm382 = vcmp.lt.s32.totalorder %v28, 112
    %v383 = vsel %vm382, %v379, %v381
    %v384 = vsel %vm382, %v377, %v379
    %v385 = vsel %vm382, %v375, %v377
    %v386 = vsel %vm382, %v381, %v375
    %vm387 = vmand %vm130, %vm342
    %vm388 = vmand %vm131, %vm343
    %vm389 = vmand %vm132, %vm344
    %vm390 = vmand %vm133, %vm345
    %vm391 = vmand %vm387, %vm350
    %vm392 = vmand %vm388, %vm351
    %vm393 = vmand %vm389, %vm352
    %vm394 = vmand %vm390, %vm353
    %v395 = vsel %vm391, 1, 0
    %v396 = vsel %vm392, 1, 0
    %v397 = vsel %vm393, 1, 0
    %v398 = vsel %vm394, 1, 0
    %vm399 = vcmp.eq.s32.totalorder %v395, 1
    %vm400 = vcmp.eq.s32.totalorder %v396, 1
    %vm401 = vcmp.eq.s32.totalorder %v397, 1
    %vm402 = vcmp.eq.s32.totalorder %v398, 1
    %v403 = vsel %vm399, %v385, 0.0
    %v404 = vsel %vm400, %v384, 0.0
    %v405 = vsel %vm401, %v383, 0.0
    %v406 = vsel %vm402, %v386, 0.0
    %v411 = vrot.slane %v403, 4
    %v412 = vrot.slane %v404, 4
    %v413 = vrot.slane %v405, 4
    %v414 = vrot.slane %v406, 4
    %419 = vst [vmem:[#allocation2 + $0x60] sm:$0xf0] %v411
    %420 = vst [vmem:[#allocation2 + $0x68] sm:$0xf0] %v412
    %421 = vst [vmem:[#allocation2 + $0x70] sm:$0xf0] %v413
    %422 = vst [vmem:[#allocation2 + $0x78] sm:$0xf0] %v414
    %423 = vrot.lane.b32.xlu0 %v44, 111
    %v424 = vpop.permute.xlu0 %423
    %425 = vrot.lane.b32.xlu0 %v48, 111
    %v426 = vpop.permute.xlu0 %425
    %427 = vrot.lane.b32.xlu0 %v45, 111
    %v428 = vpop.permute.xlu0 %427
    %429 = vrot.lane.b32.xlu0 %v49, 111
    %v430 = vpop.permute.xlu0 %429
    %vm431 = vcmp.lt.s32.totalorder %v28, 111
    %v432 = vsel %vm431, %v428, %v430
    %v433 = vsel %vm431, %v426, %v428
    %v434 = vsel %vm431, %v424, %v426
    %v435 = vsel %vm431, %v430, %v424
    %vm436 = vmand %vm191, %vm342
    %vm437 = vmand %vm192, %vm343
    %vm438 = vmand %vm193, %vm344
    %vm439 = vmand %vm194, %vm345
    %vm440 = vmand %vm436, %vm350
    %vm441 = vmand %vm437, %vm351
    %vm442 = vmand %vm438, %vm352
    %vm443 = vmand %vm439, %vm353
    %v444 = vsel %vm440, 1, 0
    %v445 = vsel %vm441, 1, 0
    %v446 = vsel %vm442, 1, 0
    %v447 = vsel %vm443, 1, 0
    %vm448 = vcmp.eq.s32.totalorder %v444, 1
    %vm449 = vcmp.eq.s32.totalorder %v445, 1
    %vm450 = vcmp.eq.s32.totalorder %v446, 1
    %vm451 = vcmp.eq.s32.totalorder %v447, 1
    %v452 = vsel %vm448, %v434, 0.0
    %v453 = vsel %vm449, %v433, 0.0
    %v454 = vsel %vm450, %v432, 0.0
    %v455 = vsel %vm451, %v435, 0.0
    %456 = vst [vmem:[#allocation2 + $0x80] sm:$0xf] %v452
    %457 = vst [vmem:[#allocation2 + $0x88] sm:$0xf] %v453
    %458 = vst [vmem:[#allocation2 + $0x90] sm:$0xf] %v454
    %459 = vst [vmem:[#allocation2 + $0x98] sm:$0xf] %v455
    %v460 = vld [vmem:[%s1] sm:$0xff]
    %v461 = vld [vmem:[%s1 + $0x8] sm:$0xff]
    %v462 = vld [vmem:[%s1 + $0x10] sm:$0xff]
    %v463 = vld [vmem:[%s1 + $0x18] sm:$0xff]
    %v464 = vld [vmem:[#allocation2] sm:$0xff]
    %v465 = vld [vmem:[#allocation2 + $0x8] sm:$0xff]
    %v466 = vld [vmem:[#allocation2 + $0x10] sm:$0xff]
    %v467 = vld [vmem:[#allocation2 + $0x18] sm:$0xff]
    %v468 = vld [vmem:[#allocation2 + $0x20] sm:$0xff]
    %v469 = vld [vmem:[#allocation2 + $0x28] sm:$0xff]
    %v470 = vld [vmem:[#allocation2 + $0x30] sm:$0xff]
    %v471 = vld [vmem:[#allocation2 + $0x38] sm:$0xff]
    %v472 = vld [vmem:[#allocation2 + $0x40] sm:$0xff]
    %v473 = vld [vmem:[#allocation2 + $0x48] sm:$0xff]
    %v474 = vld [vmem:[#allocation2 + $0x50] sm:$0xff]
    %v475 = vld [vmem:[#allocation2 + $0x58] sm:$0xff]
    %v476 = vld [vmem:[#allocation2 + $0x60] sm:$0xff]
    %v477 = vld [vmem:[#allocation2 + $0x68] sm:$0xff]
    %v478 = vld [vmem:[#allocation2 + $0x70] sm:$0xff]
    %v479 = vld [vmem:[#allocation2 + $0x78] sm:$0xff]
    %v480 = vld [vmem:[#allocation2 + $0x80] sm:$0xf]
    %v481 = vld [vmem:[#allocation2 + $0x88] sm:$0xf]
    %v482 = vld [vmem:[#allocation2 + $0x90] sm:$0xf]
    %v483 = vld [vmem:[#allocation2 + $0x98] sm:$0xf]
    %vm484 = vcmask 293888
    %v486 = vsel %vm484, %v460, 0
    %v489 = vsel %vm484, %v461, 0
    %v492 = vsel %vm484, %v462, 0
    %v495 = vsel %vm484, %v463, 0
    %vm497 = vcmask 1043456
    %v499 = vsel %vm497, %v480, 0
    %v502 = vsel %vm497, %v481, 0
    %v505 = vsel %vm497, %v482, 0
    %v508 = vsel %vm497, %v483, 0
    %510 = vmatprep.subr.mxu0 %v465
    %511 = vmatpush1.msra.mxu0 %v464
    %512 = vmatprep.subr.mxu0 %v469
    %513 = vmatpush1.msra.mxu0 %v468
    %514 = vmatprep.subr.mxu0 %v473
    %515 = vmatpush1.msra.mxu0 %v472
    %516 = vmatprep.subr.mxu0 %v477
    %517 = vmatpush1.msra.mxu0 %v476
    %518 = vmatprep.subr.mxu0 %v502
    %519 = vmatpush1.msra.mxu0 %v499
    %520 = vmatprep.subr.mxu0 0.0
    %521 = vmatpush1.msra.mxu0 0.0
    %522 = vmatprep.subr.mxu0 0.0
    %523 = vmatpush1.msra.mxu0 0.0
    %524 = vmatprep.subr.mxu0 0.0
    %525 = vmatpush1.msra.mxu0 0.0
    %526 = vmatprep.subr.mxu0 0.0
    %527 = vmatpush1.msra.mxu0 0.0
    %528 = vmatprep.subr.mxu0 0.0
    %529 = vmatpush1.msra.mxu0 0.0
    %530 = vmatprep.subr.mxu0 0.0
    %531 = vmatpush1.msra.mxu0 0.0
    %532 = vmatprep.subr.mxu0 0.0
    %533 = vmatpush1.msra.mxu0 0.0
    %534 = vmatprep.subr.mxu0 0.0
    %535 = vmatpush1.msra.mxu0 0.0
    %536 = vmatprep.subr.mxu0 0.0
    %537 = vmatpush1.msra.mxu0 0.0
    %538 = vmatprep.subr.mxu0 0.0
    %539 = vmatpush1.msra.mxu0 0.0
    %540 = vmatprep.subr.mxu0 0.0
    %541 = vmatpush1.msra.mxu0 0.0
    %542 = vmatprep.subr.mxu0 0.0
    %543 = vmatpush1.msra.mxu0 0.0
    %544 = vmatprep.subr.mxu0 0.0
    %545 = vmatpush1.msra.mxu0 0.0
    %546 = vmatprep.subr.mxu0 0.0
    %547 = vmatpush1.msra.mxu0 0.0
    %548 = vmatprep.subr.mxu0 0.0
    %549 = vmatpush1.msra.mxu0 0.0
    %550 = vmatprep.subr.mxu0 0.0
    %551 = vmatpush1.msra.mxu0 0.0
    %552 = vmatprep.subr.mxu0 0.0
    %553 = vmatpush1.msra.mxu0 0.0
    %554 = vmatprep.subr.mxu0 0.0
    %555 = vmatpush1.msra.mxu0 0.0
    %556 = vmatprep.subr.mxu0 0.0
    %557 = vmatpush1.msra.mxu0 0.0
    %558 = vmatprep.subr.mxu0 0.0
    %559 = vmatpush1.msra.mxu0 0.0
    %560 = vmatprep.subr.mxu0 0.0
    %561 = vmatpush1.msra.mxu0 0.0
    %562 = vmatprep.subr.mxu0 0.0
    %563 = vmatpush1.msra.mxu0 0.0
    %564 = vmatprep.subr.mxu0 0.0
    %565 = vmatpush1.msra.mxu0 0.0
    %566 = vmatprep.subr.mxu0 0.0
    %567 = vmatpush1.msra.mxu0 0.0
    %568 = vmatprep.subr.mxu0 0.0
    %569 = vmatpush1.msra.mxu0 0.0
    %570 = vmatprep.subr.mxu0 0.0
    %571 = vmatpush1.msra.mxu0 0.0
    %572 = vmatprep.subr.mxu0 0.0
    %573 = vmatpush1.msra.mxu0 0.0
    %574 = vmatprep.mubr.f32.mxu0 0.0
    %575 = vmatmul.mubr.f32.gmra.mrb[0].mxu0 %v486
    %v576 = vpop.f32.mrb[0].mxu0
    %v577 = vadd.f32 0.0, %v576
    %v578 = vpop.f32.mrb[0].mxu0
    %v579 = vadd.f32 0.0, %v578
    %580 = vmatprep.mubr.f32.mxu0 0.0
    %581 = vmatmul.mubr.f32.gmra.mrb[0].mxu0 %v489
    %v582 = vpop.f32.mrb[0].mxu0
    %v583 = vadd.f32 0.0, %v582
    %v584 = vpop.f32.mrb[0].mxu0
    %v585 = vadd.f32 0.0, %v584
    %586 = vmatprep.mubr.f32.mxu0 0.0
    %587 = vmatmul.mubr.f32.gmra.mrb[0].mxu0 %v492
    %v588 = vpop.f32.mrb[0].mxu0
    %v589 = vadd.f32 0.0, %v588
    %v590 = vpop.f32.mrb[0].mxu0
    %v591 = vadd.f32 0.0, %v590
    %592 = vmatprep.mubr.f32.mxu0 0.0
    %593 = vmatmul.mubr.f32.gmra.mrb[0].mxu0 %v495
    %v594 = vpop.f32.mrb[0].mxu0
    %v595 = vadd.f32 0.0, %v594
    %v596 = vpop.f32.mrb[0].mxu0
    %v597 = vadd.f32 0.0, %v596
    %598 = vdwg.mxu0
    %599 = vmatprep.subr.mxu0 %v467
    %600 = vmatpush1.msra.mxu0 %v466
    %601 = vmatprep.subr.mxu0 %v471
    %602 = vmatpush1.msra.mxu0 %v470
    %603 = vmatprep.subr.mxu0 %v475
    %604 = vmatpush1.msra.mxu0 %v474
    %605 = vmatprep.subr.mxu0 %v479
    %606 = vmatpush1.msra.mxu0 %v478
    %607 = vmatprep.subr.mxu0 %v508
    %608 = vmatpush1.msra.mxu0 %v505
    %609 = vmatprep.subr.mxu0 0.0
    %610 = vmatpush1.msra.mxu0 0.0
    %611 = vmatprep.subr.mxu0 0.0
    %612 = vmatpush1.msra.mxu0 0.0
    %613 = vmatprep.subr.mxu0 0.0
    %614 = vmatpush1.msra.mxu0 0.0
    %615 = vmatprep.subr.mxu0 0.0
    %616 = vmatpush1.msra.mxu0 0.0
    %617 = vmatprep.subr.mxu0 0.0
    %618 = vmatpush1.msra.mxu0 0.0
    %619 = vmatprep.subr.mxu0 0.0
    %620 = vmatpush1.msra.mxu0 0.0
    %621 = vmatprep.subr.mxu0 0.0
    %622 = vmatpush1.msra.mxu0 0.0
    %623 = vmatprep.subr.mxu0 0.0
    %624 = vmatpush1.msra.mxu0 0.0
    %625 = vmatprep.subr.mxu0 0.0
    %626 = vmatpush1.msra.mxu0 0.0
    %627 = vmatprep.subr.mxu0 0.0
    %628 = vmatpush1.msra.mxu0 0.0
    %629 = vmatprep.subr.mxu0 0.0
    %630 = vmatpush1.msra.mxu0 0.0
    %631 = vmatprep.subr.mxu0 0.0
    %632 = vmatpush1.msra.mxu0 0.0
    %633 = vmatprep.subr.mxu0 0.0
    %634 = vmatpush1.msra.mxu0 0.0
    %635 = vmatprep.subr.mxu0 0.0
    %636 = vmatpush1.msra.mxu0 0.0
    %637 = vmatprep.subr.mxu0 0.0
    %638 = vmatpush1.msra.mxu0 0.0
    %639 = vmatprep.subr.mxu0 0.0
    %640 = vmatpush1.msra.mxu0 0.0
    %641 = vmatprep.subr.mxu0 0.0
    %642 = vmatpush1.msra.mxu0 0.0
    %643 = vmatprep.subr.mxu0 0.0
    %644 = vmatpush1.msra.mxu0 0.0
    %645 = vmatprep.subr.mxu0 0.0
    %646 = vmatpush1.msra.mxu0 0.0
    %647 = vmatprep.subr.mxu0 0.0
    %648 = vmatpush1.msra.mxu0 0.0
    %649 = vmatprep.subr.mxu0 0.0
    %650 = vmatpush1.msra.mxu0 0.0
    %651 = vmatprep.subr.mxu0 0.0
    %652 = vmatpush1.msra.mxu0 0.0
    %653 = vmatprep.subr.mxu0 0.0
    %654 = vmatpush1.msra.mxu0 0.0
    %655 = vmatprep.subr.mxu0 0.0
    %656 = vmatpush1.msra.mxu0 0.0
    %657 = vmatprep.subr.mxu0 0.0
    %658 = vmatpush1.msra.mxu0 0.0
    %659 = vmatprep.subr.mxu0 0.0
    %660 = vmatpush1.msra.mxu0 0.0
    %661 = vmatprep.subr.mxu0 0.0
    %662 = vmatpush1.msra.mxu0 0.0
    %663 = vmatprep.mubr.f32.mxu0 0.0
    %664 = vmatmul.mubr.f32.gmra.mrb[0].mxu0 %v486
    %v665 = vpop.f32.mrb[0].mxu0
    %v666 = vadd.f32 0.0, %v665
    %v667 = vpop.f32.mrb[0].mxu0
    %v668 = vadd.f32 0.0, %v667
    %669 = vmatprep.mubr.f32.mxu0 0.0
    %670 = vmatmul.mubr.f32.gmra.mrb[0].mxu0 %v489
    %v671 = vpop.f32.mrb[0].mxu0
    %v672 = vadd.f32 0.0, %v671
    %v673 = vpop.f32.mrb[0].mxu0
    %v674 = vadd.f32 0.0, %v673
    %675 = vmatprep.mubr.f32.mxu0 0.0
    %676 = vmatmul.mubr.f32.gmra.mrb[0].mxu0 %v492
    %v677 = vpop.f32.mrb[0].mxu0
    %v678 = vadd.f32 0.0, %v677
    %v679 = vpop.f32.mrb[0].mxu0
    %v680 = vadd.f32 0.0, %v679
    %681 = vmatprep.mubr.f32.mxu0 0.0
    %682 = vmatmul.mubr.f32.gmra.mrb[0].mxu0 %v495
    %v683 = vpop.f32.mrb[0].mxu0
    %v684 = vadd.f32 0.0, %v683
    %v685 = vpop.f32.mrb[0].mxu0
    %v686 = vadd.f32 0.0, %v685
    %687 = vdwg.mxu0
    %v688 = vadd.f32 %v577, %v579
    %v689 = vadd.f32 %v688, %v666
    %v690 = vadd.f32 %v689, %v668
    %691 = vadd.xlane.f32.xlu0 %v690
    %v692 = vpop.xlane.xlu0 %691
    %v693 = vadd.f32 %v583, %v585
    %v694 = vadd.f32 %v693, %v672
    %v695 = vadd.f32 %v694, %v674
    %696 = vadd.xlane.f32.xlu0 %v695
    %v697 = vpop.xlane.xlu0 %696
    %v698 = vadd.f32 %v589, %v591
    %v699 = vadd.f32 %v698, %v678
    %v700 = vadd.f32 %v699, %v680
    %701 = vadd.xlane.f32.xlu0 %v700
    %v702 = vpop.xlane.xlu0 %701
    %v703 = vadd.f32 %v595, %v597
    %v704 = vadd.f32 %v703, %v684
    %v705 = vadd.f32 %v704, %v686
    %706 = vadd.xlane.f32.xlu0 %v705
    %v707 = vpop.xlane.xlu0 %706
    %v708 = vmul.f32 %v577, %v577
    %v709 = vmul.f32 %v579, %v579
    %v710 = vmul.f32 %v666, %v666
    %v711 = vmul.f32 %v668, %v668
    %v712 = vmul.f32 %v583, %v583
    %v713 = vmul.f32 %v585, %v585
    %v714 = vmul.f32 %v672, %v672
    %v715 = vmul.f32 %v674, %v674
    %v716 = vmul.f32 %v589, %v589
    %v717 = vmul.f32 %v591, %v591
    %v718 = vmul.f32 %v678, %v678
    %v719 = vmul.f32 %v680, %v680
    %v720 = vmul.f32 %v595, %v595
    %v721 = vmul.f32 %v597, %v597
    %v722 = vmul.f32 %v684, %v684
    %v723 = vmul.f32 %v686, %v686
    %v724 = vadd.f32 %v708, %v709
    %v725 = vadd.f32 %v724, %v710
    %v726 = vadd.f32 %v725, %v711
    %727 = vadd.xlane.f32.xlu0 %v726
    %v728 = vpop.xlane.xlu0 %727
    %v729 = vadd.f32 %v712, %v713
    %v730 = vadd.f32 %v729, %v714
    %v731 = vadd.f32 %v730, %v715
    %732 = vadd.xlane.f32.xlu0 %v731
    %v733 = vpop.xlane.xlu0 %732
    %v734 = vadd.f32 %v716, %v717
    %v735 = vadd.f32 %v734, %v718
    %v736 = vadd.f32 %v735, %v719
    %737 = vadd.xlane.f32.xlu0 %v736
    %v738 = vpop.xlane.xlu0 %737
    %v739 = vadd.f32 %v720, %v721
    %v740 = vadd.f32 %v739, %v722
    %v741 = vadd.f32 %v740, %v723
    %742 = vadd.xlane.f32.xlu0 %v741
    %v743 = vpop.xlane.xlu0 %742
    %v744 = vmul.f32 %v692, 0.001953125
    %v745 = vmul.f32 %v697, 0.001953125
    %v746 = vmul.f32 %v702, 0.001953125
    %v747 = vmul.f32 %v707, 0.001953125
    %v748 = vmul.f32 %v728, 0.001953125
    %v749 = vmul.f32 %v733, 0.001953125
    %v750 = vmul.f32 %v738, 0.001953125
    %v751 = vmul.f32 %v743, 0.001953125
    %v752 = vmul.f32 %v744, %v744
    %v753 = vmul.f32 %v745, %v745
    %v754 = vmul.f32 %v746, %v746
    %v755 = vmul.f32 %v747, %v747
    %v756 = vsub.f32 %v748, %v752
    %v757 = vsub.f32 %v749, %v753
    %v758 = vsub.f32 %v750, %v754
    %v759 = vsub.f32 %v751, %v755
    %v760 = vmax.f32 %v756, 0.0
    %v761 = vmax.f32 %v757, 0.0
    %v762 = vmax.f32 %v758, 0.0
    %v763 = vmax.f32 %v759, 0.0
    %v764 = vadd.f32 %v760, 1e-05
    %v765 = vadd.f32 %v761, 1e-05
    %v766 = vadd.f32 %v762, 1e-05
    %v767 = vadd.f32 %v763, 1e-05
    %v768 = vrsqrt.pop %v764
    %v769 = vrsqrt.pop %v765
    %v770 = vrsqrt.pop %v766
    %v771 = vrsqrt.pop %v767
    %v772 = vld [vmem:[%s2] sm:$0xff]
    %v773 = vld [vmem:[%s2 + $0x8] sm:$0xff]
    %v774 = vld [vmem:[%s2 + $0x10] sm:$0xff]
    %v775 = vld [vmem:[%s2 + $0x18] sm:$0xff]
    %v776 = vmul.f32 %v768, %v772
    %v777 = vmul.f32 %v769, %v773
    %v778 = vmul.f32 %v770, %v774
    %v779 = vmul.f32 %v771, %v775
    %v780 = vsub.f32 %v577, %v744
    %v781 = vsub.f32 %v579, %v744
    %v782 = vsub.f32 %v666, %v744
    %v783 = vsub.f32 %v668, %v744
    %v784 = vsub.f32 %v583, %v745
    %v785 = vsub.f32 %v585, %v745
    %v786 = vsub.f32 %v672, %v745
    %v787 = vsub.f32 %v674, %v745
    %v788 = vsub.f32 %v589, %v746
    %v789 = vsub.f32 %v591, %v746
    %v790 = vsub.f32 %v678, %v746
    %v791 = vsub.f32 %v680, %v746
    %v792 = vsub.f32 %v595, %v747
    %v793 = vsub.f32 %v597, %v747
    %v794 = vsub.f32 %v684, %v747
    %v795 = vsub.f32 %v686, %v747
    %797 = vset.pattern.permute.xlu0 0
    %798 = vperm.xlu0 %797, %v776
    %v799 = vpop.permute.xlu0 %798
    %802 = vset.pattern.permute.xlu0 0
    %803 = vperm.xlu0 %802, %v777
    %v804 = vpop.permute.xlu0 %803
    %807 = vset.pattern.permute.xlu0 0
    %808 = vperm.xlu0 %807, %v778
    %v809 = vpop.permute.xlu0 %808
    %812 = vset.pattern.permute.xlu0 0
    %813 = vperm.xlu0 %812, %v779
    %v814 = vpop.permute.xlu0 %813
    %v816 = vmul.f32 %v780, %v799
    %v817 = vmul.f32 %v781, %v799
    %v818 = vmul.f32 %v782, %v799
    %v819 = vmul.f32 %v783, %v799
    %v820 = vmul.f32 %v784, %v804
    %v821 = vmul.f32 %v785, %v804
    %v822 = vmul.f32 %v786, %v804
    %v823 = vmul.f32 %v787, %v804
    %v824 = vmul.f32 %v788, %v809
    %v825 = vmul.f32 %v789, %v809
    %v826 = vmul.f32 %v790, %v809
    %v827 = vmul.f32 %v791, %v809
    %v828 = vmul.f32 %v792, %v814
    %v829 = vmul.f32 %v793, %v814
    %v830 = vmul.f32 %v794, %v814
    %v831 = vmul.f32 %v795, %v814
    %v832 = vld [vmem:[%s3] sm:$0xff]
    %v833 = vld [vmem:[%s3 + $0x8] sm:$0xff]
    %v834 = vld [vmem:[%s3 + $0x10] sm:$0xff]
    %v835 = vld [vmem:[%s3 + $0x18] sm:$0xff]
    %837 = vset.pattern.permute.xlu0 0
    %838 = vperm.xlu0 %837, %v832
    %v839 = vpop.permute.xlu0 %838
    %842 = vset.pattern.permute.xlu0 0
    %843 = vperm.xlu0 %842, %v833
    %v844 = vpop.permute.xlu0 %843
    %847 = vset.pattern.permute.xlu0 0
    %848 = vperm.xlu0 %847, %v834
    %v849 = vpop.permute.xlu0 %848
    %852 = vset.pattern.permute.xlu0 0
    %853 = vperm.xlu0 %852, %v835
    %v854 = vpop.permute.xlu0 %853
    %v856 = vadd.f32 %v816, %v839
    %v857 = vadd.f32 %v817, %v839
    %v858 = vadd.f32 %v818, %v839
    %v859 = vadd.f32 %v819, %v839
    %v860 = vadd.f32 %v820, %v844
    %v861 = vadd.f32 %v821, %v844
    %v862 = vadd.f32 %v822, %v844
    %v863 = vadd.f32 %v823, %v844
    %v864 = vadd.f32 %v824, %v849
    %v865 = vadd.f32 %v825, %v849
    %v866 = vadd.f32 %v826, %v849
    %v867 = vadd.f32 %v827, %v849
    %v868 = vadd.f32 %v828, %v854
    %v869 = vadd.f32 %v829, %v854
    %v870 = vadd.f32 %v830, %v854
    %v871 = vadd.f32 %v831, %v854
    %v872 = vmax.f32 %v856, 0.0
    %v873 = vmax.f32 %v857, 0.0
    %v874 = vmax.f32 %v858, 0.0
    %v875 = vmax.f32 %v859, 0.0
    %v876 = vmax.f32 %v860, 0.0
    %v877 = vmax.f32 %v861, 0.0
    %v878 = vmax.f32 %v862, 0.0
    %v879 = vmax.f32 %v863, 0.0
    %v880 = vmax.f32 %v864, 0.0
    %v881 = vmax.f32 %v865, 0.0
    %v882 = vmax.f32 %v866, 0.0
    %v883 = vmax.f32 %v867, 0.0
    %v884 = vmax.f32 %v868, 0.0
    %v885 = vmax.f32 %v869, 0.0
    %v886 = vmax.f32 %v870, 0.0
    %v887 = vmax.f32 %v871, 0.0
    %888 = vrot.lane.b32.xlu0 %v872, 17
    %v889 = vpop.permute.xlu0 %888
    %890 = vrot.lane.b32.xlu0 %v876, 17
    %v891 = vpop.permute.xlu0 %890
    %892 = vrot.lane.b32.xlu0 %v880, 17
    %v893 = vpop.permute.xlu0 %892
    %894 = vrot.lane.b32.xlu0 %v884, 17
    %v895 = vpop.permute.xlu0 %894
    %896 = vrot.lane.b32.xlu0 %v873, 17
    %v897 = vpop.permute.xlu0 %896
    %898 = vrot.lane.b32.xlu0 %v877, 17
    %v899 = vpop.permute.xlu0 %898
    %900 = vrot.lane.b32.xlu0 %v881, 17
    %v901 = vpop.permute.xlu0 %900
    %902 = vrot.lane.b32.xlu0 %v885, 17
    %v903 = vpop.permute.xlu0 %902
    %904 = vrot.lane.b32.xlu0 %v874, 17
    %v905 = vpop.permute.xlu0 %904
    %906 = vrot.lane.b32.xlu0 %v878, 17
    %v907 = vpop.permute.xlu0 %906
    %908 = vrot.lane.b32.xlu0 %v882, 17
    %v909 = vpop.permute.xlu0 %908
    %910 = vrot.lane.b32.xlu0 %v886, 17
    %v911 = vpop.permute.xlu0 %910
    %912 = vrot.lane.b32.xlu0 %v875, 17
    %v913 = vpop.permute.xlu0 %912
    %914 = vrot.lane.b32.xlu0 %v879, 17
    %v915 = vpop.permute.xlu0 %914
    %916 = vrot.lane.b32.xlu0 %v883, 17
    %v917 = vpop.permute.xlu0 %916
    %918 = vrot.lane.b32.xlu0 %v887, 17
    %v919 = vpop.permute.xlu0 %918
    %v920 = vsel %vm60, %v905, %v913
    %v921 = vsel %vm60, %v907, %v915
    %v922 = vsel %vm60, %v909, %v917
    %v923 = vsel %vm60, %v911, %v919
    %v924 = vsel %vm60, %v897, %v905
    %v925 = vsel %vm60, %v899, %v907
    %v926 = vsel %vm60, %v901, %v909
    %v927 = vsel %vm60, %v903, %v911
    %v928 = vsel %vm60, %v889, %v897
    %v929 = vsel %vm60, %v891, %v899
    %v930 = vsel %vm60, %v893, %v901
    %v931 = vsel %vm60, %v895, %v903
    %v932 = vsel %vm60, %v913, %v889
    %v933 = vsel %vm60, %v915, %v891
    %v934 = vsel %vm60, %v917, %v893
    %v935 = vsel %vm60, %v919, %v895
    %v936 = vsel %vm97, %v932, 0.0
    %v937 = vsel %vm98, %v928, 0.0
    %v938 = vsel %vm99, %v924, 0.0
    %v939 = vsel %vm100, %v920, 0.0
    %v940 = vsel %vm97, %v933, 0.0
    %v941 = vsel %vm98, %v929, 0.0
    %v942 = vsel %vm99, %v925, 0.0
    %v943 = vsel %vm100, %v921, 0.0
    %v944 = vsel %vm97, %v934, 0.0
    %v945 = vsel %vm98, %v930, 0.0
    %v946 = vsel %vm99, %v926, 0.0
    %v947 = vsel %vm100, %v922, 0.0
    %v948 = vsel %vm97, %v935, 0.0
    %v949 = vsel %vm98, %v931, 0.0
    %v950 = vsel %vm99, %v927, 0.0
    %v951 = vsel %vm100, %v923, 0.0
    %952 = vst [vmem:[#allocation3] sm:$0xff] %v936
    %953 = vst [vmem:[#allocation3 + $0x8] sm:$0xff] %v937
    %954 = vst [vmem:[#allocation3 + $0x10] sm:$0xff] %v938
    %955 = vst [vmem:[#allocation3 + $0x18] sm:$0xff] %v939
    %956 = vst [vmem:[#allocation3 + $0x20] sm:$0xff] %v940
    %957 = vst [vmem:[#allocation3 + $0x28] sm:$0xff] %v941
    %958 = vst [vmem:[#allocation3 + $0x30] sm:$0xff] %v942
    %959 = vst [vmem:[#allocation3 + $0x38] sm:$0xff] %v943
    %960 = vst [vmem:[#allocation3 + $0x40] sm:$0xff] %v944
    %961 = vst [vmem:[#allocation3 + $0x48] sm:$0xff] %v945
    %962 = vst [vmem:[#allocation3 + $0x50] sm:$0xff] %v946
    %963 = vst [vmem:[#allocation3 + $0x58] sm:$0xff] %v947
    %964 = vst [vmem:[#allocation3 + $0x60] sm:$0xff] %v948
    %965 = vst [vmem:[#allocation3 + $0x68] sm:$0xff] %v949
    %966 = vst [vmem:[#allocation3 + $0x70] sm:$0xff] %v950
    %967 = vst [vmem:[#allocation3 + $0x78] sm:$0xff] %v951
    %968 = vrot.lane.b32.xlu0 %v872, 16
    %v969 = vpop.permute.xlu0 %968
    %970 = vrot.lane.b32.xlu0 %v876, 16
    %v971 = vpop.permute.xlu0 %970
    %972 = vrot.lane.b32.xlu0 %v880, 16
    %v973 = vpop.permute.xlu0 %972
    %974 = vrot.lane.b32.xlu0 %v884, 16
    %v975 = vpop.permute.xlu0 %974
    %976 = vrot.lane.b32.xlu0 %v873, 16
    %v977 = vpop.permute.xlu0 %976
    %978 = vrot.lane.b32.xlu0 %v877, 16
    %v979 = vpop.permute.xlu0 %978
    %980 = vrot.lane.b32.xlu0 %v881, 16
    %v981 = vpop.permute.xlu0 %980
    %982 = vrot.lane.b32.xlu0 %v885, 16
    %v983 = vpop.permute.xlu0 %982
    %984 = vrot.lane.b32.xlu0 %v874, 16
    %v985 = vpop.permute.xlu0 %984
    %986 = vrot.lane.b32.xlu0 %v878, 16
    %v987 = vpop.permute.xlu0 %986
    %988 = vrot.lane.b32.xlu0 %v882, 16
    %v989 = vpop.permute.xlu0 %988
    %990 = vrot.lane.b32.xlu0 %v886, 16
    %v991 = vpop.permute.xlu0 %990
    %992 = vrot.lane.b32.xlu0 %v875, 16
    %v993 = vpop.permute.xlu0 %992
    %994 = vrot.lane.b32.xlu0 %v879, 16
    %v995 = vpop.permute.xlu0 %994
    %996 = vrot.lane.b32.xlu0 %v883, 16
    %v997 = vpop.permute.xlu0 %996
    %998 = vrot.lane.b32.xlu0 %v887, 16
    %v999 = vpop.permute.xlu0 %998
    %v1000 = vsel %vm117, %v985, %v993
    %v1001 = vsel %vm117, %v987, %v995
    %v1002 = vsel %vm117, %v989, %v997
    %v1003 = vsel %vm117, %v991, %v999
    %v1004 = vsel %vm117, %v977, %v985
    %v1005 = vsel %vm117, %v979, %v987
    %v1006 = vsel %vm117, %v981, %v989
    %v1007 = vsel %vm117, %v983, %v991
    %v1008 = vsel %vm117, %v969, %v977
    %v1009 = vsel %vm117, %v971, %v979
    %v1010 = vsel %vm117, %v973, %v981
    %v1011 = vsel %vm117, %v975, %v983
    %v1012 = vsel %vm117, %v993, %v969
    %v1013 = vsel %vm117, %v995, %v971
    %v1014 = vsel %vm117, %v997, %v973
    %v1015 = vsel %vm117, %v999, %v975
    %v1016 = vsel %vm146, %v1012, 0.0
    %v1017 = vsel %vm147, %v1008, 0.0
    %v1018 = vsel %vm148, %v1004, 0.0
    %v1019 = vsel %vm149, %v1000, 0.0
    %v1020 = vsel %vm146, %v1013, 0.0
    %v1021 = vsel %vm147, %v1009, 0.0
    %v1022 = vsel %vm148, %v1005, 0.0
    %v1023 = vsel %vm149, %v1001, 0.0
    %v1024 = vsel %vm146, %v1014, 0.0
    %v1025 = vsel %vm147, %v1010, 0.0
    %v1026 = vsel %vm148, %v1006, 0.0
    %v1027 = vsel %vm149, %v1002, 0.0
    %v1028 = vsel %vm146, %v1015, 0.0
    %v1029 = vsel %vm147, %v1011, 0.0
    %v1030 = vsel %vm148, %v1007, 0.0
    %v1031 = vsel %vm149, %v1003, 0.0
    %1032 = vst [vmem:[#allocation3 + $0x80] sm:$0xff] %v1016
    %1033 = vst [vmem:[#allocation3 + $0x88] sm:$0xff] %v1017
    %1034 = vst [vmem:[#allocation3 + $0x90] sm:$0xff] %v1018
    %1035 = vst [vmem:[#allocation3 + $0x98] sm:$0xff] %v1019
    %1036 = vst [vmem:[#allocation3 + $0xa0] sm:$0xff] %v1020
    %1037 = vst [vmem:[#allocation3 + $0xa8] sm:$0xff] %v1021
    %1038 = vst [vmem:[#allocation3 + $0xb0] sm:$0xff] %v1022
    %1039 = vst [vmem:[#allocation3 + $0xb8] sm:$0xff] %v1023
    %1040 = vst [vmem:[#allocation3 + $0xc0] sm:$0xff] %v1024
    %1041 = vst [vmem:[#allocation3 + $0xc8] sm:$0xff] %v1025
    %1042 = vst [vmem:[#allocation3 + $0xd0] sm:$0xff] %v1026
    %1043 = vst [vmem:[#allocation3 + $0xd8] sm:$0xff] %v1027
    %1044 = vst [vmem:[#allocation3 + $0xe0] sm:$0xff] %v1028
    %1045 = vst [vmem:[#allocation3 + $0xe8] sm:$0xff] %v1029
    %1046 = vst [vmem:[#allocation3 + $0xf0] sm:$0xff] %v1030
    %1047 = vst [vmem:[#allocation3 + $0xf8] sm:$0xff] %v1031
    %1048 = vrot.lane.b32.xlu0 %v872, 15
    %v1049 = vpop.permute.xlu0 %1048
    %1050 = vrot.lane.b32.xlu0 %v876, 15
    %v1051 = vpop.permute.xlu0 %1050
    %1052 = vrot.lane.b32.xlu0 %v880, 15
    %v1053 = vpop.permute.xlu0 %1052
    %1054 = vrot.lane.b32.xlu0 %v884, 15
    %v1055 = vpop.permute.xlu0 %1054
    %1056 = vrot.lane.b32.xlu0 %v873, 15
    %v1057 = vpop.permute.xlu0 %1056
    %1058 = vrot.lane.b32.xlu0 %v877, 15
    %v1059 = vpop.permute.xlu0 %1058
    %1060 = vrot.lane.b32.xlu0 %v881, 15
    %v1061 = vpop.permute.xlu0 %1060
    %1062 = vrot.lane.b32.xlu0 %v885, 15
    %v1063 = vpop.permute.xlu0 %1062
    %1064 = vrot.lane.b32.xlu0 %v874, 15
    %v1065 = vpop.permute.xlu0 %1064
    %1066 = vrot.lane.b32.xlu0 %v878, 15
    %v1067 = vpop.permute.xlu0 %1066
    %1068 = vrot.lane.b32.xlu0 %v882, 15
    %v1069 = vpop.permute.xlu0 %1068
    %1070 = vrot.lane.b32.xlu0 %v886, 15
    %v1071 = vpop.permute.xlu0 %1070
    %1072 = vrot.lane.b32.xlu0 %v875, 15
    %v1073 = vpop.permute.xlu0 %1072
    %1074 = vrot.lane.b32.xlu0 %v879, 15
    %v1075 = vpop.permute.xlu0 %1074
    %1076 = vrot.lane.b32.xlu0 %v883, 15
    %v1077 = vpop.permute.xlu0 %1076
    %1078 = vrot.lane.b32.xlu0 %v887, 15
    %v1079 = vpop.permute.xlu0 %1078
    %v1080 = vsel %vm178, %v1065, %v1073
    %v1081 = vsel %vm178, %v1067, %v1075
    %v1082 = vsel %vm178, %v1069, %v1077
    %v1083 = vsel %vm178, %v1071, %v1079
    %v1084 = vsel %vm178, %v1057, %v1065
    %v1085 = vsel %vm178, %v1059, %v1067
    %v1086 = vsel %vm178, %v1061, %v1069
    %v1087 = vsel %vm178, %v1063, %v1071
    %v1088 = vsel %vm178, %v1049, %v1057
    %v1089 = vsel %vm178, %v1051, %v1059
    %v1090 = vsel %vm178, %v1053, %v1061
    %v1091 = vsel %vm178, %v1055, %v1063
    %v1092 = vsel %vm178, %v1073, %v1049
    %v1093 = vsel %vm178, %v1075, %v1051
    %v1094 = vsel %vm178, %v1077, %v1053
    %v1095 = vsel %vm178, %v1079, %v1055
    %v1096 = vsel %vm207, %v1092, 0.0
    %v1097 = vsel %vm208, %v1088, 0.0
    %v1098 = vsel %vm209, %v1084, 0.0
    %v1099 = vsel %vm210, %v1080, 0.0
    %v1100 = vsel %vm207, %v1093, 0.0
    %v1101 = vsel %vm208, %v1089, 0.0
    %v1102 = vsel %vm209, %v1085, 0.0
    %v1103 = vsel %vm210, %v1081, 0.0
    %v1104 = vsel %vm207, %v1094, 0.0
    %v1105 = vsel %vm208, %v1090, 0.0
    %v1106 = vsel %vm209, %v1086, 0.0
    %v1107 = vsel %vm210, %v1082, 0.0
    %v1108 = vsel %vm207, %v1095, 0.0
    %v1109 = vsel %vm208, %v1091, 0.0
    %v1110 = vsel %vm209, %v1087, 0.0
    %v1111 = vsel %vm210, %v1083, 0.0
    %1112 = vst [vmem:[#allocation3 + $0x100] sm:$0xff] %v1096
    %1113 = vst [vmem:[#allocation3 + $0x108] sm:$0xff] %v1097
    %1114 = vst [vmem:[#allocation3 + $0x110] sm:$0xff] %v1098
    %1115 = vst [vmem:[#allocation3 + $0x118] sm:$0xff] %v1099
    %1116 = vst [vmem:[#allocation3 + $0x120] sm:$0xff] %v1100
    %1117 = vst [vmem:[#allocation3 + $0x128] sm:$0xff] %v1101
    %1118 = vst [vmem:[#allocation3 + $0x130] sm:$0xff] %v1102
    %1119 = vst [vmem:[#allocation3 + $0x138] sm:$0xff] %v1103
    %1120 = vst [vmem:[#allocation3 + $0x140] sm:$0xff] %v1104
    %1121 = vst [vmem:[#allocation3 + $0x148] sm:$0xff] %v1105
    %1122 = vst [vmem:[#allocation3 + $0x150] sm:$0xff] %v1106
    %1123 = vst [vmem:[#allocation3 + $0x158] sm:$0xff] %v1107
    %1124 = vst [vmem:[#allocation3 + $0x160] sm:$0xff] %v1108
    %1125 = vst [vmem:[#allocation3 + $0x168] sm:$0xff] %v1109
    %1126 = vst [vmem:[#allocation3 + $0x170] sm:$0xff] %v1110
    %1127 = vst [vmem:[#allocation3 + $0x178] sm:$0xff] %v1111
    %1128 = vrot.lane.b32.xlu0 %v872, 1
    %v1129 = vpop.permute.xlu0 %1128
    %1130 = vrot.lane.b32.xlu0 %v876, 1
    %v1131 = vpop.permute.xlu0 %1130
    %1132 = vrot.lane.b32.xlu0 %v880, 1
    %v1133 = vpop.permute.xlu0 %1132
    %1134 = vrot.lane.b32.xlu0 %v884, 1
    %v1135 = vpop.permute.xlu0 %1134
    %1136 = vrot.lane.b32.xlu0 %v873, 1
    %v1137 = vpop.permute.xlu0 %1136
    %1138 = vrot.lane.b32.xlu0 %v877, 1
    %v1139 = vpop.permute.xlu0 %1138
    %1140 = vrot.lane.b32.xlu0 %v881, 1
    %v1141 = vpop.permute.xlu0 %1140
    %1142 = vrot.lane.b32.xlu0 %v885, 1
    %v1143 = vpop.permute.xlu0 %1142
    %1144 = vrot.lane.b32.xlu0 %v874, 1
    %v1145 = vpop.permute.xlu0 %1144
    %1146 = vrot.lane.b32.xlu0 %v878, 1
    %v1147 = vpop.permute.xlu0 %1146
    %1148 = vrot.lane.b32.xlu0 %v882, 1
    %v1149 = vpop.permute.xlu0 %1148
    %1150 = vrot.lane.b32.xlu0 %v886, 1
    %v1151 = vpop.permute.xlu0 %1150
    %1152 = vrot.lane.b32.xlu0 %v875, 1
    %v1153 = vpop.permute.xlu0 %1152
    %1154 = vrot.lane.b32.xlu0 %v879, 1
    %v1155 = vpop.permute.xlu0 %1154
    %1156 = vrot.lane.b32.xlu0 %v883, 1
    %v1157 = vpop.permute.xlu0 %1156
    %1158 = vrot.lane.b32.xlu0 %v887, 1
    %v1159 = vpop.permute.xlu0 %1158
    %v1160 = vsel %vm227, %v1145, %v1153
    %v1161 = vsel %vm227, %v1147, %v1155
    %v1162 = vsel %vm227, %v1149, %v1157
    %v1163 = vsel %vm227, %v1151, %v1159
    %v1164 = vsel %vm227, %v1137, %v1145
    %v1165 = vsel %vm227, %v1139, %v1147
    %v1166 = vsel %vm227, %v1141, %v1149
    %v1167 = vsel %vm227, %v1143, %v1151
    %v1168 = vsel %vm227, %v1129, %v1137
    %v1169 = vsel %vm227, %v1131, %v1139
    %v1170 = vsel %vm227, %v1133, %v1141
    %v1171 = vsel %vm227, %v1135, %v1143
    %v1172 = vsel %vm227, %v1153, %v1129
    %v1173 = vsel %vm227, %v1155, %v1131
    %v1174 = vsel %vm227, %v1157, %v1133
    %v1175 = vsel %vm227, %v1159, %v1135
    %v1176 = vsel %vm252, %v1172, 0.0
    %v1177 = vsel %vm253, %v1168, 0.0
    %v1178 = vsel %vm254, %v1164, 0.0
    %v1179 = vsel %vm255, %v1160, 0.0
    %v1180 = vsel %vm252, %v1173, 0.0
    %v1181 = vsel %vm253, %v1169, 0.0
    %v1182 = vsel %vm254, %v1165, 0.0
    %v1183 = vsel %vm255, %v1161, 0.0
    %v1184 = vsel %vm252, %v1174, 0.0
    %v1185 = vsel %vm253, %v1170, 0.0
    %v1186 = vsel %vm254, %v1166, 0.0
    %v1187 = vsel %vm255, %v1162, 0.0
    %v1188 = vsel %vm252, %v1175, 0.0
    %v1189 = vsel %vm253, %v1171, 0.0
    %v1190 = vsel %vm254, %v1167, 0.0
    %v1191 = vsel %vm255, %v1163, 0.0
    %1192 = vst [vmem:[#allocation3 + $0x180] sm:$0xff] %v1176
    %1193 = vst [vmem:[#allocation3 + $0x188] sm:$0xff] %v1177
    %1194 = vst [vmem:[#allocation3 + $0x190] sm:$0xff] %v1178
    %1195 = vst [vmem:[#allocation3 + $0x198] sm:$0xff] %v1179
    %1196 = vst [vmem:[#allocation3 + $0x1a0] sm:$0xff] %v1180
    %1197 = vst [vmem:[#allocation3 + $0x1a8] sm:$0xff] %v1181
    %1198 = vst [vmem:[#allocation3 + $0x1b0] sm:$0xff] %v1182
    %1199 = vst [vmem:[#allocation3 + $0x1b8] sm:$0xff] %v1183
    %1200 = vst [vmem:[#allocation3 + $0x1c0] sm:$0xff] %v1184
    %1201 = vst [vmem:[#allocation3 + $0x1c8] sm:$0xff] %v1185
    %1202 = vst [vmem:[#allocation3 + $0x1d0] sm:$0xff] %v1186
    %1203 = vst [vmem:[#allocation3 + $0x1d8] sm:$0xff] %v1187
    %1204 = vst [vmem:[#allocation3 + $0x1e0] sm:$0xff] %v1188
    %1205 = vst [vmem:[#allocation3 + $0x1e8] sm:$0xff] %v1189
    %1206 = vst [vmem:[#allocation3 + $0x1f0] sm:$0xff] %v1190
    %1207 = vst [vmem:[#allocation3 + $0x1f8] sm:$0xff] %v1191
    %1208 = vst [vmem:[#allocation3 + $0x200] sm:$0xff] %v872
    %1209 = vst [vmem:[#allocation3 + $0x208] sm:$0xff] %v873
    %1210 = vst [vmem:[#allocation3 + $0x210] sm:$0xff] %v874
    %1211 = vst [vmem:[#allocation3 + $0x218] sm:$0xff] %v875
    %1212 = vst [vmem:[#allocation3 + $0x220] sm:$0xff] %v876
    %1213 = vst [vmem:[#allocation3 + $0x228] sm:$0xff] %v877
    %1214 = vst [vmem:[#allocation3 + $0x230] sm:$0xff] %v878
    %1215 = vst [vmem:[#allocation3 + $0x238] sm:$0xff] %v879
    %1216 = vst [vmem:[#allocation3 + $0x240] sm:$0xff] %v880
    %1217 = vst [vmem:[#allocation3 + $0x248] sm:$0xff] %v881
    %1218 = vst [vmem:[#allocation3 + $0x250] sm:$0xff] %v882
    %1219 = vst [vmem:[#allocation3 + $0x258] sm:$0xff] %v883
    %1220 = vst [vmem:[#allocation3 + $0x260] sm:$0xff] %v884
    %1221 = vst [vmem:[#allocation3 + $0x268] sm:$0xff] %v885
    %1222 = vst [vmem:[#allocation3 + $0x270] sm:$0xff] %v886
    %1223 = vst [vmem:[#allocation3 + $0x278] sm:$0xff] %v887
    %1224 = vrot.lane.b32.xlu0 %v872, 127
    %v1225 = vpop.permute.xlu0 %1224
    %1226 = vrot.lane.b32.xlu0 %v876, 127
    %v1227 = vpop.permute.xlu0 %1226
    %1228 = vrot.lane.b32.xlu0 %v880, 127
    %v1229 = vpop.permute.xlu0 %1228
    %1230 = vrot.lane.b32.xlu0 %v884, 127
    %v1231 = vpop.permute.xlu0 %1230
    %1232 = vrot.lane.b32.xlu0 %v873, 127
    %v1233 = vpop.permute.xlu0 %1232
    %1234 = vrot.lane.b32.xlu0 %v877, 127
    %v1235 = vpop.permute.xlu0 %1234
    %1236 = vrot.lane.b32.xlu0 %v881, 127
    %v1237 = vpop.permute.xlu0 %1236
    %1238 = vrot.lane.b32.xlu0 %v885, 127
    %v1239 = vpop.permute.xlu0 %1238
    %1240 = vrot.lane.b32.xlu0 %v874, 127
    %v1241 = vpop.permute.xlu0 %1240
    %1242 = vrot.lane.b32.xlu0 %v878, 127
    %v1243 = vpop.permute.xlu0 %1242
    %1244 = vrot.lane.b32.xlu0 %v882, 127
    %v1245 = vpop.permute.xlu0 %1244
    %1246 = vrot.lane.b32.xlu0 %v886, 127
    %v1247 = vpop.permute.xlu0 %1246
    %1248 = vrot.lane.b32.xlu0 %v875, 127
    %v1249 = vpop.permute.xlu0 %1248
    %1250 = vrot.lane.b32.xlu0 %v879, 127
    %v1251 = vpop.permute.xlu0 %1250
    %1252 = vrot.lane.b32.xlu0 %v883, 127
    %v1253 = vpop.permute.xlu0 %1252
    %1254 = vrot.lane.b32.xlu0 %v887, 127
    %v1255 = vpop.permute.xlu0 %1254
    %v1256 = vsel %vm288, %v1241, %v1249
    %v1257 = vsel %vm288, %v1243, %v1251
    %v1258 = vsel %vm288, %v1245, %v1253
    %v1259 = vsel %vm288, %v1247, %v1255
    %v1260 = vsel %vm288, %v1233, %v1241
    %v1261 = vsel %vm288, %v1235, %v1243
    %v1262 = vsel %vm288, %v1237, %v1245
    %v1263 = vsel %vm288, %v1239, %v1247
    %v1264 = vsel %vm288, %v1225, %v1233
    %v1265 = vsel %vm288, %v1227, %v1235
    %v1266 = vsel %vm288, %v1229, %v1237
    %v1267 = vsel %vm288, %v1231, %v1239
    %v1268 = vsel %vm288, %v1249, %v1225
    %v1269 = vsel %vm288, %v1251, %v1227
    %v1270 = vsel %vm288, %v1253, %v1229
    %v1271 = vsel %vm288, %v1255, %v1231
    %v1272 = vsel %vm305, %v1264, 0.0
    %v1273 = vsel %vm306, %v1260, 0.0
    %v1274 = vsel %vm307, %v1256, 0.0
    %v1275 = vsel %vm308, %v1268, 0.0
    %v1276 = vsel %vm305, %v1265, 0.0
    %v1277 = vsel %vm306, %v1261, 0.0
    %v1278 = vsel %vm307, %v1257, 0.0
    %v1279 = vsel %vm308, %v1269, 0.0
    %v1280 = vsel %vm305, %v1266, 0.0
    %v1281 = vsel %vm306, %v1262, 0.0
    %v1282 = vsel %vm307, %v1258, 0.0
    %v1283 = vsel %vm308, %v1270, 0.0
    %v1284 = vsel %vm305, %v1267, 0.0
    %v1285 = vsel %vm306, %v1263, 0.0
    %v1286 = vsel %vm307, %v1259, 0.0
    %v1287 = vsel %vm308, %v1271, 0.0
    %1288 = vst [vmem:[#allocation3 + $0x280] sm:$0xff] %v1272
    %1289 = vst [vmem:[#allocation3 + $0x288] sm:$0xff] %v1273
    %1290 = vst [vmem:[#allocation3 + $0x290] sm:$0xff] %v1274
    %1291 = vst [vmem:[#allocation3 + $0x298] sm:$0xff] %v1275
    %1292 = vst [vmem:[#allocation3 + $0x2a0] sm:$0xff] %v1276
    %1293 = vst [vmem:[#allocation3 + $0x2a8] sm:$0xff] %v1277
    %1294 = vst [vmem:[#allocation3 + $0x2b0] sm:$0xff] %v1278
    %1295 = vst [vmem:[#allocation3 + $0x2b8] sm:$0xff] %v1279
    %1296 = vst [vmem:[#allocation3 + $0x2c0] sm:$0xff] %v1280
    %1297 = vst [vmem:[#allocation3 + $0x2c8] sm:$0xff] %v1281
    %1298 = vst [vmem:[#allocation3 + $0x2d0] sm:$0xff] %v1282
    %1299 = vst [vmem:[#allocation3 + $0x2d8] sm:$0xff] %v1283
    %1300 = vst [vmem:[#allocation3 + $0x2e0] sm:$0xff] %v1284
    %1301 = vst [vmem:[#allocation3 + $0x2e8] sm:$0xff] %v1285
    %1302 = vst [vmem:[#allocation3 + $0x2f0] sm:$0xff] %v1286
    %1303 = vst [vmem:[#allocation3 + $0x2f8] sm:$0xff] %v1287
    %1304 = vrot.lane.b32.xlu0 %v872, 113
    %v1305 = vpop.permute.xlu0 %1304
    %1306 = vrot.lane.b32.xlu0 %v876, 113
    %v1307 = vpop.permute.xlu0 %1306
    %1308 = vrot.lane.b32.xlu0 %v880, 113
    %v1309 = vpop.permute.xlu0 %1308
    %1310 = vrot.lane.b32.xlu0 %v884, 113
    %v1311 = vpop.permute.xlu0 %1310
    %1312 = vrot.lane.b32.xlu0 %v873, 113
    %v1313 = vpop.permute.xlu0 %1312
    %1314 = vrot.lane.b32.xlu0 %v877, 113
    %v1315 = vpop.permute.xlu0 %1314
    %1316 = vrot.lane.b32.xlu0 %v881, 113
    %v1317 = vpop.permute.xlu0 %1316
    %1318 = vrot.lane.b32.xlu0 %v885, 113
    %v1319 = vpop.permute.xlu0 %1318
    %1320 = vrot.lane.b32.xlu0 %v874, 113
    %v1321 = vpop.permute.xlu0 %1320
    %1322 = vrot.lane.b32.xlu0 %v878, 113
    %v1323 = vpop.permute.xlu0 %1322
    %1324 = vrot.lane.b32.xlu0 %v882, 113
    %v1325 = vpop.permute.xlu0 %1324
    %1326 = vrot.lane.b32.xlu0 %v886, 113
    %v1327 = vpop.permute.xlu0 %1326
    %1328 = vrot.lane.b32.xlu0 %v875, 113
    %v1329 = vpop.permute.xlu0 %1328
    %1330 = vrot.lane.b32.xlu0 %v879, 113
    %v1331 = vpop.permute.xlu0 %1330
    %1332 = vrot.lane.b32.xlu0 %v883, 113
    %v1333 = vpop.permute.xlu0 %1332
    %1334 = vrot.lane.b32.xlu0 %v887, 113
    %v1335 = vpop.permute.xlu0 %1334
    %v1336 = vsel %vm337, %v1321, %v1329
    %v1337 = vsel %vm337, %v1323, %v1331
    %v1338 = vsel %vm337, %v1325, %v1333
    %v1339 = vsel %vm337, %v1327, %v1335
    %v1340 = vsel %vm337, %v1313, %v1321
    %v1341 = vsel %vm337, %v1315, %v1323
    %v1342 = vsel %vm337, %v1317, %v1325
    %v1343 = vsel %vm337, %v1319, %v1327
    %v1344 = vsel %vm337, %v1305, %v1313
    %v1345 = vsel %vm337, %v1307, %v1315
    %v1346 = vsel %vm337, %v1309, %v1317
    %v1347 = vsel %vm337, %v1311, %v1319
    %v1348 = vsel %vm337, %v1329, %v1305
    %v1349 = vsel %vm337, %v1331, %v1307
    %v1350 = vsel %vm337, %v1333, %v1309
    %v1351 = vsel %vm337, %v1335, %v1311
    %v1352 = vsel %vm362, %v1344, 0.0
    %v1353 = vsel %vm363, %v1340, 0.0
    %v1354 = vsel %vm364, %v1336, 0.0
    %v1355 = vsel %vm365, %v1348, 0.0
    %v1356 = vsel %vm362, %v1345, 0.0
    %v1357 = vsel %vm363, %v1341, 0.0
    %v1358 = vsel %vm364, %v1337, 0.0
    %v1359 = vsel %vm365, %v1349, 0.0
    %v1360 = vsel %vm362, %v1346, 0.0
    %v1361 = vsel %vm363, %v1342, 0.0
    %v1362 = vsel %vm364, %v1338, 0.0
    %v1363 = vsel %vm365, %v1350, 0.0
    %v1364 = vsel %vm362, %v1347, 0.0
    %v1365 = vsel %vm363, %v1343, 0.0
    %v1366 = vsel %vm364, %v1339, 0.0
    %v1367 = vsel %vm365, %v1351, 0.0
    %1368 = vst [vmem:[#allocation3 + $0x300] sm:$0xff] %v1352
    %1369 = vst [vmem:[#allocation3 + $0x308] sm:$0xff] %v1353
    %1370 = vst [vmem:[#allocation3 + $0x310] sm:$0xff] %v1354
    %1371 = vst [vmem:[#allocation3 + $0x318] sm:$0xff] %v1355
    %1372 = vst [vmem:[#allocation3 + $0x320] sm:$0xff] %v1356
    %1373 = vst [vmem:[#allocation3 + $0x328] sm:$0xff] %v1357
    %1374 = vst [vmem:[#allocation3 + $0x330] sm:$0xff] %v1358
    %1375 = vst [vmem:[#allocation3 + $0x338] sm:$0xff] %v1359
    %1376 = vst [vmem:[#allocation3 + $0x340] sm:$0xff] %v1360
    %1377 = vst [vmem:[#allocation3 + $0x348] sm:$0xff] %v1361
    %1378 = vst [vmem:[#allocation3 + $0x350] sm:$0xff] %v1362
    %1379 = vst [vmem:[#allocation3 + $0x358] sm:$0xff] %v1363
    %1380 = vst [vmem:[#allocation3 + $0x360] sm:$0xff] %v1364
    %1381 = vst [vmem:[#allocation3 + $0x368] sm:$0xff] %v1365
    %1382 = vst [vmem:[#allocation3 + $0x370] sm:$0xff] %v1366
    %1383 = vst [vmem:[#allocation3 + $0x378] sm:$0xff] %v1367
    %1384 = vrot.lane.b32.xlu0 %v872, 112
    %v1385 = vpop.permute.xlu0 %1384
    %1386 = vrot.lane.b32.xlu0 %v876, 112
    %v1387 = vpop.permute.xlu0 %1386
    %1388 = vrot.lane.b32.xlu0 %v880, 112
    %v1389 = vpop.permute.xlu0 %1388
    %1390 = vrot.lane.b32.xlu0 %v884, 112
    %v1391 = vpop.permute.xlu0 %1390
    %1392 = vrot.lane.b32.xlu0 %v873, 112
    %v1393 = vpop.permute.xlu0 %1392
    %1394 = vrot.lane.b32.xlu0 %v877, 112
    %v1395 = vpop.permute.xlu0 %1394
    %1396 = vrot.lane.b32.xlu0 %v881, 112
    %v1397 = vpop.permute.xlu0 %1396
    %1398 = vrot.lane.b32.xlu0 %v885, 112
    %v1399 = vpop.permute.xlu0 %1398
    %1400 = vrot.lane.b32.xlu0 %v874, 112
    %v1401 = vpop.permute.xlu0 %1400
    %1402 = vrot.lane.b32.xlu0 %v878, 112
    %v1403 = vpop.permute.xlu0 %1402
    %1404 = vrot.lane.b32.xlu0 %v882, 112
    %v1405 = vpop.permute.xlu0 %1404
    %1406 = vrot.lane.b32.xlu0 %v886, 112
    %v1407 = vpop.permute.xlu0 %1406
    %1408 = vrot.lane.b32.xlu0 %v875, 112
    %v1409 = vpop.permute.xlu0 %1408
    %1410 = vrot.lane.b32.xlu0 %v879, 112
    %v1411 = vpop.permute.xlu0 %1410
    %1412 = vrot.lane.b32.xlu0 %v883, 112
    %v1413 = vpop.permute.xlu0 %1412
    %1414 = vrot.lane.b32.xlu0 %v887, 112
    %v1415 = vpop.permute.xlu0 %1414
    %v1416 = vsel %vm382, %v1401, %v1409
    %v1417 = vsel %vm382, %v1403, %v1411
    %v1418 = vsel %vm382, %v1405, %v1413
    %v1419 = vsel %vm382, %v1407, %v1415
    %v1420 = vsel %vm382, %v1393, %v1401
    %v1421 = vsel %vm382, %v1395, %v1403
    %v1422 = vsel %vm382, %v1397, %v1405
    %v1423 = vsel %vm382, %v1399, %v1407
    %v1424 = vsel %vm382, %v1385, %v1393
    %v1425 = vsel %vm382, %v1387, %v1395
    %v1426 = vsel %vm382, %v1389, %v1397
    %v1427 = vsel %vm382, %v1391, %v1399
    %v1428 = vsel %vm382, %v1409, %v1385
    %v1429 = vsel %vm382, %v1411, %v1387
    %v1430 = vsel %vm382, %v1413, %v1389
    %v1431 = vsel %vm382, %v1415, %v1391
    %v1432 = vsel %vm399, %v1424, 0.0
    %v1433 = vsel %vm400, %v1420, 0.0
    %v1434 = vsel %vm401, %v1416, 0.0
    %v1435 = vsel %vm402, %v1428, 0.0
    %v1436 = vsel %vm399, %v1425, 0.0
    %v1437 = vsel %vm400, %v1421, 0.0
    %v1438 = vsel %vm401, %v1417, 0.0
    %v1439 = vsel %vm402, %v1429, 0.0
    %v1440 = vsel %vm399, %v1426, 0.0
    %v1441 = vsel %vm400, %v1422, 0.0
    %v1442 = vsel %vm401, %v1418, 0.0
    %v1443 = vsel %vm402, %v1430, 0.0
    %v1444 = vsel %vm399, %v1427, 0.0
    %v1445 = vsel %vm400, %v1423, 0.0
    %v1446 = vsel %vm401, %v1419, 0.0
    %v1447 = vsel %vm402, %v1431, 0.0
    %1448 = vst [vmem:[#allocation3 + $0x380] sm:$0xff] %v1432
    %1449 = vst [vmem:[#allocation3 + $0x388] sm:$0xff] %v1433
    %1450 = vst [vmem:[#allocation3 + $0x390] sm:$0xff] %v1434
    %1451 = vst [vmem:[#allocation3 + $0x398] sm:$0xff] %v1435
    %1452 = vst [vmem:[#allocation3 + $0x3a0] sm:$0xff] %v1436
    %1453 = vst [vmem:[#allocation3 + $0x3a8] sm:$0xff] %v1437
    %1454 = vst [vmem:[#allocation3 + $0x3b0] sm:$0xff] %v1438
    %1455 = vst [vmem:[#allocation3 + $0x3b8] sm:$0xff] %v1439
    %1456 = vst [vmem:[#allocation3 + $0x3c0] sm:$0xff] %v1440
    %1457 = vst [vmem:[#allocation3 + $0x3c8] sm:$0xff] %v1441
    %1458 = vst [vmem:[#allocation3 + $0x3d0] sm:$0xff] %v1442
    %1459 = vst [vmem:[#allocation3 + $0x3d8] sm:$0xff] %v1443
    %1460 = vst [vmem:[#allocation3 + $0x3e0] sm:$0xff] %v1444
    %1461 = vst [vmem:[#allocation3 + $0x3e8] sm:$0xff] %v1445
    %1462 = vst [vmem:[#allocation3 + $0x3f0] sm:$0xff] %v1446
    %1463 = vst [vmem:[#allocation3 + $0x3f8] sm:$0xff] %v1447
    %1464 = vrot.lane.b32.xlu0 %v872, 111
    %v1465 = vpop.permute.xlu0 %1464
    %1466 = vrot.lane.b32.xlu0 %v876, 111
    %v1467 = vpop.permute.xlu0 %1466
    %1468 = vrot.lane.b32.xlu0 %v880, 111
    %v1469 = vpop.permute.xlu0 %1468
    %1470 = vrot.lane.b32.xlu0 %v884, 111
    %v1471 = vpop.permute.xlu0 %1470
    %1472 = vrot.lane.b32.xlu0 %v873, 111
    %v1473 = vpop.permute.xlu0 %1472
    %1474 = vrot.lane.b32.xlu0 %v877, 111
    %v1475 = vpop.permute.xlu0 %1474
    %1476 = vrot.lane.b32.xlu0 %v881, 111
    %v1477 = vpop.permute.xlu0 %1476
    %1478 = vrot.lane.b32.xlu0 %v885, 111
    %v1479 = vpop.permute.xlu0 %1478
    %1480 = vrot.lane.b32.xlu0 %v874, 111
    %v1481 = vpop.permute.xlu0 %1480
    %1482 = vrot.lane.b32.xlu0 %v878, 111
    %v1483 = vpop.permute.xlu0 %1482
    %1484 = vrot.lane.b32.xlu0 %v882, 111
    %v1485 = vpop.permute.xlu0 %1484
    %1486 = vrot.lane.b32.xlu0 %v886, 111
    %v1487 = vpop.permute.xlu0 %1486
    %1488 = vrot.lane.b32.xlu0 %v875, 111
    %v1489 = vpop.permute.xlu0 %1488
    %1490 = vrot.lane.b32.xlu0 %v879, 111
    %v1491 = vpop.permute.xlu0 %1490
    %1492 = vrot.lane.b32.xlu0 %v883, 111
    %v1493 = vpop.permute.xlu0 %1492
    %1494 = vrot.lane.b32.xlu0 %v887, 111
    %v1495 = vpop.permute.xlu0 %1494
    %v1496 = vsel %vm431, %v1481, %v1489
    %v1497 = vsel %vm431, %v1483, %v1491
    %v1498 = vsel %vm431, %v1485, %v1493
    %v1499 = vsel %vm431, %v1487, %v1495
    %v1500 = vsel %vm431, %v1473, %v1481
    %v1501 = vsel %vm431, %v1475, %v1483
    %v1502 = vsel %vm431, %v1477, %v1485
    %v1503 = vsel %vm431, %v1479, %v1487
    %v1504 = vsel %vm431, %v1465, %v1473
    %v1505 = vsel %vm431, %v1467, %v1475
    %v1506 = vsel %vm431, %v1469, %v1477
    %v1507 = vsel %vm431, %v1471, %v1479
    %v1508 = vsel %vm431, %v1489, %v1465
    %v1509 = vsel %vm431, %v1491, %v1467
    %v1510 = vsel %vm431, %v1493, %v1469
    %v1511 = vsel %vm431, %v1495, %v1471
    %v1512 = vsel %vm448, %v1504, 0.0
    %v1513 = vsel %vm449, %v1500, 0.0
    %v1514 = vsel %vm450, %v1496, 0.0
    %v1515 = vsel %vm451, %v1508, 0.0
    %v1516 = vsel %vm448, %v1505, 0.0
    %v1517 = vsel %vm449, %v1501, 0.0
    %v1518 = vsel %vm450, %v1497, 0.0
    %v1519 = vsel %vm451, %v1509, 0.0
    %v1520 = vsel %vm448, %v1506, 0.0
    %v1521 = vsel %vm449, %v1502, 0.0
    %v1522 = vsel %vm450, %v1498, 0.0
    %v1523 = vsel %vm451, %v1510, 0.0
    %v1524 = vsel %vm448, %v1507, 0.0
    %v1525 = vsel %vm449, %v1503, 0.0
    %v1526 = vsel %vm450, %v1499, 0.0
    %v1527 = vsel %vm451, %v1511, 0.0
    %1528 = vst [vmem:[#allocation3 + $0x400] sm:$0xff] %v1512
    %1529 = vst [vmem:[#allocation3 + $0x408] sm:$0xff] %v1513
    %1530 = vst [vmem:[#allocation3 + $0x410] sm:$0xff] %v1514
    %1531 = vst [vmem:[#allocation3 + $0x418] sm:$0xff] %v1515
    %1532 = vst [vmem:[#allocation3 + $0x420] sm:$0xff] %v1516
    %1533 = vst [vmem:[#allocation3 + $0x428] sm:$0xff] %v1517
    %1534 = vst [vmem:[#allocation3 + $0x430] sm:$0xff] %v1518
    %1535 = vst [vmem:[#allocation3 + $0x438] sm:$0xff] %v1519
    %1536 = vst [vmem:[#allocation3 + $0x440] sm:$0xff] %v1520
    %1537 = vst [vmem:[#allocation3 + $0x448] sm:$0xff] %v1521
    %1538 = vst [vmem:[#allocation3 + $0x450] sm:$0xff] %v1522
    %1539 = vst [vmem:[#allocation3 + $0x458] sm:$0xff] %v1523
    %1540 = vst [vmem:[#allocation3 + $0x460] sm:$0xff] %v1524
    %1541 = vst [vmem:[#allocation3 + $0x468] sm:$0xff] %v1525
    %1542 = vst [vmem:[#allocation3 + $0x470] sm:$0xff] %v1526
    %1543 = vst [vmem:[#allocation3 + $0x478] sm:$0xff] %v1527
    %v1544 = vld [vmem:[%s4] sm:$0xff]
    %v1545 = vld [vmem:[%s4 + $0x8] sm:$0xff]
    %v1546 = vld [vmem:[%s4 + $0x10] sm:$0xff]
    %v1547 = vld [vmem:[%s4 + $0x18] sm:$0xff]
    %v1548 = vld [vmem:[%s4 + $0x20] sm:$0xff]
    %v1549 = vld [vmem:[%s4 + $0x28] sm:$0xff]
    %v1550 = vld [vmem:[%s4 + $0x30] sm:$0xff]
    %v1551 = vld [vmem:[%s4 + $0x38] sm:$0xff]
    %v1552 = vld [vmem:[%s4 + $0x40] sm:$0xff]
    %v1553 = vld [vmem:[%s4 + $0x48] sm:$0xff]
    %v1554 = vld [vmem:[%s4 + $0x50] sm:$0xff]
    %v1555 = vld [vmem:[%s4 + $0x58] sm:$0xff]
    %v1556 = vld [vmem:[#allocation3] sm:$0xff]
    %v1557 = vld [vmem:[#allocation3 + $0x8] sm:$0xff]
    %v1558 = vld [vmem:[#allocation3 + $0x10] sm:$0xff]
    %v1559 = vld [vmem:[#allocation3 + $0x18] sm:$0xff]
    %v1560 = vld [vmem:[#allocation3 + $0x20] sm:$0xff]
    %v1561 = vld [vmem:[#allocation3 + $0x28] sm:$0xff]
    %v1562 = vld [vmem:[#allocation3 + $0x30] sm:$0xff]
    %v1563 = vld [vmem:[#allocation3 + $0x38] sm:$0xff]
    %v1564 = vld [vmem:[#allocation3 + $0x40] sm:$0xff]
    %v1565 = vld [vmem:[#allocation3 + $0x48] sm:$0xff]
    %v1566 = vld [vmem:[#allocation3 + $0x50] sm:$0xff]
    %v1567 = vld [vmem:[#allocation3 + $0x58] sm:$0xff]
    %v1568 = vld [vmem:[#allocation3 + $0x60] sm:$0xff]
    %v1569 = vld [vmem:[#allocation3 + $0x68] sm:$0xff]
    %v1570 = vld [vmem:[#allocation3 + $0x70] sm:$0xff]
    %v1571 = vld [vmem:[#allocation3 + $0x78] sm:$0xff]
    %v1572 = vld [vmem:[#allocation3 + $0x80] sm:$0xff]
    %v1573 = vld [vmem:[#allocation3 + $0x88] sm:$0xff]
    %v1574 = vld [vmem:[#allocation3 + $0x90] sm:$0xff]
    %v1575 = vld [vmem:[#allocation3 + $0x98] sm:$0xff]
    %v1576 = vld [vmem:[#allocation3 + $0xa0] sm:$0xff]
    %v1577 = vld [vmem:[#allocation3 + $0xa8] sm:$0xff]
    %v1578 = vld [vmem:[#allocation3 + $0xb0] sm:$0xff]
    %v1579 = vld [vmem:[#allocation3 + $0xb8] sm:$0xff]
    %v1580 = vld [vmem:[#allocation3 + $0xc0] sm:$0xff]
    %v1581 = vld [vmem:[#allocation3 + $0xc8] sm:$0xff]
    %v1582 = vld [vmem:[#allocation3 + $0xd0] sm:$0xff]
    %v1583 = vld [vmem:[#allocation3 + $0xd8] sm:$0xff]
    %v1584 = vld [vmem:[#allocation3 + $0xe0] sm:$0xff]
    %v1585 = vld [vmem:[#allocation3 + $0xe8] sm:$0xff]
    %v1586 = vld [vmem:[#allocation3 + $0xf0] sm:$0xff]
    %v1587 = vld [vmem:[#allocation3 + $0xf8] sm:$0xff]
    %v1588 = vld [vmem:[#allocation3 + $0x100] sm:$0xff]
    %v1589 = vld [vmem:[#allocation3 + $0x108] sm:$0xff]
    %v1590 = vld [vmem:[#allocation3 + $0x110] sm:$0xff]
    %v1591 = vld [vmem:[#allocation3 + $0x118] sm:$0xff]
    %v1592 = vld [vmem:[#allocation3 + $0x120] sm:$0xff]
    %v1593 = vld [vmem:[#allocation3 + $0x128] sm:$0xff]
    %v1594 = vld [vmem:[#allocation3 + $0x130] sm:$0xff]
    %v1595 = vld [vmem:[#allocation3 + $0x138] sm:$0xff]
    %v1596 = vld [vmem:[#allocation3 + $0x140] sm:$0xff]
    %v1597 = vld [vmem:[#allocation3 + $0x148] sm:$0xff]
    %v1598 = vld [vmem:[#allocation3 + $0x150] sm:$0xff]
    %v1599 = vld [vmem:[#allocation3 + $0x158] sm:$0xff]
    %v1600 = vld [vmem:[#allocation3 + $0x160] sm:$0xff]
    %v1601 = vld [vmem:[#allocation3 + $0x168] sm:$0xff]
    %v1602 = vld [vmem:[#allocation3 + $0x170] sm:$0xff]
    %v1603 = vld [vmem:[#allocation3 + $0x178] sm:$0xff]
    %v1604 = vld [vmem:[#allocation3 + $0x180] sm:$0xff]
    %v1605 = vld [vmem:[#allocation3 + $0x188] sm:$0xff]
    %v1606 = vld [vmem:[#allocation3 + $0x190] sm:$0xff]
    %v1607 = vld [vmem:[#allocation3 + $0x198] sm:$0xff]
    %v1608 = vld [vmem:[#allocation3 + $0x1a0] sm:$0xff]
    %v1609 = vld [vmem:[#allocation3 + $0x1a8] sm:$0xff]
    %v1610 = vld [vmem:[#allocation3 + $0x1b0] sm:$0xff]
    %v1611 = vld [vmem:[#allocation3 + $0x1b8] sm:$0xff]
    %v1612 = vld [vmem:[#allocation3 + $0x1c0] sm:$0xff]
    %v1613 = vld [vmem:[#allocation3 + $0x1c8] sm:$0xff]
    %v1614 = vld [vmem:[#allocation3 + $0x1d0] sm:$0xff]
    %v1615 = vld [vmem:[#allocation3 + $0x1d8] sm:$0xff]
    %v1616 = vld [vmem:[#allocation3 + $0x1e0] sm:$0xff]
    %v1617 = vld [vmem:[#allocation3 + $0x1e8] sm:$0xff]
    %v1618 = vld [vmem:[#allocation3 + $0x1f0] sm:$0xff]
    %v1619 = vld [vmem:[#allocation3 + $0x1f8] sm:$0xff]
    %v1620 = vld [vmem:[#allocation3 + $0x200] sm:$0xff]
    %v1621 = vld [vmem:[#allocation3 + $0x208] sm:$0xff]
    %v1622 = vld [vmem:[#allocation3 + $0x210] sm:$0xff]
    %v1623 = vld [vmem:[#allocation3 + $0x218] sm:$0xff]
    %v1624 = vld [vmem:[#allocation3 + $0x220] sm:$0xff]
    %v1625 = vld [vmem:[#allocation3 + $0x228] sm:$0xff]
    %v1626 = vld [vmem:[#allocation3 + $0x230] sm:$0xff]
    %v1627 = vld [vmem:[#allocation3 + $0x238] sm:$0xff]
    %v1628 = vld [vmem:[#allocation3 + $0x240] sm:$0xff]
    %v1629 = vld [vmem:[#allocation3 + $0x248] sm:$0xff]
    %v1630 = vld [vmem:[#allocation3 + $0x250] sm:$0xff]
    %v1631 = vld [vmem:[#allocation3 + $0x258] sm:$0xff]
    %v1632 = vld [vmem:[#allocation3 + $0x260] sm:$0xff]
    %v1633 = vld [vmem:[#allocation3 + $0x268] sm:$0xff]
    %v1634 = vld [vmem:[#allocation3 + $0x270] sm:$0xff]
    %v1635 = vld [vmem:[#allocation3 + $0x278] sm:$0xff]
    %v1636 = vld [vmem:[#allocation3 + $0x280] sm:$0xff]
    %v1637 = vld [vmem:[#allocation3 + $0x288] sm:$0xff]
    %v1638 = vld [vmem:[#allocation3 + $0x290] sm:$0xff]
    %v1639 = vld [vmem:[#allocation3 + $0x298] sm:$0xff]
    %v1640 = vld [vmem:[#allocation3 + $0x2a0] sm:$0xff]
    %v1641 = vld [vmem:[#allocation3 + $0x2a8] sm:$0xff]
    %v1642 = vld [vmem:[#allocation3 + $0x2b0] sm:$0xff]
    %v1643 = vld [vmem:[#allocation3 + $0x2b8] sm:$0xff]
    %v1644 = vld [vmem:[#allocation3 + $0x2c0] sm:$0xff]
    %v1645 = vld [vmem:[#allocation3 + $0x2c8] sm:$0xff]
    %v1646 = vld [vmem:[#allocation3 + $0x2d0] sm:$0xff]
    %v1647 = vld [vmem:[#allocation3 + $0x2d8] sm:$0xff]
    %v1648 = vld [vmem:[#allocation3 + $0x2e0] sm:$0xff]
    %v1649 = vld [vmem:[#allocation3 + $0x2e8] sm:$0xff]
    %v1650 = vld [vmem:[#allocation3 + $0x2f0] sm:$0xff]
    %v1651 = vld [vmem:[#allocation3 + $0x2f8] sm:$0xff]
    %v1652 = vld [vmem:[#allocation3 + $0x300] sm:$0xff]
    %v1653 = vld [vmem:[#allocation3 + $0x308] sm:$0xff]
    %v1654 = vld [vmem:[#allocation3 + $0x310] sm:$0xff]
    %v1655 = vld [vmem:[#allocation3 + $0x318] sm:$0xff]
    %v1656 = vld [vmem:[#allocation3 + $0x320] sm:$0xff]
    %v1657 = vld [vmem:[#allocation3 + $0x328] sm:$0xff]
    %v1658 = vld [vmem:[#allocation3 + $0x330] sm:$0xff]
    %v1659 = vld [vmem:[#allocation3 + $0x338] sm:$0xff]
    %v1660 = vld [vmem:[#allocation3 + $0x340] sm:$0xff]
    %v1661 = vld [vmem:[#allocation3 + $0x348] sm:$0xff]
    %v1662 = vld [vmem:[#allocation3 + $0x350] sm:$0xff]
    %v1663 = vld [vmem:[#allocation3 + $0x358] sm:$0xff]
    %v1664 = vld [vmem:[#allocation3 + $0x360] sm:$0xff]
    %v1665 = vld [vmem:[#allocation3 + $0x368] sm:$0xff]
    %v1666 = vld [vmem:[#allocation3 + $0x370] sm:$0xff]
    %v1667 = vld [vmem:[#allocation3 + $0x378] sm:$0xff]
    %v1668 = vld [vmem:[#allocation3 + $0x380] sm:$0xff]
    %v1669 = vld [vmem:[#allocation3 + $0x388] sm:$0xff]
    %v1670 = vld [vmem:[#allocation3 + $0x390] sm:$0xff]
    %v1671 = vld [vmem:[#allocation3 + $0x398] sm:$0xff]
    %v1672 = vld [vmem:[#allocation3 + $0x3a0] sm:$0xff]
    %v1673 = vld [vmem:[#allocation3 + $0x3a8] sm:$0xff]
    %v1674 = vld [vmem:[#allocation3 + $0x3b0] sm:$0xff]
    %v1675 = vld [vmem:[#allocation3 + $0x3b8] sm:$0xff]
    %v1676 = vld [vmem:[#allocation3 + $0x3c0] sm:$0xff]
    %v1677 = vld [vmem:[#allocation3 + $0x3c8] sm:$0xff]
    %v1678 = vld [vmem:[#allocation3 + $0x3d0] sm:$0xff]
    %v1679 = vld [vmem:[#allocation3 + $0x3d8] sm:$0xff]
    %v1680 = vld [vmem:[#allocation3 + $0x3e0] sm:$0xff]
    %v1681 = vld [vmem:[#allocation3 + $0x3e8] sm:$0xff]
    %v1682 = vld [vmem:[#allocation3 + $0x3f0] sm:$0xff]
    %v1683 = vld [vmem:[#allocation3 + $0x3f8] sm:$0xff]
    %v1684 = vld [vmem:[#allocation3 + $0x400] sm:$0xff]
    %v1685 = vld [vmem:[#allocation3 + $0x408] sm:$0xff]
    %v1686 = vld [vmem:[#allocation3 + $0x410] sm:$0xff]
    %v1687 = vld [vmem:[#allocation3 + $0x418] sm:$0xff]
    %v1688 = vld [vmem:[#allocation3 + $0x420] sm:$0xff]
    %v1689 = vld [vmem:[#allocation3 + $0x428] sm:$0xff]
    %v1690 = vld [vmem:[#allocation3 + $0x430] sm:$0xff]
    %v1691 = vld [vmem:[#allocation3 + $0x438] sm:$0xff]
    %v1692 = vld [vmem:[#allocation3 + $0x440] sm:$0xff]
    %v1693 = vld [vmem:[#allocation3 + $0x448] sm:$0xff]
    %v1694 = vld [vmem:[#allocation3 + $0x450] sm:$0xff]
    %v1695 = vld [vmem:[#allocation3 + $0x458] sm:$0xff]
    %v1696 = vld [vmem:[#allocation3 + $0x460] sm:$0xff]
    %v1697 = vld [vmem:[#allocation3 + $0x468] sm:$0xff]
    %v1698 = vld [vmem:[#allocation3 + $0x470] sm:$0xff]
    %v1699 = vld [vmem:[#allocation3 + $0x478] sm:$0xff]
    %vm1700 = vcmask 261120
    %v1702 = vsel %vm1700, %v1546, 0
    %v1705 = vsel %vm1700, %v1549, 0
    %v1708 = vsel %vm1700, %v1552, 0
    %v1711 = vsel %vm1700, %v1555, 0
    %1713 = vmatprep.subr.mxu0 %v1557
    %1714 = vmatpush1.msra.mxu0 %v1556
    %1715 = vmatprep.subr.mxu0 %v1561
    %1716 = vmatpush1.msra.mxu0 %v1560
    %1717 = vmatprep.subr.mxu0 %v1565
    %1718 = vmatpush1.msra.mxu0 %v1564
    %1719 = vmatprep.subr.mxu0 %v1569
    %1720 = vmatpush1.msra.mxu0 %v1568
    %1721 = vmatprep.subr.mxu0 %v1573
    %1722 = vmatpush1.msra.mxu0 %v1572
    %1723 = vmatprep.subr.mxu0 %v1577
    %1724 = vmatpush1.msra.mxu0 %v1576
    %1725 = vmatprep.subr.mxu0 %v1581
    %1726 = vmatpush1.msra.mxu0 %v1580
    %1727 = vmatprep.subr.mxu0 %v1585
    %1728 = vmatpush1.msra.mxu0 %v1584
    %1729 = vmatprep.subr.mxu0 %v1589
    %1730 = vmatpush1.msra.mxu0 %v1588
    %1731 = vmatprep.subr.mxu0 %v1593
    %1732 = vmatpush1.msra.mxu0 %v1592
    %1733 = vmatprep.subr.mxu0 %v1597
    %1734 = vmatpush1.msra.mxu0 %v1596
    %1735 = vmatprep.subr.mxu0 %v1601
    %1736 = vmatpush1.msra.mxu0 %v1600
    %1737 = vmatprep.subr.mxu0 %v1605
    %1738 = vmatpush1.msra.mxu0 %v1604
    %1739 = vmatprep.subr.mxu0 %v1609
    %1740 = vmatpush1.msra.mxu0 %v1608
    %1741 = vmatprep.subr.mxu0 %v1613
    %1742 = vmatpush1.msra.mxu0 %v1612
    %1743 = vmatprep.subr.mxu0 %v1617
    %1744 = vmatpush1.msra.mxu0 %v1616
    %1745 = vmatprep.subr.mxu0 %v1621
    %1746 = vmatpush1.msra.mxu0 %v1620
    %1747 = vmatprep.subr.mxu0 %v1625
    %1748 = vmatpush1.msra.mxu0 %v1624
    %1749 = vmatprep.subr.mxu0 %v1629
    %1750 = vmatpush1.msra.mxu0 %v1628
    %1751 = vmatprep.subr.mxu0 %v1633
    %1752 = vmatpush1.msra.mxu0 %v1632
    %1753 = vmatprep.subr.mxu0 %v1637
    %1754 = vmatpush1.msra.mxu0 %v1636
    %1755 = vmatprep.subr.mxu0 %v1641
    %1756 = vmatpush1.msra.mxu0 %v1640
    %1757 = vmatprep.subr.mxu0 %v1645
    %1758 = vmatpush1.msra.mxu0 %v1644
    %1759 = vmatprep.subr.mxu0 %v1649
    %1760 = vmatpush1.msra.mxu0 %v1648
    %1761 = vmatprep.subr.mxu0 %v1653
    %1762 = vmatpush1.msra.mxu0 %v1652
    %1763 = vmatprep.subr.mxu0 %v1657
    %1764 = vmatpush1.msra.mxu0 %v1656
    %1765 = vmatprep.subr.mxu0 %v1661
    %1766 = vmatpush1.msra.mxu0 %v1660
    %1767 = vmatprep.subr.mxu0 %v1665
    %1768 = vmatpush1.msra.mxu0 %v1664
    %1769 = vmatprep.subr.mxu0 %v1669
    %1770 = vmatpush1.msra.mxu0 %v1668
    %1771 = vmatprep.subr.mxu0 %v1673
    %1772 = vmatpush1.msra.mxu0 %v1672
    %1773 = vmatprep.subr.mxu0 %v1677
    %1774 = vmatpush1.msra.mxu0 %v1676
    %1775 = vmatprep.subr.mxu0 %v1681
    %1776 = vmatpush1.msra.mxu0 %v1680
    %1777 = vmatprep.mubr.f32.mxu0 %v1545
    %1778 = vmatmul.mubr.f32.gmra.mrb[0].mxu0 %v1544
    %v1779 = vpop.f32.mrb[0].mxu0
    %v1780 = vadd.f32 0.0, %v1779
    %v1781 = vpop.f32.mrb[0].mxu0
    %v1782 = vadd.f32 0.0, %v1781
    %1783 = vmatprep.mubr.f32.mxu0 %v1548
    %1784 = vmatmul.mubr.f32.gmra.mrb[0].mxu0 %v1547
    %v1785 = vpop.f32.mrb[0].mxu0
    %v1786 = vadd.f32 0.0, %v1785
    %v1787 = vpop.f32.mrb[0].mxu0
    %v1788 = vadd.f32 0.0, %v1787
    %1789 = vmatprep.mubr.f32.mxu0 %v1551
    %1790 = vmatmul.mubr.f32.gmra.mrb[0].mxu0 %v1550
    %v1791 = vpop.f32.mrb[0].mxu0
    %v1792 = vadd.f32 0.0, %v1791
    %v1793 = vpop.f32.mrb[0].mxu0
    %v1794 = vadd.f32 0.0, %v1793
    %1795 = vmatprep.mubr.f32.mxu0 %v1554
    %1796 = vmatmul.mubr.f32.gmra.mrb[0].mxu0 %v1553
    %v1797 = vpop.f32.mrb[0].mxu0
    %v1798 = vadd.f32 0.0, %v1797
    %v1799 = vpop.f32.mrb[0].mxu0
    %v1800 = vadd.f32 0.0, %v1799
    %1801 = vdwg.mxu0
    %1802 = vmatprep.subr.mxu0 %v1685
    %1803 = vmatpush1.msra.mxu0 %v1684
    %1804 = vmatprep.subr.mxu0 %v1689
    %1805 = vmatpush1.msra.mxu0 %v1688
    %1806 = vmatprep.subr.mxu0 %v1693
    %1807 = vmatpush1.msra.mxu0 %v1692
    %1808 = vmatprep.subr.mxu0 %v1697
    %1809 = vmatpush1.msra.mxu0 %v1696
    %1810 = vmatprep.subr.mxu0 0.0
    %1811 = vmatpush1.msra.mxu0 0.0
    %1812 = vmatprep.subr.mxu0 0.0
    %1813 = vmatpush1.msra.mxu0 0.0
    %1814 = vmatprep.subr.mxu0 0.0
    %1815 = vmatpush1.msra.mxu0 0.0
    %1816 = vmatprep.subr.mxu0 0.0
    %1817 = vmatpush1.msra.mxu0 0.0
    %1818 = vmatprep.subr.mxu0 0.0
    %1819 = vmatpush1.msra.mxu0 0.0
    %1820 = vmatprep.subr.mxu0 0.0
    %1821 = vmatpush1.msra.mxu0 0.0
    %1822 = vmatprep.subr.mxu0 0.0
    %1823 = vmatpush1.msra.mxu0 0.0
    %1824 = vmatprep.subr.mxu0 0.0
    %1825 = vmatpush1.msra.mxu0 0.0
    %1826 = vmatprep.subr.mxu0 0.0
    %1827 = vmatpush1.msra.mxu0 0.0
    %1828 = vmatprep.subr.mxu0 0.0
    %1829 = vmatpush1.msra.mxu0 0.0
    %1830 = vmatprep.subr.mxu0 0.0
    %1831 = vmatpush1.msra.mxu0 0.0
    %1832 = vmatprep.subr.mxu0 0.0
    %1833 = vmatpush1.msra.mxu0 0.0
    %1834 = vmatprep.subr.mxu0 0.0
    %1835 = vmatpush1.msra.mxu0 0.0
    %1836 = vmatprep.subr.mxu0 0.0
    %1837 = vmatpush1.msra.mxu0 0.0
    %1838 = vmatprep.subr.mxu0 0.0
    %1839 = vmatpush1.msra.mxu0 0.0
    %1840 = vmatprep.subr.mxu0 0.0
    %1841 = vmatpush1.msra.mxu0 0.0
    %1842 = vmatprep.subr.mxu0 0.0
    %1843 = vmatpush1.msra.mxu0 0.0
    %1844 = vmatprep.subr.mxu0 0.0
    %1845 = vmatpush1.msra.mxu0 0.0
    %1846 = vmatprep.subr.mxu0 0.0
    %1847 = vmatpush1.msra.mxu0 0.0
    %1848 = vmatprep.subr.mxu0 0.0
    %1849 = vmatpush1.msra.mxu0 0.0
    %1850 = vmatprep.subr.mxu0 0.0
    %1851 = vmatpush1.msra.mxu0 0.0
    %1852 = vmatprep.subr.mxu0 0.0
    %1853 = vmatpush1.msra.mxu0 0.0
    %1854 = vmatprep.subr.mxu0 0.0
    %1855 = vmatpush1.msra.mxu0 0.0
    %1856 = vmatprep.subr.mxu0 0.0
    %1857 = vmatpush1.msra.mxu0 0.0
    %1858 = vmatprep.subr.mxu0 0.0
    %1859 = vmatpush1.msra.mxu0 0.0
    %1860 = vmatprep.subr.mxu0 0.0
    %1861 = vmatpush1.msra.mxu0 0.0
    %1862 = vmatprep.subr.mxu0 0.0
    %1863 = vmatpush1.msra.mxu0 0.0
    %1864 = vmatprep.subr.mxu0 0.0
    %1865 = vmatpush1.msra.mxu0 0.0
    %1866 = vmatprep.mubr.f32.mxu0 0.0
    %1867 = vmatmul.mubr.f32.gmra.mrb[0].mxu0 %v1702
    %v1868 = vpop.f32.mrb[0].mxu0
    %v1869 = vadd.f32 %v1780, %v1868
    %v1870 = vpop.f32.mrb[0].mxu0
    %v1871 = vadd.f32 %v1782, %v1870
    %1872 = vmatprep.mubr.f32.mxu0 0.0
    %1873 = vmatmul.mubr.f32.gmra.mrb[0].mxu0 %v1705
    %v1874 = vpop.f32.mrb[0].mxu0
    %v1875 = vadd.f32 %v1786, %v1874
    %v1876 = vpop.f32.mrb[0].mxu0
    %v1877 = vadd.f32 %v1788, %v1876
    %1878 = vmatprep.mubr.f32.mxu0 0.0
    %1879 = vmatmul.mubr.f32.gmra.mrb[0].mxu0 %v1708
    %v1880 = vpop.f32.mrb[0].mxu0
    %v1881 = vadd.f32 %v1792, %v1880
    %v1882 = vpop.f32.mrb[0].mxu0
    %v1883 = vadd.f32 %v1794, %v1882
    %1884 = vmatprep.mubr.f32.mxu0 0.0
    %1885 = vmatmul.mubr.f32.gmra.mrb[0].mxu0 %v1711
    %v1886 = vpop.f32.mrb[0].mxu0
    %v1887 = vadd.f32 %v1798, %v1886
    %v1888 = vpop.f32.mrb[0].mxu0
    %v1889 = vadd.f32 %v1800, %v1888
    %1890 = vdwg.mxu0
    %1891 = vmatprep.subr.mxu0 %v1559
    %1892 = vmatpush1.msra.mxu0 %v1558
    %1893 = vmatprep.subr.mxu0 %v1563
    %1894 = vmatpush1.msra.mxu0 %v1562
    %1895 = vmatprep.subr.mxu0 %v1567
    %1896 = vmatpush1.msra.mxu0 %v1566
    %1897 = vmatprep.subr.mxu0 %v1571
    %1898 = vmatpush1.msra.mxu0 %v1570
    %1899 = vmatprep.subr.mxu0 %v1575
    %1900 = vmatpush1.msra.mxu0 %v1574
    %1901 = vmatprep.subr.mxu0 %v1579
    %1902 = vmatpush1.msra.mxu0 %v1578
    %1903 = vmatprep.subr.mxu0 %v1583
    %1904 = vmatpush1.msra.mxu0 %v1582
    %1905 = vmatprep.subr.mxu0 %v1587
    %1906 = vmatpush1.msra.mxu0 %v1586
    %1907 = vmatprep.subr.mxu0 %v1591
    %1908 = vmatpush1.msra.mxu0 %v1590
    %1909 = vmatprep.subr.mxu0 %v1595
    %1910 = vmatpush1.msra.mxu0 %v1594
    %1911 = vmatprep.subr.mxu0 %v1599
    %1912 = vmatpush1.msra.mxu0 %v1598
    %1913 = vmatprep.subr.mxu0 %v1603
    %1914 = vmatpush1.msra.mxu0 %v1602
    %1915 = vmatprep.subr.mxu0 %v1607
    %1916 = vmatpush1.msra.mxu0 %v1606
    %1917 = vmatprep.subr.mxu0 %v1611
    %1918 = vmatpush1.msra.mxu0 %v1610
    %1919 = vmatprep.subr.mxu0 %v1615
    %1920 = vmatpush1.msra.mxu0 %v1614
    %1921 = vmatprep.subr.mxu0 %v1619
    %1922 = vmatpush1.msra.mxu0 %v1618
    %1923 = vmatprep.subr.mxu0 %v1623
    %1924 = vmatpush1.msra.mxu0 %v1622
    %1925 = vmatprep.subr.mxu0 %v1627
    %1926 = vmatpush1.msra.mxu0 %v1626
    %1927 = vmatprep.subr.mxu0 %v1631
    %1928 = vmatpush1.msra.mxu0 %v1630
    %1929 = vmatprep.subr.mxu0 %v1635
    %1930 = vmatpush1.msra.mxu0 %v1634
    %1931 = vmatprep.subr.mxu0 %v1639
    %1932 = vmatpush1.msra.mxu0 %v1638
    %1933 = vmatprep.subr.mxu0 %v1643
    %1934 = vmatpush1.msra.mxu0 %v1642
    %1935 = vmatprep.subr.mxu0 %v1647
    %1936 = vmatpush1.msra.mxu0 %v1646
    %1937 = vmatprep.subr.mxu0 %v1651
    %1938 = vmatpush1.msra.mxu0 %v1650
    %1939 = vmatprep.subr.mxu0 %v1655
    %1940 = vmatpush1.msra.mxu0 %v1654
    %1941 = vmatprep.subr.mxu0 %v1659
    %1942 = vmatpush1.msra.mxu0 %v1658
    %1943 = vmatprep.subr.mxu0 %v1663
    %1944 = vmatpush1.msra.mxu0 %v1662
    %1945 = vmatprep.subr.mxu0 %v1667
    %1946 = vmatpush1.msra.mxu0 %v1666
    %1947 = vmatprep.subr.mxu0 %v1671
    %1948 = vmatpush1.msra.mxu0 %v1670
    %1949 = vmatprep.subr.mxu0 %v1675
    %1950 = vmatpush1.msra.mxu0 %v1674
    %1951 = vmatprep.subr.mxu0 %v1679
    %1952 = vmatpush1.msra.mxu0 %v1678
    %1953 = vmatprep.subr.mxu0 %v1683
    %1954 = vmatpush1.msra.mxu0 %v1682
    %1955 = vmatprep.mubr.f32.mxu0 %v1545
    %1956 = vmatmul.mubr.f32.gmra.mrb[0].mxu0 %v1544
    %v1957 = vpop.f32.mrb[0].mxu0
    %v1958 = vadd.f32 0.0, %v1957
    %v1959 = vpop.f32.mrb[0].mxu0
    %v1960 = vadd.f32 0.0, %v1959
    %1961 = vmatprep.mubr.f32.mxu0 %v1548
    %1962 = vmatmul.mubr.f32.gmra.mrb[0].mxu0 %v1547
    %v1963 = vpop.f32.mrb[0].mxu0
    %v1964 = vadd.f32 0.0, %v1963
    %v1965 = vpop.f32.mrb[0].mxu0
    %v1966 = vadd.f32 0.0, %v1965
    %1967 = vmatprep.mubr.f32.mxu0 %v1551
    %1968 = vmatmul.mubr.f32.gmra.mrb[0].mxu0 %v1550
    %v1969 = vpop.f32.mrb[0].mxu0
    %v1970 = vadd.f32 0.0, %v1969
    %v1971 = vpop.f32.mrb[0].mxu0
    %v1972 = vadd.f32 0.0, %v1971
    %1973 = vmatprep.mubr.f32.mxu0 %v1554
    %1974 = vmatmul.mubr.f32.gmra.mrb[0].mxu0 %v1553
    %v1975 = vpop.f32.mrb[0].mxu0
    %v1976 = vadd.f32 0.0, %v1975
    %v1977 = vpop.f32.mrb[0].mxu0
    %v1978 = vadd.f32 0.0, %v1977
    %1979 = vdwg.mxu0
    %1980 = vmatprep.subr.mxu0 %v1687
    %1981 = vmatpush1.msra.mxu0 %v1686
    %1982 = vmatprep.subr.mxu0 %v1691
    %1983 = vmatpush1.msra.mxu0 %v1690
    %1984 = vmatprep.subr.mxu0 %v1695
    %1985 = vmatpush1.msra.mxu0 %v1694
    %1986 = vmatprep.subr.mxu0 %v1699
    %1987 = vmatpush1.msra.mxu0 %v1698
    %1988 = vmatprep.subr.mxu0 0.0
    %1989 = vmatpush1.msra.mxu0 0.0
    %1990 = vmatprep.subr.mxu0 0.0
    %1991 = vmatpush1.msra.mxu0 0.0
    %1992 = vmatprep.subr.mxu0 0.0
    %1993 = vmatpush1.msra.mxu0 0.0
    %1994 = vmatprep.subr.mxu0 0.0
    %1995 = vmatpush1.msra.mxu0 0.0
    %1996 = vmatprep.subr.mxu0 0.0
    %1997 = vmatpush1.msra.mxu0 0.0
    %1998 = vmatprep.subr.mxu0 0.0
    %1999 = vmatpush1.msra.mxu0 0.0
    %2000 = vmatprep.subr.mxu0 0.0
    %2001 = vmatpush1.msra.mxu0 0.0
    %2002 = vmatprep.subr.mxu0 0.0
    %2003 = vmatpush1.msra.mxu0 0.0
    %2004 = vmatprep.subr.mxu0 0.0
    %2005 = vmatpush1.msra.mxu0 0.0
    %2006 = vmatprep.subr.mxu0 0.0
    %2007 = vmatpush1.msra.mxu0 0.0
    %2008 = vmatprep.subr.mxu0 0.0
    %2009 = vmatpush1.msra.mxu0 0.0
    %2010 = vmatprep.subr.mxu0 0.0
    %2011 = vmatpush1.msra.mxu0 0.0
    %2012 = vmatprep.subr.mxu0 0.0
    %2013 = vmatpush1.msra.mxu0 0.0
    %2014 = vmatprep.subr.mxu0 0.0
    %2015 = vmatpush1.msra.mxu0 0.0
    %2016 = vmatprep.subr.mxu0 0.0
    %2017 = vmatpush1.msra.mxu0 0.0
    %2018 = vmatprep.subr.mxu0 0.0
    %2019 = vmatpush1.msra.mxu0 0.0
    %2020 = vmatprep.subr.mxu0 0.0
    %2021 = vmatpush1.msra.mxu0 0.0
    %2022 = vmatprep.subr.mxu0 0.0
    %2023 = vmatpush1.msra.mxu0 0.0
    %2024 = vmatprep.subr.mxu0 0.0
    %2025 = vmatpush1.msra.mxu0 0.0
    %2026 = vmatprep.subr.mxu0 0.0
    %2027 = vmatpush1.msra.mxu0 0.0
    %2028 = vmatprep.subr.mxu0 0.0
    %2029 = vmatpush1.msra.mxu0 0.0
    %2030 = vmatprep.subr.mxu0 0.0
    %2031 = vmatpush1.msra.mxu0 0.0
    %2032 = vmatprep.subr.mxu0 0.0
    %2033 = vmatpush1.msra.mxu0 0.0
    %2034 = vmatprep.subr.mxu0 0.0
    %2035 = vmatpush1.msra.mxu0 0.0
    %2036 = vmatprep.subr.mxu0 0.0
    %2037 = vmatpush1.msra.mxu0 0.0
    %2038 = vmatprep.subr.mxu0 0.0
    %2039 = vmatpush1.msra.mxu0 0.0
    %2040 = vmatprep.subr.mxu0 0.0
    %2041 = vmatpush1.msra.mxu0 0.0
    %2042 = vmatprep.subr.mxu0 0.0
    %2043 = vmatpush1.msra.mxu0 0.0
    %2044 = vmatprep.mubr.f32.mxu0 0.0
    %2045 = vmatmul.mubr.f32.gmra.mrb[0].mxu0 %v1702
    %v2046 = vpop.f32.mrb[0].mxu0
    %v2047 = vadd.f32 %v1958, %v2046
    %v2048 = vpop.f32.mrb[0].mxu0
    %v2049 = vadd.f32 %v1960, %v2048
    %2050 = vmatprep.mubr.f32.mxu0 0.0
    %2051 = vmatmul.mubr.f32.gmra.mrb[0].mxu0 %v1705
    %v2052 = vpop.f32.mrb[0].mxu0
    %v2053 = vadd.f32 %v1964, %v2052
    %v2054 = vpop.f32.mrb[0].mxu0
    %v2055 = vadd.f32 %v1966, %v2054
    %2056 = vmatprep.mubr.f32.mxu0 0.0
    %2057 = vmatmul.mubr.f32.gmra.mrb[0].mxu0 %v1708
    %v2058 = vpop.f32.mrb[0].mxu0
    %v2059 = vadd.f32 %v1970, %v2058
    %v2060 = vpop.f32.mrb[0].mxu0
    %v2061 = vadd.f32 %v1972, %v2060
    %2062 = vmatprep.mubr.f32.mxu0 0.0
    %2063 = vmatmul.mubr.f32.gmra.mrb[0].mxu0 %v1711
    %v2064 = vpop.f32.mrb[0].mxu0
    %v2065 = vadd.f32 %v1976, %v2064
    %v2066 = vpop.f32.mrb[0].mxu0
    %v2067 = vadd.f32 %v1978, %v2066
    %2068 = vdwg.mxu0
    %v2069 = vadd.f32 %v1869, %v1871
    %v2070 = vadd.f32 %v2069, %v2047
    %v2071 = vadd.f32 %v2070, %v2049
    %2072 = vadd.xlane.f32.xlu0 %v2071
    %v2073 = vpop.xlane.xlu0 %2072
    %v2074 = vadd.f32 %v1875, %v1877
    %v2075 = vadd.f32 %v2074, %v2053
    %v2076 = vadd.f32 %v2075, %v2055
    %2077 = vadd.xlane.f32.xlu0 %v2076
    %v2078 = vpop.xlane.xlu0 %2077
    %v2079 = vadd.f32 %v1881, %v1883
    %v2080 = vadd.f32 %v2079, %v2059
    %v2081 = vadd.f32 %v2080, %v2061
    %2082 = vadd.xlane.f32.xlu0 %v2081
    %v2083 = vpop.xlane.xlu0 %2082
    %v2084 = vadd.f32 %v1887, %v1889
    %v2085 = vadd.f32 %v2084, %v2065
    %v2086 = vadd.f32 %v2085, %v2067
    %2087 = vadd.xlane.f32.xlu0 %v2086
    %v2088 = vpop.xlane.xlu0 %2087
    %v2089 = vmul.f32 %v1869, %v1869
    %v2090 = vmul.f32 %v1871, %v1871
    %v2091 = vmul.f32 %v2047, %v2047
    %v2092 = vmul.f32 %v2049, %v2049
    %v2093 = vmul.f32 %v1875, %v1875
    %v2094 = vmul.f32 %v1877, %v1877
    %v2095 = vmul.f32 %v2053, %v2053
    %v2096 = vmul.f32 %v2055, %v2055
    %v2097 = vmul.f32 %v1881, %v1881
    %v2098 = vmul.f32 %v1883, %v1883
    %v2099 = vmul.f32 %v2059, %v2059
    %v2100 = vmul.f32 %v2061, %v2061
    %v2101 = vmul.f32 %v1887, %v1887
    %v2102 = vmul.f32 %v1889, %v1889
    %v2103 = vmul.f32 %v2065, %v2065
    %v2104 = vmul.f32 %v2067, %v2067
    %v2105 = vadd.f32 %v2089, %v2090
    %v2106 = vadd.f32 %v2105, %v2091
    %v2107 = vadd.f32 %v2106, %v2092
    %2108 = vadd.xlane.f32.xlu0 %v2107
    %v2109 = vpop.xlane.xlu0 %2108
    %v2110 = vadd.f32 %v2093, %v2094
    %v2111 = vadd.f32 %v2110, %v2095
    %v2112 = vadd.f32 %v2111, %v2096
    %2113 = vadd.xlane.f32.xlu0 %v2112
    %v2114 = vpop.xlane.xlu0 %2113
    %v2115 = vadd.f32 %v2097, %v2098
    %v2116 = vadd.f32 %v2115, %v2099
    %v2117 = vadd.f32 %v2116, %v2100
    %2118 = vadd.xlane.f32.xlu0 %v2117
    %v2119 = vpop.xlane.xlu0 %2118
    %v2120 = vadd.f32 %v2101, %v2102
    %v2121 = vadd.f32 %v2120, %v2103
    %v2122 = vadd.f32 %v2121, %v2104
    %2123 = vadd.xlane.f32.xlu0 %v2122
    %v2124 = vpop.xlane.xlu0 %2123
    %v2125 = vmul.f32 %v2073, 0.001953125
    %v2126 = vmul.f32 %v2078, 0.001953125
    %v2127 = vmul.f32 %v2083, 0.001953125
    %v2128 = vmul.f32 %v2088, 0.001953125
    %v2129 = vmul.f32 %v2109, 0.001953125
    %v2130 = vmul.f32 %v2114, 0.001953125
    %v2131 = vmul.f32 %v2119, 0.001953125
    %v2132 = vmul.f32 %v2124, 0.001953125
    %v2133 = vmul.f32 %v2125, %v2125
    %v2134 = vmul.f32 %v2126, %v2126
    %v2135 = vmul.f32 %v2127, %v2127
    %v2136 = vmul.f32 %v2128, %v2128
    %v2137 = vsub.f32 %v2129, %v2133
    %v2138 = vsub.f32 %v2130, %v2134
    %v2139 = vsub.f32 %v2131, %v2135
    %v2140 = vsub.f32 %v2132, %v2136
    %v2141 = vmax.f32 %v2137, 0.0
    %v2142 = vmax.f32 %v2138, 0.0
    %v2143 = vmax.f32 %v2139, 0.0
    %v2144 = vmax.f32 %v2140, 0.0
    %v2145 = vadd.f32 %v2141, 1e-05
    %v2146 = vadd.f32 %v2142, 1e-05
    %v2147 = vadd.f32 %v2143, 1e-05
    %v2148 = vadd.f32 %v2144, 1e-05
    %v2149 = vrsqrt.pop %v2145
    %v2150 = vrsqrt.pop %v2146
    %v2151 = vrsqrt.pop %v2147
    %v2152 = vrsqrt.pop %v2148
    %v2153 = vld [vmem:[%s5] sm:$0xff]
    %v2154 = vld [vmem:[%s5 + $0x8] sm:$0xff]
    %v2155 = vld [vmem:[%s5 + $0x10] sm:$0xff]
    %v2156 = vld [vmem:[%s5 + $0x18] sm:$0xff]
    %v2157 = vmul.f32 %v2149, %v2153
    %v2158 = vmul.f32 %v2150, %v2154
    %v2159 = vmul.f32 %v2151, %v2155
    %v2160 = vmul.f32 %v2152, %v2156
    %v2161 = vsub.f32 %v1869, %v2125
    %v2162 = vsub.f32 %v1871, %v2125
    %v2163 = vsub.f32 %v2047, %v2125
    %v2164 = vsub.f32 %v2049, %v2125
    %v2165 = vsub.f32 %v1875, %v2126
    %v2166 = vsub.f32 %v1877, %v2126
    %v2167 = vsub.f32 %v2053, %v2126
    %v2168 = vsub.f32 %v2055, %v2126
    %v2169 = vsub.f32 %v1881, %v2127
    %v2170 = vsub.f32 %v1883, %v2127
    %v2171 = vsub.f32 %v2059, %v2127
    %v2172 = vsub.f32 %v2061, %v2127
    %v2173 = vsub.f32 %v1887, %v2128
    %v2174 = vsub.f32 %v1889, %v2128
    %v2175 = vsub.f32 %v2065, %v2128
    %v2176 = vsub.f32 %v2067, %v2128
    %2178 = vset.pattern.permute.xlu0 0
    %2179 = vperm.xlu0 %2178, %v2157
    %v2180 = vpop.permute.xlu0 %2179
    %2183 = vset.pattern.permute.xlu0 0
    %2184 = vperm.xlu0 %2183, %v2158
    %v2185 = vpop.permute.xlu0 %2184
    %2188 = vset.pattern.permute.xlu0 0
    %2189 = vperm.xlu0 %2188, %v2159
    %v2190 = vpop.permute.xlu0 %2189
    %2193 = vset.pattern.permute.xlu0 0
    %2194 = vperm.xlu0 %2193, %v2160
    %v2195 = vpop.permute.xlu0 %2194
    %v2197 = vmul.f32 %v2161, %v2180
    %v2198 = vmul.f32 %v2162, %v2180
    %v2199 = vmul.f32 %v2163, %v2180
    %v2200 = vmul.f32 %v2164, %v2180
    %v2201 = vmul.f32 %v2165, %v2185
    %v2202 = vmul.f32 %v2166, %v2185
    %v2203 = vmul.f32 %v2167, %v2185
    %v2204 = vmul.f32 %v2168, %v2185
    %v2205 = vmul.f32 %v2169, %v2190
    %v2206 = vmul.f32 %v2170, %v2190
    %v2207 = vmul.f32 %v2171, %v2190
    %v2208 = vmul.f32 %v2172, %v2190
    %v2209 = vmul.f32 %v2173, %v2195
    %v2210 = vmul.f32 %v2174, %v2195
    %v2211 = vmul.f32 %v2175, %v2195
    %v2212 = vmul.f32 %v2176, %v2195
    %v2213 = vld [vmem:[%s6] sm:$0xff]
    %v2214 = vld [vmem:[%s6 + $0x8] sm:$0xff]
    %v2215 = vld [vmem:[%s6 + $0x10] sm:$0xff]
    %v2216 = vld [vmem:[%s6 + $0x18] sm:$0xff]
    %2218 = vset.pattern.permute.xlu0 0
    %2219 = vperm.xlu0 %2218, %v2213
    %v2220 = vpop.permute.xlu0 %2219
    %2223 = vset.pattern.permute.xlu0 0
    %2224 = vperm.xlu0 %2223, %v2214
    %v2225 = vpop.permute.xlu0 %2224
    %2228 = vset.pattern.permute.xlu0 0
    %2229 = vperm.xlu0 %2228, %v2215
    %v2230 = vpop.permute.xlu0 %2229
    %2233 = vset.pattern.permute.xlu0 0
    %2234 = vperm.xlu0 %2233, %v2216
    %v2235 = vpop.permute.xlu0 %2234
    %v2237 = vadd.f32 %v2197, %v2220
    %v2238 = vadd.f32 %v2198, %v2220
    %v2239 = vadd.f32 %v2199, %v2220
    %v2240 = vadd.f32 %v2200, %v2220
    %v2241 = vadd.f32 %v2201, %v2225
    %v2242 = vadd.f32 %v2202, %v2225
    %v2243 = vadd.f32 %v2203, %v2225
    %v2244 = vadd.f32 %v2204, %v2225
    %v2245 = vadd.f32 %v2205, %v2230
    %v2246 = vadd.f32 %v2206, %v2230
    %v2247 = vadd.f32 %v2207, %v2230
    %v2248 = vadd.f32 %v2208, %v2230
    %v2249 = vadd.f32 %v2209, %v2235
    %v2250 = vadd.f32 %v2210, %v2235
    %v2251 = vadd.f32 %v2211, %v2235
    %v2252 = vadd.f32 %v2212, %v2235
    %v2253 = vmax.f32 %v2237, 0.0
    %v2254 = vmax.f32 %v2238, 0.0
    %v2255 = vmax.f32 %v2239, 0.0
    %v2256 = vmax.f32 %v2240, 0.0
    %v2257 = vmax.f32 %v2241, 0.0
    %v2258 = vmax.f32 %v2242, 0.0
    %v2259 = vmax.f32 %v2243, 0.0
    %v2260 = vmax.f32 %v2244, 0.0
    %v2261 = vmax.f32 %v2245, 0.0
    %v2262 = vmax.f32 %v2246, 0.0
    %v2263 = vmax.f32 %v2247, 0.0
    %v2264 = vmax.f32 %v2248, 0.0
    %v2265 = vmax.f32 %v2249, 0.0
    %v2266 = vmax.f32 %v2250, 0.0
    %v2267 = vmax.f32 %v2251, 0.0
    %v2268 = vmax.f32 %v2252, 0.0
    %2269 = vrot.lane.b32.xlu0 %v2253, 127
    %v2270 = vpop.permute.xlu0 %2269
    %2271 = vrot.lane.b32.xlu0 %v2257, 127
    %v2272 = vpop.permute.xlu0 %2271
    %2273 = vrot.lane.b32.xlu0 %v2261, 127
    %v2274 = vpop.permute.xlu0 %2273
    %2275 = vrot.lane.b32.xlu0 %v2265, 127
    %v2276 = vpop.permute.xlu0 %2275
    %2277 = vrot.lane.b32.xlu0 %v2254, 127
    %v2278 = vpop.permute.xlu0 %2277
    %2279 = vrot.lane.b32.xlu0 %v2258, 127
    %v2280 = vpop.permute.xlu0 %2279
    %2281 = vrot.lane.b32.xlu0 %v2262, 127
    %v2282 = vpop.permute.xlu0 %2281
    %2283 = vrot.lane.b32.xlu0 %v2266, 127
    %v2284 = vpop.permute.xlu0 %2283
    %2285 = vrot.lane.b32.xlu0 %v2255, 127
    %v2286 = vpop.permute.xlu0 %2285
    %2287 = vrot.lane.b32.xlu0 %v2259, 127
    %v2288 = vpop.permute.xlu0 %2287
    %2289 = vrot.lane.b32.xlu0 %v2263, 127
    %v2290 = vpop.permute.xlu0 %2289
    %2291 = vrot.lane.b32.xlu0 %v2267, 127
    %v2292 = vpop.permute.xlu0 %2291
    %2293 = vrot.lane.b32.xlu0 %v2256, 127
    %v2294 = vpop.permute.xlu0 %2293
    %2295 = vrot.lane.b32.xlu0 %v2260, 127
    %v2296 = vpop.permute.xlu0 %2295
    %2297 = vrot.lane.b32.xlu0 %v2264, 127
    %v2298 = vpop.permute.xlu0 %2297
    %2299 = vrot.lane.b32.xlu0 %v2268, 127
    %v2300 = vpop.permute.xlu0 %2299
    %v2301 = vsel %vm288, %v2286, %v2294
    %v2302 = vsel %vm288, %v2288, %v2296
    %v2303 = vsel %vm288, %v2290, %v2298
    %v2304 = vsel %vm288, %v2292, %v2300
    %v2305 = vsel %vm288, %v2278, %v2286
    %v2306 = vsel %vm288, %v2280, %v2288
    %v2307 = vsel %vm288, %v2282, %v2290
    %v2308 = vsel %vm288, %v2284, %v2292
    %v2309 = vsel %vm288, %v2270, %v2278
    %v2310 = vsel %vm288, %v2272, %v2280
    %v2311 = vsel %vm288, %v2274, %v2282
    %v2312 = vsel %vm288, %v2276, %v2284
    %v2313 = vsel %vm288, %v2294, %v2270
    %v2314 = vsel %vm288, %v2296, %v2272
    %v2315 = vsel %vm288, %v2298, %v2274
    %v2316 = vsel %vm288, %v2300, %v2276
    %v2317 = vmax.f32 %v2253, %v2309
    %v2318 = vmax.f32 %v2254, %v2305
    %v2319 = vmax.f32 %v2255, %v2301
    %v2320 = vmax.f32 %v2256, %v2313
    %v2321 = vmax.f32 %v2257, %v2310
    %v2322 = vmax.f32 %v2258, %v2306
    %v2323 = vmax.f32 %v2259, %v2302
    %v2324 = vmax.f32 %v2260, %v2314
    %v2325 = vmax.f32 %v2261, %v2311
    %v2326 = vmax.f32 %v2262, %v2307
    %v2327 = vmax.f32 %v2263, %v2303
    %v2328 = vmax.f32 %v2264, %v2315
    %v2329 = vmax.f32 %v2265, %v2312
    %v2330 = vmax.f32 %v2266, %v2308
    %v2331 = vmax.f32 %v2267, %v2304
    %v2332 = vmax.f32 %v2268, %v2316
    %2333 = vrot.lane.b32.xlu0 %v2317, 112
    %v2334 = vpop.permute.xlu0 %2333
    %2335 = vrot.lane.b32.xlu0 %v2321, 112
    %v2336 = vpop.permute.xlu0 %2335
    %2337 = vrot.lane.b32.xlu0 %v2325, 112
    %v2338 = vpop.permute.xlu0 %2337
    %2339 = vrot.lane.b32.xlu0 %v2329, 112
    %v2340 = vpop.permute.xlu0 %2339
    %2341 = vrot.lane.b32.xlu0 %v2318, 112
    %v2342 = vpop.permute.xlu0 %2341
    %2343 = vrot.lane.b32.xlu0 %v2322, 112
    %v2344 = vpop.permute.xlu0 %2343
    %2345 = vrot.lane.b32.xlu0 %v2326, 112
    %v2346 = vpop.permute.xlu0 %2345
    %2347 = vrot.lane.b32.xlu0 %v2330, 112
    %v2348 = vpop.permute.xlu0 %2347
    %2349 = vrot.lane.b32.xlu0 %v2319, 112
    %v2350 = vpop.permute.xlu0 %2349
    %2351 = vrot.lane.b32.xlu0 %v2323, 112
    %v2352 = vpop.permute.xlu0 %2351
    %2353 = vrot.lane.b32.xlu0 %v2327, 112
    %v2354 = vpop.permute.xlu0 %2353
    %2355 = vrot.lane.b32.xlu0 %v2331, 112
    %v2356 = vpop.permute.xlu0 %2355
    %2357 = vrot.lane.b32.xlu0 %v2320, 112
    %v2358 = vpop.permute.xlu0 %2357
    %2359 = vrot.lane.b32.xlu0 %v2324, 112
    %v2360 = vpop.permute.xlu0 %2359
    %2361 = vrot.lane.b32.xlu0 %v2328, 112
    %v2362 = vpop.permute.xlu0 %2361
    %2363 = vrot.lane.b32.xlu0 %v2332, 112
    %v2364 = vpop.permute.xlu0 %2363
    %v2365 = vsel %vm382, %v2350, %v2358
    %v2366 = vsel %vm382, %v2352, %v2360
    %v2367 = vsel %vm382, %v2354, %v2362
    %v2368 = vsel %vm382, %v2356, %v2364
    %v2369 = vsel %vm382, %v2342, %v2350
    %v2370 = vsel %vm382, %v2344, %v2352
    %v2371 = vsel %vm382, %v2346, %v2354
    %v2372 = vsel %vm382, %v2348, %v2356
    %v2373 = vsel %vm382, %v2334, %v2342
    %v2374 = vsel %vm382, %v2336, %v2344
    %v2375 = vsel %vm382, %v2338, %v2346
    %v2376 = vsel %vm382, %v2340, %v2348
    %v2377 = vsel %vm382, %v2358, %v2334
    %v2378 = vsel %vm382, %v2360, %v2336
    %v2379 = vsel %vm382, %v2362, %v2338
    %v2380 = vsel %vm382, %v2364, %v2340
    %v2381 = vmax.f32 %v2317, %v2373
    %v2382 = vmax.f32 %v2318, %v2369
    %v2383 = vmax.f32 %v2319, %v2365
    %v2384 = vmax.f32 %v2320, %v2377
    %v2385 = vmax.f32 %v2321, %v2374
    %v2386 = vmax.f32 %v2322, %v2370
    %v2387 = vmax.f32 %v2323, %v2366
    %v2388 = vmax.f32 %v2324, %v2378
    %v2389 = vmax.f32 %v2325, %v2375
    %v2390 = vmax.f32 %v2326, %v2371
    %v2391 = vmax.f32 %v2327, %v2367
    %v2392 = vmax.f32 %v2328, %v2379
    %v2393 = vmax.f32 %v2329, %v2376
    %v2394 = vmax.f32 %v2330, %v2372
    %v2395 = vmax.f32 %v2331, %v2368
    %v2396 = vmax.f32 %v2332, %v2380
    %v2397 = vshra.s32 %v28, 6
    %v2398 = vand.u32 %v28, 63
    %v2399 = vshra.s32 %v2398, 3
    %v2400 = vand.u32 %v28, 7
    %v2401 = vmul.u32 %v2397, 256
    %v2402 = vmul.u32 %v2399, 2
    %v2403 = vmul.u32 %v2402, 16
    %v2404 = vadd.s32 %v2401, %v2403
    %v2405 = vmul.u32 %v2400, 2
    %v2406 = vadd.s32 %v2404, %v2405
    %v2407 = vlaneseq
    %v2408 = vshrl.u32 %v2407, 7
    %v2409 = vadd.s32 %v2408, 8
    %v2410 = vadd.s32 %v2408, 16
    %v2411 = vadd.s32 %v2408, 24
    %v2412 = vadd.s32 %v2408, 32
    %v2413 = vadd.s32 %v2408, 40
    %v2414 = vadd.s32 %v2408, 48
    %v2415 = vadd.s32 %v2408, 56
    %v2416 = vadd.s32 %v2408, 64
    %v2417 = vadd.s32 %v2408, 72
    %v2418 = vadd.s32 %v2408, 80
    %v2419 = vadd.s32 %v2408, 88
    %v2420 = vadd.s32 %v2408, 96
    %v2421 = vadd.s32 %v2408, 104
    %v2422 = vadd.s32 %v2408, 112
    %v2423 = vadd.s32 %v2408, 120
    %v2424 = vadd.s32 %v2408, 128
    %v2425 = vadd.s32 %v2408, 136
    %v2426 = vadd.s32 %v2408, 144
    %v2427 = vadd.s32 %v2408, 152
    %v2428 = vadd.s32 %v2408, 160
    %v2429 = vadd.s32 %v2408, 168
    %v2430 = vadd.s32 %v2408, 176
    %v2431 = vadd.s32 %v2408, 184
    %v2432 = vadd.s32 %v2408, 192
    %v2433 = vadd.s32 %v2408, 200
    %v2434 = vadd.s32 %v2408, 208
    %v2435 = vadd.s32 %v2408, 216
    %v2436 = vadd.s32 %v2408, 224
    %v2437 = vadd.s32 %v2408, 232
    %v2438 = vadd.s32 %v2408, 240
    %v2439 = vadd.s32 %v2408, 248
    %v2440 = vadd.s32 %v2408, 256
    %v2441 = vadd.s32 %v2408, 264
    %v2442 = vadd.s32 %v2408, 272
    %v2443 = vadd.s32 %v2408, 280
    %v2444 = vadd.s32 %v2408, 288
    %v2445 = vadd.s32 %v2408, 296
    %v2446 = vadd.s32 %v2408, 304
    %v2447 = vadd.s32 %v2408, 312
    %v2448 = vadd.s32 %v2408, 320
    %v2449 = vadd.s32 %v2408, 328
    %v2450 = vadd.s32 %v2408, 336
    %v2451 = vadd.s32 %v2408, 344
    %v2452 = vadd.s32 %v2408, 352
    %v2453 = vadd.s32 %v2408, 360
    %v2454 = vadd.s32 %v2408, 368
    %v2455 = vadd.s32 %v2408, 376
    %v2456 = vadd.s32 %v2408, 384
    %v2457 = vadd.s32 %v2408, 392
    %v2458 = vadd.s32 %v2408, 400
    %v2459 = vadd.s32 %v2408, 408
    %v2460 = vadd.s32 %v2408, 416
    %v2461 = vadd.s32 %v2408, 424
    %v2462 = vadd.s32 %v2408, 432
    %v2463 = vadd.s32 %v2408, 440
    %v2464 = vadd.s32 %v2408, 448
    %v2465 = vadd.s32 %v2408, 456
    %v2466 = vadd.s32 %v2408, 464
    %v2467 = vadd.s32 %v2408, 472
    %v2468 = vadd.s32 %v2408, 480
    %v2469 = vadd.s32 %v2408, 488
    %v2470 = vadd.s32 %v2408, 496
    %v2471 = vadd.s32 %v2408, 504
    %vm2472 = vcmp.eq.s32.totalorder %v2408, %v2406
    %vm2473 = vcmp.eq.s32.totalorder %v2409, %v2406
    %vm2474 = vcmp.eq.s32.totalorder %v2410, %v2406
    %vm2475 = vcmp.eq.s32.totalorder %v2411, %v2406
    %vm2476 = vcmp.eq.s32.totalorder %v2412, %v2406
    %vm2477 = vcmp.eq.s32.totalorder %v2413, %v2406
    %vm2478 = vcmp.eq.s32.totalorder %v2414, %v2406
    %vm2479 = vcmp.eq.s32.totalorder %v2415, %v2406
    %vm2480 = vcmp.eq.s32.totalorder %v2416, %v2406
    %vm2481 = vcmp.eq.s32.totalorder %v2417, %v2406
    %vm2482 = vcmp.eq.s32.totalorder %v2418, %v2406
    %vm2483 = vcmp.eq.s32.totalorder %v2419, %v2406
    %vm2484 = vcmp.eq.s32.totalorder %v2420, %v2406
    %vm2485 = vcmp.eq.s32.totalorder %v2421, %v2406
    %vm2486 = vcmp.eq.s32.totalorder %v2422, %v2406
    %vm2487 = vcmp.eq.s32.totalorder %v2423, %v2406
    %vm2488 = vcmp.eq.s32.totalorder %v2424, %v2406
    %vm2489 = vcmp.eq.s32.totalorder %v2425, %v2406
    %vm2490 = vcmp.eq.s32.totalorder %v2426, %v2406
    %vm2491 = vcmp.eq.s32.totalorder %v2427, %v2406
    %vm2492 = vcmp.eq.s32.totalorder %v2428, %v2406
    %vm2493 = vcmp.eq.s32.totalorder %v2429, %v2406
    %vm2494 = vcmp.eq.s32.totalorder %v2430, %v2406
    %vm2495 = vcmp.eq.s32.totalorder %v2431, %v2406
    %vm2496 = vcmp.eq.s32.totalorder %v2432, %v2406
    %vm2497 = vcmp.eq.s32.totalorder %v2433, %v2406
    %vm2498 = vcmp.eq.s32.totalorder %v2434, %v2406
    %vm2499 = vcmp.eq.s32.totalorder %v2435, %v2406
    %vm2500 = vcmp.eq.s32.totalorder %v2436, %v2406
    %vm2501 = vcmp.eq.s32.totalorder %v2437, %v2406
    %vm2502 = vcmp.eq.s32.totalorder %v2438, %v2406
    %vm2503 = vcmp.eq.s32.totalorder %v2439, %v2406
    %vm2504 = vcmp.eq.s32.totalorder %v2440, %v2406
    %vm2505 = vcmp.eq.s32.totalorder %v2441, %v2406
    %vm2506 = vcmp.eq.s32.totalorder %v2442, %v2406
    %vm2507 = vcmp.eq.s32.totalorder %v2443, %v2406
    %vm2508 = vcmp.eq.s32.totalorder %v2444, %v2406
    %vm2509 = vcmp.eq.s32.totalorder %v2445, %v2406
    %vm2510 = vcmp.eq.s32.totalorder %v2446, %v2406
    %vm2511 = vcmp.eq.s32.totalorder %v2447, %v2406
    %vm2512 = vcmp.eq.s32.totalorder %v2448, %v2406
    %vm2513 = vcmp.eq.s32.totalorder %v2449, %v2406
    %vm2514 = vcmp.eq.s32.totalorder %v2450, %v2406
    %vm2515 = vcmp.eq.s32.totalorder %v2451, %v2406
    %vm2516 = vcmp.eq.s32.totalorder %v2452, %v2406
    %vm2517 = vcmp.eq.s32.totalorder %v2453, %v2406
    %vm2518 = vcmp.eq.s32.totalorder %v2454, %v2406
    %vm2519 = vcmp.eq.s32.totalorder %v2455, %v2406
    %vm2520 = vcmp.eq.s32.totalorder %v2456, %v2406
    %vm2521 = vcmp.eq.s32.totalorder %v2457, %v2406
    %vm2522 = vcmp.eq.s32.totalorder %v2458, %v2406
    %vm2523 = vcmp.eq.s32.totalorder %v2459, %v2406
    %vm2524 = vcmp.eq.s32.totalorder %v2460, %v2406
    %vm2525 = vcmp.eq.s32.totalorder %v2461, %v2406
    %vm2526 = vcmp.eq.s32.totalorder %v2462, %v2406
    %vm2527 = vcmp.eq.s32.totalorder %v2463, %v2406
    %vm2528 = vcmp.eq.s32.totalorder %v2464, %v2406
    %vm2529 = vcmp.eq.s32.totalorder %v2465, %v2406
    %vm2530 = vcmp.eq.s32.totalorder %v2466, %v2406
    %vm2531 = vcmp.eq.s32.totalorder %v2467, %v2406
    %vm2532 = vcmp.eq.s32.totalorder %v2468, %v2406
    %vm2533 = vcmp.eq.s32.totalorder %v2469, %v2406
    %vm2534 = vcmp.eq.s32.totalorder %v2470, %v2406
    %vm2535 = vcmp.eq.s32.totalorder %v2471, %v2406
    %v2536 = vsel %vm2472, 1, 0
    %v2537 = vsel %vm2473, 1, 0
    %v2538 = vsel %vm2474, 1, 0
    %v2539 = vsel %vm2475, 1, 0
    %v2540 = vsel %vm2476, 1, 0
    %v2541 = vsel %vm2477, 1, 0
    %v2542 = vsel %vm2478, 1, 0
    %v2543 = vsel %vm2479, 1, 0
    %v2544 = vsel %vm2480, 1, 0
    %v2545 = vsel %vm2481, 1, 0
    %v2546 = vsel %vm2482, 1, 0
    %v2547 = vsel %vm2483, 1, 0
    %v2548 = vsel %vm2484, 1, 0
    %v2549 = vsel %vm2485, 1, 0
    %v2550 = vsel %vm2486, 1, 0
    %v2551 = vsel %vm2487, 1, 0
    %v2552 = vsel %vm2488, 1, 0
    %v2553 = vsel %vm2489, 1, 0
    %v2554 = vsel %vm2490, 1, 0
    %v2555 = vsel %vm2491, 1, 0
    %v2556 = vsel %vm2492, 1, 0
    %v2557 = vsel %vm2493, 1, 0
    %v2558 = vsel %vm2494, 1, 0
    %v2559 = vsel %vm2495, 1, 0
    %v2560 = vsel %vm2496, 1, 0
    %v2561 = vsel %vm2497, 1, 0
    %v2562 = vsel %vm2498, 1, 0
    %v2563 = vsel %vm2499, 1, 0
    %v2564 = vsel %vm2500, 1, 0
    %v2565 = vsel %vm2501, 1, 0
    %v2566 = vsel %vm2502, 1, 0
    %v2567 = vsel %vm2503, 1, 0
    %v2568 = vsel %vm2504, 1, 0
    %v2569 = vsel %vm2505, 1, 0
    %v2570 = vsel %vm2506, 1, 0
    %v2571 = vsel %vm2507, 1, 0
    %v2572 = vsel %vm2508, 1, 0
    %v2573 = vsel %vm2509, 1, 0
    %v2574 = vsel %vm2510, 1, 0
    %v2575 = vsel %vm2511, 1, 0
    %v2576 = vsel %vm2512, 1, 0
    %v2577 = vsel %vm2513, 1, 0
    %v2578 = vsel %vm2514, 1, 0
    %v2579 = vsel %vm2515, 1, 0
    %v2580 = vsel %vm2516, 1, 0
    %v2581 = vsel %vm2517, 1, 0
    %v2582 = vsel %vm2518, 1, 0
    %v2583 = vsel %vm2519, 1, 0
    %v2584 = vsel %vm2520, 1, 0
    %v2585 = vsel %vm2521, 1, 0
    %v2586 = vsel %vm2522, 1, 0
    %v2587 = vsel %vm2523, 1, 0
    %v2588 = vsel %vm2524, 1, 0
    %v2589 = vsel %vm2525, 1, 0
    %v2590 = vsel %vm2526, 1, 0
    %v2591 = vsel %vm2527, 1, 0
    %v2592 = vsel %vm2528, 1, 0
    %v2593 = vsel %vm2529, 1, 0
    %v2594 = vsel %vm2530, 1, 0
    %v2595 = vsel %vm2531, 1, 0
    %v2596 = vsel %vm2532, 1, 0
    %v2597 = vsel %vm2533, 1, 0
    %v2598 = vsel %vm2534, 1, 0
    %v2599 = vsel %vm2535, 1, 0
    %v2600 = vcvt.s32.f32 %v2536
    %v2601 = vcvt.s32.f32 %v2537
    %v2602 = vcvt.s32.f32 %v2538
    %v2603 = vcvt.s32.f32 %v2539
    %v2604 = vcvt.s32.f32 %v2540
    %v2605 = vcvt.s32.f32 %v2541
    %v2606 = vcvt.s32.f32 %v2542
    %v2607 = vcvt.s32.f32 %v2543
    %v2608 = vcvt.s32.f32 %v2544
    %v2609 = vcvt.s32.f32 %v2545
    %v2610 = vcvt.s32.f32 %v2546
    %v2611 = vcvt.s32.f32 %v2547
    %v2612 = vcvt.s32.f32 %v2548
    %v2613 = vcvt.s32.f32 %v2549
    %v2614 = vcvt.s32.f32 %v2550
    %v2615 = vcvt.s32.f32 %v2551
    %v2616 = vcvt.s32.f32 %v2552
    %v2617 = vcvt.s32.f32 %v2553
    %v2618 = vcvt.s32.f32 %v2554
    %v2619 = vcvt.s32.f32 %v2555
    %v2620 = vcvt.s32.f32 %v2556
    %v2621 = vcvt.s32.f32 %v2557
    %v2622 = vcvt.s32.f32 %v2558
    %v2623 = vcvt.s32.f32 %v2559
    %v2624 = vcvt.s32.f32 %v2560
    %v2625 = vcvt.s32.f32 %v2561
    %v2626 = vcvt.s32.f32 %v2562
    %v2627 = vcvt.s32.f32 %v2563
    %v2628 = vcvt.s32.f32 %v2564
    %v2629 = vcvt.s32.f32 %v2565
    %v2630 = vcvt.s32.f32 %v2566
    %v2631 = vcvt.s32.f32 %v2567
    %v2632 = vcvt.s32.f32 %v2568
    %v2633 = vcvt.s32.f32 %v2569
    %v2634 = vcvt.s32.f32 %v2570
    %v2635 = vcvt.s32.f32 %v2571
    %v2636 = vcvt.s32.f32 %v2572
    %v2637 = vcvt.s32.f32 %v2573
    %v2638 = vcvt.s32.f32 %v2574
    %v2639 = vcvt.s32.f32 %v2575
    %v2640 = vcvt.s32.f32 %v2576
    %v2641 = vcvt.s32.f32 %v2577
    %v2642 = vcvt.s32.f32 %v2578
    %v2643 = vcvt.s32.f32 %v2579
    %v2644 = vcvt.s32.f32 %v2580
    %v2645 = vcvt.s32.f32 %v2581
    %v2646 = vcvt.s32.f32 %v2582
    %v2647 = vcvt.s32.f32 %v2583
    %v2648 = vcvt.s32.f32 %v2584
    %v2649 = vcvt.s32.f32 %v2585
    %v2650 = vcvt.s32.f32 %v2586
    %v2651 = vcvt.s32.f32 %v2587
    %v2652 = vcvt.s32.f32 %v2588
    %v2653 = vcvt.s32.f32 %v2589
    %v2654 = vcvt.s32.f32 %v2590
    %v2655 = vcvt.s32.f32 %v2591
    %v2656 = vcvt.s32.f32 %v2592
    %v2657 = vcvt.s32.f32 %v2593
    %v2658 = vcvt.s32.f32 %v2594
    %v2659 = vcvt.s32.f32 %v2595
    %v2660 = vcvt.s32.f32 %v2596
    %v2661 = vcvt.s32.f32 %v2597
    %v2662 = vcvt.s32.f32 %v2598
    %v2663 = vcvt.s32.f32 %v2599
    %2664 = vmatprep.subr.mxu0 0.0
    %2665 = vmatpush1.msra.mxu0 %v2600
    %2666 = vmatprep.subr.mxu0 0.0
    %2667 = vmatpush1.msra.mxu0 %v2601
    %2668 = vmatprep.subr.mxu0 0.0
    %2669 = vmatpush1.msra.mxu0 %v2602
    %2670 = vmatprep.subr.mxu0 0.0
    %2671 = vmatpush1.msra.mxu0 %v2603
    %2672 = vmatprep.subr.mxu0 0.0
    %2673 = vmatpush1.msra.mxu0 %v2604
    %2674 = vmatprep.subr.mxu0 0.0
    %2675 = vmatpush1.msra.mxu0 %v2605
    %2676 = vmatprep.subr.mxu0 0.0
    %2677 = vmatpush1.msra.mxu0 %v2606
    %2678 = vmatprep.subr.mxu0 0.0
    %2679 = vmatpush1.msra.mxu0 %v2607
    %2680 = vmatprep.subr.mxu0 0.0
    %2681 = vmatpush1.msra.mxu0 %v2608
    %2682 = vmatprep.subr.mxu0 0.0
    %2683 = vmatpush1.msra.mxu0 %v2609
    %2684 = vmatprep.subr.mxu0 0.0
    %2685 = vmatpush1.msra.mxu0 %v2610
    %2686 = vmatprep.subr.mxu0 0.0
    %2687 = vmatpush1.msra.mxu0 %v2611
    %2688 = vmatprep.subr.mxu0 0.0
    %2689 = vmatpush1.msra.mxu0 %v2612
    %2690 = vmatprep.subr.mxu0 0.0
    %2691 = vmatpush1.msra.mxu0 %v2613
    %2692 = vmatprep.subr.mxu0 0.0
    %2693 = vmatpush1.msra.mxu0 %v2614
    %2694 = vmatprep.subr.mxu0 0.0
    %2695 = vmatpush1.msra.mxu0 %v2615
    %2696 = vmatprep.subr.mxu0 0.0
    %2697 = vmatpush1.msra.mxu0 %v2616
    %2698 = vmatprep.subr.mxu0 0.0
    %2699 = vmatpush1.msra.mxu0 %v2617
    %2700 = vmatprep.subr.mxu0 0.0
    %2701 = vmatpush1.msra.mxu0 %v2618
    %2702 = vmatprep.subr.mxu0 0.0
    %2703 = vmatpush1.msra.mxu0 %v2619
    %2704 = vmatprep.subr.mxu0 0.0
    %2705 = vmatpush1.msra.mxu0 %v2620
    %2706 = vmatprep.subr.mxu0 0.0
    %2707 = vmatpush1.msra.mxu0 %v2621
    %2708 = vmatprep.subr.mxu0 0.0
    %2709 = vmatpush1.msra.mxu0 %v2622
    %2710 = vmatprep.subr.mxu0 0.0
    %2711 = vmatpush1.msra.mxu0 %v2623
    %2712 = vmatprep.subr.mxu0 0.0
    %2713 = vmatpush1.msra.mxu0 %v2624
    %2714 = vmatprep.subr.mxu0 0.0
    %2715 = vmatpush1.msra.mxu0 %v2625
    %2716 = vmatprep.subr.mxu0 0.0
    %2717 = vmatpush1.msra.mxu0 %v2626
    %2718 = vmatprep.subr.mxu0 0.0
    %2719 = vmatpush1.msra.mxu0 %v2627
    %2720 = vmatprep.subr.mxu0 0.0
    %2721 = vmatpush1.msra.mxu0 %v2628
    %2722 = vmatprep.subr.mxu0 0.0
    %2723 = vmatpush1.msra.mxu0 %v2629
    %2724 = vmatprep.subr.mxu0 0.0
    %2725 = vmatpush1.msra.mxu0 %v2630
    %2726 = vmatprep.subr.mxu0 0.0
    %2727 = vmatpush1.msra.mxu0 %v2631
    %2728 = vmatprep.mubr.f32.mxu0 %v2382
    %2729 = vmatmul.mubr.f32.gmra.mrb[0].mxu0 %v2381
    %v2730 = vpop.f32.mrb[0].mxu0
    %v2731 = vadd.f32 0.0, %v2730
    %v2732 = vpop.f32.mrb[0].mxu0
    %2733 = vmatprep.mubr.f32.mxu0 %v2386
    %2734 = vmatmul.mubr.f32.gmra.mrb[0].mxu0 %v2385
    %v2735 = vpop.f32.mrb[0].mxu0
    %v2736 = vadd.f32 0.0, %v2735
    %v2737 = vpop.f32.mrb[0].mxu0
    %2738 = vmatprep.mubr.f32.mxu0 %v2390
    %2739 = vmatmul.mubr.f32.gmra.mrb[0].mxu0 %v2389
    %v2740 = vpop.f32.mrb[0].mxu0
    %v2741 = vadd.f32 0.0, %v2740
    %v2742 = vpop.f32.mrb[0].mxu0
    %2743 = vmatprep.mubr.f32.mxu0 %v2394
    %2744 = vmatmul.mubr.f32.gmra.mrb[0].mxu0 %v2393
    %v2745 = vpop.f32.mrb[0].mxu0
    %v2746 = vadd.f32 0.0, %v2745
    %v2747 = vpop.f32.mrb[0].mxu0
    %2748 = vdwg.mxu0
    %2749 = vmatprep.subr.mxu0 0.0
    %2750 = vmatpush1.msra.mxu0 %v2632
    %2751 = vmatprep.subr.mxu0 0.0
    %2752 = vmatpush1.msra.mxu0 %v2633
    %2753 = vmatprep.subr.mxu0 0.0
    %2754 = vmatpush1.msra.mxu0 %v2634
    %2755 = vmatprep.subr.mxu0 0.0
    %2756 = vmatpush1.msra.mxu0 %v2635
    %2757 = vmatprep.subr.mxu0 0.0
    %2758 = vmatpush1.msra.mxu0 %v2636
    %2759 = vmatprep.subr.mxu0 0.0
    %2760 = vmatpush1.msra.mxu0 %v2637
    %2761 = vmatprep.subr.mxu0 0.0
    %2762 = vmatpush1.msra.mxu0 %v2638
    %2763 = vmatprep.subr.mxu0 0.0
    %2764 = vmatpush1.msra.mxu0 %v2639
    %2765 = vmatprep.subr.mxu0 0.0
    %2766 = vmatpush1.msra.mxu0 %v2640
    %2767 = vmatprep.subr.mxu0 0.0
    %2768 = vmatpush1.msra.mxu0 %v2641
    %2769 = vmatprep.subr.mxu0 0.0
    %2770 = vmatpush1.msra.mxu0 %v2642
    %2771 = vmatprep.subr.mxu0 0.0
    %2772 = vmatpush1.msra.mxu0 %v2643
    %2773 = vmatprep.subr.mxu0 0.0
    %2774 = vmatpush1.msra.mxu0 %v2644
    %2775 = vmatprep.subr.mxu0 0.0
    %2776 = vmatpush1.msra.mxu0 %v2645
    %2777 = vmatprep.subr.mxu0 0.0
    %2778 = vmatpush1.msra.mxu0 %v2646
    %2779 = vmatprep.subr.mxu0 0.0
    %2780 = vmatpush1.msra.mxu0 %v2647
    %2781 = vmatprep.subr.mxu0 0.0
    %2782 = vmatpush1.msra.mxu0 %v2648
    %2783 = vmatprep.subr.mxu0 0.0
    %2784 = vmatpush1.msra.mxu0 %v2649
    %2785 = vmatprep.subr.mxu0 0.0
    %2786 = vmatpush1.msra.mxu0 %v2650
    %2787 = vmatprep.subr.mxu0 0.0
    %2788 = vmatpush1.msra.mxu0 %v2651
    %2789 = vmatprep.subr.mxu0 0.0
    %2790 = vmatpush1.msra.mxu0 %v2652
    %2791 = vmatprep.subr.mxu0 0.0
    %2792 = vmatpush1.msra.mxu0 %v2653
    %2793 = vmatprep.subr.mxu0 0.0
    %2794 = vmatpush1.msra.mxu0 %v2654
    %2795 = vmatprep.subr.mxu0 0.0
    %2796 = vmatpush1.msra.mxu0 %v2655
    %2797 = vmatprep.subr.mxu0 0.0
    %2798 = vmatpush1.msra.mxu0 %v2656
    %2799 = vmatprep.subr.mxu0 0.0
    %2800 = vmatpush1.msra.mxu0 %v2657
    %2801 = vmatprep.subr.mxu0 0.0
    %2802 = vmatpush1.msra.mxu0 %v2658
    %2803 = vmatprep.subr.mxu0 0.0
    %2804 = vmatpush1.msra.mxu0 %v2659
    %2805 = vmatprep.subr.mxu0 0.0
    %2806 = vmatpush1.msra.mxu0 %v2660
    %2807 = vmatprep.subr.mxu0 0.0
    %2808 = vmatpush1.msra.mxu0 %v2661
    %2809 = vmatprep.subr.mxu0 0.0
    %2810 = vmatpush1.msra.mxu0 %v2662
    %2811 = vmatprep.subr.mxu0 0.0
    %2812 = vmatpush1.msra.mxu0 %v2663
    %2813 = vmatprep.mubr.f32.mxu0 %v2384
    %2814 = vmatmul.mubr.f32.gmra.mrb[0].mxu0 %v2383
    %v2815 = vpop.f32.mrb[0].mxu0
    %v2816 = vadd.f32 %v2731, %v2815
    %v2817 = vpop.f32.mrb[0].mxu0
    %2818 = vmatprep.mubr.f32.mxu0 %v2388
    %2819 = vmatmul.mubr.f32.gmra.mrb[0].mxu0 %v2387
    %v2820 = vpop.f32.mrb[0].mxu0
    %v2821 = vadd.f32 %v2736, %v2820
    %v2822 = vpop.f32.mrb[0].mxu0
    %2823 = vmatprep.mubr.f32.mxu0 %v2392
    %2824 = vmatmul.mubr.f32.gmra.mrb[0].mxu0 %v2391
    %v2825 = vpop.f32.mrb[0].mxu0
    %v2826 = vadd.f32 %v2741, %v2825
    %v2827 = vpop.f32.mrb[0].mxu0
    %2828 = vmatprep.mubr.f32.mxu0 %v2396
    %2829 = vmatmul.mubr.f32.gmra.mrb[0].mxu0 %v2395
    %v2830 = vpop.f32.mrb[0].mxu0
    %v2831 = vadd.f32 %v2746, %v2830
    %v2832 = vpop.f32.mrb[0].mxu0
    %2833 = vdwg.mxu0
    %2834 = vst [vmem:[#allocation4] sm:$0xff] %v2816
    %2835 = vst [vmem:[#allocation4 + $0x8] sm:$0xff] %v2821
    %2836 = vst [vmem:[#allocation4 + $0x10] sm:$0xff] %v2826
    %2837 = vst [vmem:[#allocation4 + $0x18] sm:$0xff] %v2831
    // Predicated region
    $region30: #{tpu_custom_call.1} parent=1 // pred_check
      _
    $region31: #{tpu_custom_call.1} parent=1 // pred_check_branch
      %2839 = sbr.rel (0) target = $region33
    $region32: #{tpu_custom_call.1} parent=1 // pred_region
      %s2841 = ssub.s32 512, 512
      %2842 = vsyncadd [#allocation5], %s2841
      %s2843 = sshll.u32 [#allocation4], 4
      %s2844 = int_to_ptr.vmem [resolvable:$true] %s2843
      %2849 = dma.vmem_to_hbm [thread:$0]  %s2844, 512, %s7, [#allocation5], 128, 128, 8
    $region33: #{tpu_custom_call.1} parent=1 // pred_fallthru
      _
    // Predicated region
    $region34: #{tpu_custom_call.1} parent=1 // pred_check
      _
    $region35: #{tpu_custom_call.1} parent=1 // pred_check_branch
      %2851 = sbr.rel (0) target = $region37
    $region36: #{tpu_custom_call.1} parent=1 // pred_region
      %2852 = dma.done [#allocation5], 512
    $region37: #{tpu_custom_call.1} parent=1 // pred_fallthru
      _
    %2853 = vsyncpa [#allocation5], 1

</llo_original>
